<compile_context>
chip_gen: v5e
topology: v5e:2x2
jax: 0.10.0
libtpu: 0.0.40
codegen_flags: <defaults>
</compile_context>

<pallas_src>
import functools

import jax
import jax.numpy as jnp
import numpy as np
from jax.experimental import pallas as pl
from jax.experimental.pallas import tpu as pltpu


# Fixed module hyper-parameters (from the PyTorch spec).
C1, C2 = 39, 64
KW1, KW2 = 11, 9
STRIDE_H1, PAD_H1, OUT_PAD_H1 = 2, 1, 1
STRIDE_H2 = 8


def _fused_deconv_kernel(x_ref, w1_ref, w2_ref, b1_ref, b2_ref,
                         o_ref, acc1_ref, acc2_ref, *, H, W, W1, W2, H2):
    """One batch element of ConvTranspose2d -> ConvTranspose2d -> sigmoid.

    x_ref   : (H, W, C1)      input in HWC
    w1_ref  : (C1, KW1*C2)    layer-1 weight, [ci, k*C2 + co]
    w2_ref  : (C2, KW2*C2)    layer-2 weight, [ci, k*C2 + co]
    b1_ref  : (1, C2)
    b2_ref  : (1, C2)
    o_ref   : (H2, W2, C2)    output (HWC)
    acc1_ref: (H, W1, C2)     scratch: the H distinct layer-1 rows
    acc2_ref: (H, W2, C2)     scratch: layer-2 row responses
    """
    b1 = b1_ref[...]                                   # (1, C2)
    b2 = b2_ref[...]                                   # (1, C2)

    # ---- layer 1: single matmul + overlap-add of the KW1 slabs -------------
    # y1[h, w, k*C2 + co] = sum_ci x[h, w, ci] * W1[ci, co, 0, k]
    y1 = jax.lax.dot_general(
        x_ref[...], w1_ref[...],
        dimension_numbers=(((2,), (0,)), ((), ())),
        preferred_element_type=jnp.float32)            # (H, W, KW1*C2)

    acc1_ref[...] = jnp.zeros_like(acc1_ref)
    for k in range(KW1):                               # out[o] += slab_k[o-k]
        acc1_ref[:, k:k + W, :] += y1[:, :, k * C2:(k + 1) * C2]
    # Input row 0 maps to layer-1 row -1 (dropped by padding); reuse its slot
    # for the shared pure-bias layer-1 row (every even layer-1 row).
    acc1_ref[0, :, :] = jnp.zeros((W1, C2), jnp.float32)
    d1 = acc1_ref[...] + b1[None]                      # (H, W1, C2)

    # ---- layer 2 on the H distinct layer-1 rows -----------------------------
    y2 = jax.lax.dot_general(
        d1, w2_ref[...],
        dimension_numbers=(((2,), (0,)), ((), ())),
        preferred_element_type=jnp.float32)            # (H, W1, KW2*C2)
    acc2_ref[...] = jnp.zeros_like(acc2_ref)
    for k in range(KW2):
        acc2_ref[:, k:k + W1, :] += y2[:, :, k * C2:(k + 1) * C2]
    r2 = jax.nn.sigmoid(acc2_ref[...] + b2[None])      # (H, W2, C2)

    # ---- assemble the output ------------------------------------------------
    # Rows not hit by the stride-8 row scatter are pure sigmoid(b2).
    o_ref[...] = jnp.broadcast_to(jax.nn.sigmoid(b2)[None],
                                  (H2, W2, C2)).astype(o_ref.dtype)
    # Even layer-1 rows (pure layer-1 bias) -> output rows 8*(2j).
    bias_resp = r2[0].astype(o_ref.dtype)              # (W2, C2), reused
    for j in range(H - 1):
        o_ref[STRIDE_H2 * 2 * j, :, :] = bias_resp
    # Data rows: input row h -> layer-1 row 2h-1 -> output row 8*(2h-1).
    for h in range(1, H):
        o_ref[STRIDE_H2 * (2 * h - 1), :, :] = r2[h].astype(o_ref.dtype)


def fused_deconv_sigmoid(x_nchw, w1, b1, w2, b2):
    N, c1, H, W = x_nchw.shape
    assert c1 == C1 and w1.shape == (C1, C2, 1, KW1) and w2.shape == (C2, C2, 1, KW2)
    assert H >= 2, "first ConvTranspose2d needs H >= 2 for a valid output"
    H1 = (H - 1) * STRIDE_H1 - 2 * PAD_H1 + 1 + OUT_PAD_H1   # = 2H - 2
    W1 = W + KW1 - 1
    H2 = (H1 - 1) * STRIDE_H2 + 1                            # = 8*H1 - 7
    W2 = W1 + KW2 - 1

    # Layout prep (one tiny XLA op each, batched over N):
    x_hwc = jnp.transpose(x_nchw, (0, 2, 3, 1))              # (N, H, W, C1)
    # (C_in, C_out, 1, kW) -> (C_in, kW*C_out)  with [ci, k*C2 + co]
    w1r = jnp.transpose(w1[:, :, 0, :], (0, 2, 1)).reshape(C1, KW1 * C2)
    w2r = jnp.transpose(w2[:, :, 0, :], (0, 2, 1)).reshape(C2, KW2 * C2)
    b1r = b1.reshape(1, C2)
    b2r = b2.reshape(1, C2)

    kernel = functools.partial(_fused_deconv_kernel,
                               H=H, W=W, W1=W1, W2=W2, H2=H2)
    out_hwc = pl.pallas_call(
        kernel,
        out_shape=jax.ShapeDtypeStruct((N, H2, W2, C2), x_nchw.dtype),
        grid_spec=pltpu.PrefetchScalarGridSpec(
            num_scalar_prefetch=0,
            grid=(N,),
            in_specs=[
                pl.BlockSpec((None, H, W, C1), lambda n: (n, 0, 0, 0)),
                pl.BlockSpec((C1, KW1 * C2), lambda n: (0, 0)),
                pl.BlockSpec((C2, KW2 * C2), lambda n: (0, 0)),
                pl.BlockSpec((1, C2), lambda n: (0, 0)),
                pl.BlockSpec((1, C2), lambda n: (0, 0)),
            ],
            out_specs=pl.BlockSpec((None, H2, W2, C2), lambda n: (n, 0, 0, 0)),
            scratch_shapes=[pltpu.VMEM((H, W1, C2), jnp.float32),
                            pltpu.VMEM((H, W2, C2), jnp.float32)],
        ),
        compiler_params=pltpu.CompilerParams(
            dimension_semantics=("parallel",)),
    )(x_hwc, w1r, w2r, b1r, b2r)
    return jnp.transpose(out_hwc, (0, 3, 1, 2))              # NCHW


def init_params(key):
    k1, k2, k3, k4 = jax.random.split(key, 4)
    # PyTorch ConvTranspose2d weight layout: (C_in, C_out, kH, kW)
    w1 = jax.random.normal(k1, (C1, C2, 1, KW1), jnp.float32) * 0.05
    b1 = jax.random.normal(k2, (C2,), jnp.float32) * 0.05
    w2 = jax.random.normal(k3, (C2, C2, 1, KW2), jnp.float32) * 0.05
    b2 = jax.random.normal(k4, (C2,), jnp.float32) * 0.05
    return dict(w1=w1, b1=b1, w2=w2, b2=b2)


@jax.jit
def model_forward(x_nchw, params):
    return fused_deconv_sigmoid(x_nchw, params["w1"], params["b1"],
                                params["w2"], params["b2"])


# ---- pure-JAX reference (XLA conv) for the correctness check ----
def _convtranspose2d_ref(x, w, b, stride, padding, output_padding):
    kH, kW = w.shape[2], w.shape[3]
    rhs = jnp.transpose(jnp.flip(w, axis=(2, 3)), (1, 0, 2, 3))     # OIHW
    pad = [(kH - 1 - padding[0], kH - 1 - padding[0] + output_padding[0]),
           (kW - 1 - padding[1], kW - 1 - padding[1] + output_padding[1])]
    out = jax.lax.conv_general_dilated(
        x, rhs, window_strides=(1, 1), padding=pad,
        lhs_dilation=stride, dimension_numbers=("NCHW", "OIHW", "NCHW"))
    return out + b[None, :, None, None]


@jax.jit
def model_forward_ref(x, params):
    v1 = _convtranspose2d_ref(x, params["w1"], params["b1"],
                              (2, 1), (1, 0), (1, 0))
    v2 = _convtranspose2d_ref(v1, params["w2"], params["b2"],
                              (8, 1), (0, 0), (0, 0))
    return jax.nn.sigmoid(v2)


if __name__ == "__main__":
    key = jax.random.PRNGKey(0)
    kx, kp = jax.random.split(key)
    # Small *valid* input consistent with the module's channel structure (NCHW).
    x = jax.random.normal(kx, (2, 39, 3, 32), jnp.float32)
    params = init_params(kp)

    out = jax.block_until_ready(model_forward(x, params))
    ref = jax.block_until_ready(model_forward_ref(x, params))

    assert out.shape == (2, 64, 25, 50), out.shape
    np.testing.assert_allclose(np.asarray(out), np.asarray(ref),
                               atol=3e-3, rtol=3e-3)
    print("KERNEL_OK")
</pallas_src>

<mosaic_0001>
module attributes {stable_mosaic.version = 11 : i64} {
  func.func @_fused_deconv_kernel(%arg0: i32, %arg1: memref<1x3x32x39xf32, #tpu.memory_space<vmem>>, %arg2: memref<39x704xf32, #tpu.memory_space<vmem>>, %arg3: memref<64x576xf32, #tpu.memory_space<vmem>>, %arg4: memref<1x64xf32, #tpu.memory_space<vmem>>, %arg5: memref<1x64xf32, #tpu.memory_space<vmem>>, %arg6: memref<1x25x50x64xf32, #tpu.memory_space<vmem>>, %arg7: memref<3x42x64xf32, #tpu.memory_space<vmem>>, %arg8: memref<3x50x64xf32, #tpu.memory_space<vmem>>) attributes {dimension_semantics = [#tpu.dimension_semantics<parallel>], iteration_bounds = array<i64: 2>, scalar_prefetch = 0 : i64, scratch_operands = 2 : i64, tpu.core_type = #tpu.core_type<tc>, window_params = [{transform_indices = @transform_0, window_bounds = array<i64: 1, 3, 32, 39>}, {pipeline_mode = #tpu.pipeline_mode<synchronous>, transform_indices = @transform_1, window_bounds = array<i64: 39, 704>}, {pipeline_mode = #tpu.pipeline_mode<synchronous>, transform_indices = @transform_2, window_bounds = array<i64: 64, 576>}, {pipeline_mode = #tpu.pipeline_mode<synchronous>, transform_indices = @transform_3, window_bounds = array<i64: 1, 64>}, {pipeline_mode = #tpu.pipeline_mode<synchronous>, transform_indices = @transform_4, window_bounds = array<i64: 1, 64>}, {transform_indices = @transform_5, window_bounds = array<i64: 1, 25, 50, 64>}]} {
    %c0 = arith.constant 0 : index
    %c0_0 = arith.constant 0 : index
    %0 = vector.load %arg4[%c0, %c0_0] : memref<1x64xf32, #tpu.memory_space<vmem>>, vector<1x64xf32>
    %c0_1 = arith.constant 0 : index
    %c0_2 = arith.constant 0 : index
    %1 = vector.load %arg5[%c0_1, %c0_2] : memref<1x64xf32, #tpu.memory_space<vmem>>, vector<1x64xf32>
    %c0_3 = arith.constant 0 : index
    %c0_4 = arith.constant 0 : index
    %c0_5 = arith.constant 0 : index
    %c0_6 = arith.constant 0 : index
    %2 = vector.load %arg1[%c0_3, %c0_4, %c0_5, %c0_6] : memref<1x3x32x39xf32, #tpu.memory_space<vmem>>, vector<1x3x32x39xf32>
    %3 = vector.shape_cast %2 : vector<1x3x32x39xf32> to vector<3x32x39xf32>
    %c0_7 = arith.constant 0 : index
    %c0_8 = arith.constant 0 : index
    %4 = vector.load %arg2[%c0_7, %c0_8] : memref<39x704xf32, #tpu.memory_space<vmem>>, vector<39x704xf32>
    %cst = arith.constant dense<0.000000e+00> : vector<3x32x704xf32>
    %5 = tpu.matmul %3, %4, %cst {dimension_numbers = #tpu.dot_dimension_numbers<[2], [0], [0, 1], [1], [0, 0, 0, 1, 1, 1], [], []>} : vector<3x32x39xf32>, vector<39x704xf32>, vector<3x32x704xf32> -> vector<3x32x704xf32>
    %cst_9 = arith.constant 0.000000e+00 : f32
    %6 = vector.broadcast %cst_9 : f32 to vector<3x42x64xf32>
    %c0_10 = arith.constant 0 : index
    %c0_11 = arith.constant 0 : index
    %c0_12 = arith.constant 0 : index
    %7 = vector.load %arg7[%c0_10, %c0_11, %c0_12] : memref<3x42x64xf32, #tpu.memory_space<vmem>>, vector<3x42x64xf32>
    tpu.vector_store %arg7[%c0_10, %c0_11, %c0_12], %6 {strides = array<i32>} : memref<3x42x64xf32, #tpu.memory_space<vmem>>, vector<3x42x64xf32>,
    %c0_13 = arith.constant 0 : index
    %c0_14 = arith.constant 0 : index
    %c0_15 = arith.constant 0 : index
    %8 = vector.load %arg7[%c0_13, %c0_14, %c0_15] : memref<3x42x64xf32, #tpu.memory_space<vmem>>, vector<3x32x64xf32>
    %9 = vector.extract_strided_slice %5 {offsets = [0, 0, 0], sizes = [3, 32, 64], strides = [1, 1, 1]} : vector<3x32x704xf32> to vector<3x32x64xf32>
    %10 = arith.addf %8, %9 : vector<3x32x64xf32>
    %c0_16 = arith.constant 0 : index
    %c0_17 = arith.constant 0 : index
    %c0_18 = arith.constant 0 : index
    %11 = vector.load %arg7[%c0_16, %c0_17, %c0_18] : memref<3x42x64xf32, #tpu.memory_space<vmem>>, vector<3x32x64xf32>
    tpu.vector_store %arg7[%c0_16, %c0_17, %c0_18], %10 {strides = array<i32>} : memref<3x42x64xf32, #tpu.memory_space<vmem>>, vector<3x32x64xf32>,
    %c0_19 = arith.constant 0 : index
    %c1 = arith.constant 1 : index
    %c0_20 = arith.constant 0 : index
    %12 = vector.load %arg7[%c0_19, %c1, %c0_20] : memref<3x42x64xf32, #tpu.memory_space<vmem>>, vector<3x32x64xf32>
    %13 = vector.extract_strided_slice %5 {offsets = [0, 0, 64], sizes = [3, 32, 64], strides = [1, 1, 1]} : vector<3x32x704xf32> to vector<3x32x64xf32>
    %14 = arith.addf %12, %13 : vector<3x32x64xf32>
    %c0_21 = arith.constant 0 : index
    %c1_22 = arith.constant 1 : index
    %c0_23 = arith.constant 0 : index
    %15 = vector.load %arg7[%c0_21, %c1_22, %c0_23] : memref<3x42x64xf32, #tpu.memory_space<vmem>>, vector<3x32x64xf32>
    tpu.vector_store %arg7[%c0_21, %c1_22, %c0_23], %14 {strides = array<i32>} : memref<3x42x64xf32, #tpu.memory_space<vmem>>, vector<3x32x64xf32>,
    %c0_24 = arith.constant 0 : index
    %c2 = arith.constant 2 : index
    %c0_25 = arith.constant 0 : index
    %16 = vector.load %arg7[%c0_24, %c2, %c0_25] : memref<3x42x64xf32, #tpu.memory_space<vmem>>, vector<3x32x64xf32>
    %17 = vector.extract_strided_slice %5 {offsets = [0, 0, 128], sizes = [3, 32, 64], strides = [1, 1, 1]} : vector<3x32x704xf32> to vector<3x32x64xf32>
    %18 = arith.addf %16, %17 : vector<3x32x64xf32>
    %c0_26 = arith.constant 0 : index
    %c2_27 = arith.constant 2 : index
    %c0_28 = arith.constant 0 : index
    %19 = vector.load %arg7[%c0_26, %c2_27, %c0_28] : memref<3x42x64xf32, #tpu.memory_space<vmem>>, vector<3x32x64xf32>
    tpu.vector_store %arg7[%c0_26, %c2_27, %c0_28], %18 {strides = array<i32>} : memref<3x42x64xf32, #tpu.memory_space<vmem>>, vector<3x32x64xf32>,
    %c0_29 = arith.constant 0 : index
    %c3 = arith.constant 3 : index
    %c0_30 = arith.constant 0 : index
    %20 = vector.load %arg7[%c0_29, %c3, %c0_30] : memref<3x42x64xf32, #tpu.memory_space<vmem>>, vector<3x32x64xf32>
    %21 = vector.extract_strided_slice %5 {offsets = [0, 0, 192], sizes = [3, 32, 64], strides = [1, 1, 1]} : vector<3x32x704xf32> to vector<3x32x64xf32>
    %22 = arith.addf %20, %21 : vector<3x32x64xf32>
    %c0_31 = arith.constant 0 : index
    %c3_32 = arith.constant 3 : index
    %c0_33 = arith.constant 0 : index
    %23 = vector.load %arg7[%c0_31, %c3_32, %c0_33] : memref<3x42x64xf32, #tpu.memory_space<vmem>>, vector<3x32x64xf32>
    tpu.vector_store %arg7[%c0_31, %c3_32, %c0_33], %22 {strides = array<i32>} : memref<3x42x64xf32, #tpu.memory_space<vmem>>, vector<3x32x64xf32>,
    %c0_34 = arith.constant 0 : index
    %c4 = arith.constant 4 : index
    %c0_35 = arith.constant 0 : index
    %24 = vector.load %arg7[%c0_34, %c4, %c0_35] : memref<3x42x64xf32, #tpu.memory_space<vmem>>, vector<3x32x64xf32>
    %25 = vector.extract_strided_slice %5 {offsets = [0, 0, 256], sizes = [3, 32, 64], strides = [1, 1, 1]} : vector<3x32x704xf32> to vector<3x32x64xf32>
    %26 = arith.addf %24, %25 : vector<3x32x64xf32>
    %c0_36 = arith.constant 0 : index
    %c4_37 = arith.constant 4 : index
    %c0_38 = arith.constant 0 : index
    %27 = vector.load %arg7[%c0_36, %c4_37, %c0_38] : memref<3x42x64xf32, #tpu.memory_space<vmem>>, vector<3x32x64xf32>
    tpu.vector_store %arg7[%c0_36, %c4_37, %c0_38], %26 {strides = array<i32>} : memref<3x42x64xf32, #tpu.memory_space<vmem>>, vector<3x32x64xf32>,
    %c0_39 = arith.constant 0 : index
    %c5 = arith.constant 5 : index
    %c0_40 = arith.constant 0 : index
    %28 = vector.load %arg7[%c0_39, %c5, %c0_40] : memref<3x42x64xf32, #tpu.memory_space<vmem>>, vector<3x32x64xf32>
    %29 = vector.extract_strided_slice %5 {offsets = [0, 0, 320], sizes = [3, 32, 64], strides = [1, 1, 1]} : vector<3x32x704xf32> to vector<3x32x64xf32>
    %30 = arith.addf %28, %29 : vector<3x32x64xf32>
    %c0_41 = arith.constant 0 : index
    %c5_42 = arith.constant 5 : index
    %c0_43 = arith.constant 0 : index
    %31 = vector.load %arg7[%c0_41, %c5_42, %c0_43] : memref<3x42x64xf32, #tpu.memory_space<vmem>>, vector<3x32x64xf32>
    tpu.vector_store %arg7[%c0_41, %c5_42, %c0_43], %30 {strides = array<i32>} : memref<3x42x64xf32, #tpu.memory_space<vmem>>, vector<3x32x64xf32>,
    %c0_44 = arith.constant 0 : index
    %c6 = arith.constant 6 : index
    %c0_45 = arith.constant 0 : index
    %32 = vector.load %arg7[%c0_44, %c6, %c0_45] : memref<3x42x64xf32, #tpu.memory_space<vmem>>, vector<3x32x64xf32>
    %33 = vector.extract_strided_slice %5 {offsets = [0, 0, 384], sizes = [3, 32, 64], strides = [1, 1, 1]} : vector<3x32x704xf32> to vector<3x32x64xf32>
    %34 = arith.addf %32, %33 : vector<3x32x64xf32>
    %c0_46 = arith.constant 0 : index
    %c6_47 = arith.constant 6 : index
    %c0_48 = arith.constant 0 : index
    %35 = vector.load %arg7[%c0_46, %c6_47, %c0_48] : memref<3x42x64xf32, #tpu.memory_space<vmem>>, vector<3x32x64xf32>
    tpu.vector_store %arg7[%c0_46, %c6_47, %c0_48], %34 {strides = array<i32>} : memref<3x42x64xf32, #tpu.memory_space<vmem>>, vector<3x32x64xf32>,
    %c0_49 = arith.constant 0 : index
    %c7 = arith.constant 7 : index
    %c0_50 = arith.constant 0 : index
    %36 = vector.load %arg7[%c0_49, %c7, %c0_50] : memref<3x42x64xf32, #tpu.memory_space<vmem>>, vector<3x32x64xf32>
    %37 = vector.extract_strided_slice %5 {offsets = [0, 0, 448], sizes = [3, 32, 64], strides = [1, 1, 1]} : vector<3x32x704xf32> to vector<3x32x64xf32>
    %38 = arith.addf %36, %37 : vector<3x32x64xf32>
    %c0_51 = arith.constant 0 : index
    %c7_52 = arith.constant 7 : index
    %c0_53 = arith.constant 0 : index
    %39 = vector.load %arg7[%c0_51, %c7_52, %c0_53] : memref<3x42x64xf32, #tpu.memory_space<vmem>>, vector<3x32x64xf32>
    tpu.vector_store %arg7[%c0_51, %c7_52, %c0_53], %38 {strides = array<i32>} : memref<3x42x64xf32, #tpu.memory_space<vmem>>, vector<3x32x64xf32>,
    %c0_54 = arith.constant 0 : index
    %c8 = arith.constant 8 : index
    %c0_55 = arith.constant 0 : index
    %40 = vector.load %arg7[%c0_54, %c8, %c0_55] : memref<3x42x64xf32, #tpu.memory_space<vmem>>, vector<3x32x64xf32>
    %41 = vector.extract_strided_slice %5 {offsets = [0, 0, 512], sizes = [3, 32, 64], strides = [1, 1, 1]} : vector<3x32x704xf32> to vector<3x32x64xf32>
    %42 = arith.addf %40, %41 : vector<3x32x64xf32>
    %c0_56 = arith.constant 0 : index
    %c8_57 = arith.constant 8 : index
    %c0_58 = arith.constant 0 : index
    %43 = vector.load %arg7[%c0_56, %c8_57, %c0_58] : memref<3x42x64xf32, #tpu.memory_space<vmem>>, vector<3x32x64xf32>
    tpu.vector_store %arg7[%c0_56, %c8_57, %c0_58], %42 {strides = array<i32>} : memref<3x42x64xf32, #tpu.memory_space<vmem>>, vector<3x32x64xf32>,
    %c0_59 = arith.constant 0 : index
    %c9 = arith.constant 9 : index
    %c0_60 = arith.constant 0 : index
    %44 = vector.load %arg7[%c0_59, %c9, %c0_60] : memref<3x42x64xf32, #tpu.memory_space<vmem>>, vector<3x32x64xf32>
    %45 = vector.extract_strided_slice %5 {offsets = [0, 0, 576], sizes = [3, 32, 64], strides = [1, 1, 1]} : vector<3x32x704xf32> to vector<3x32x64xf32>
    %46 = arith.addf %44, %45 : vector<3x32x64xf32>
    %c0_61 = arith.constant 0 : index
    %c9_62 = arith.constant 9 : index
    %c0_63 = arith.constant 0 : index
    %47 = vector.load %arg7[%c0_61, %c9_62, %c0_63] : memref<3x42x64xf32, #tpu.memory_space<vmem>>, vector<3x32x64xf32>
    tpu.vector_store %arg7[%c0_61, %c9_62, %c0_63], %46 {strides = array<i32>} : memref<3x42x64xf32, #tpu.memory_space<vmem>>, vector<3x32x64xf32>,
    %c0_64 = arith.constant 0 : index
    %c10 = arith.constant 10 : index
    %c0_65 = arith.constant 0 : index
    %48 = vector.load %arg7[%c0_64, %c10, %c0_65] : memref<3x42x64xf32, #tpu.memory_space<vmem>>, vector<3x32x64xf32>
    %49 = vector.extract_strided_slice %5 {offsets = [0, 0, 640], sizes = [3, 32, 64], strides = [1, 1, 1]} : vector<3x32x704xf32> to vector<3x32x64xf32>
    %50 = arith.addf %48, %49 : vector<3x32x64xf32>
    %c0_66 = arith.constant 0 : index
    %c10_67 = arith.constant 10 : index
    %c0_68 = arith.constant 0 : index
    %51 = vector.load %arg7[%c0_66, %c10_67, %c0_68] : memref<3x42x64xf32, #tpu.memory_space<vmem>>, vector<3x32x64xf32>
    tpu.vector_store %arg7[%c0_66, %c10_67, %c0_68], %50 {strides = array<i32>} : memref<3x42x64xf32, #tpu.memory_space<vmem>>, vector<3x32x64xf32>,
    %cst_69 = arith.constant 0.000000e+00 : f32
    %52 = vector.broadcast %cst_69 : f32 to vector<42x64xf32>
    %c0_70 = arith.constant 0 : index
    %c0_71 = arith.constant 0 : index
    %c0_72 = arith.constant 0 : index
    %53 = vector.load %arg7[%c0_70, %c0_71, %c0_72] : memref<3x42x64xf32, #tpu.memory_space<vmem>>, vector<1x42x64xf32>
    %54 = vector.shape_cast %53 : vector<1x42x64xf32> to vector<42x64xf32>
    %55 = vector.shape_cast %52 : vector<42x64xf32> to vector<1x42x64xf32>
    tpu.vector_store %arg7[%c0_70, %c0_71, %c0_72], %55 {strides = array<i32>} : memref<3x42x64xf32, #tpu.memory_space<vmem>>, vector<1x42x64xf32>,
    %c0_73 = arith.constant 0 : index
    %c0_74 = arith.constant 0 : index
    %c0_75 = arith.constant 0 : index
    %56 = vector.load %arg7[%c0_73, %c0_74, %c0_75] : memref<3x42x64xf32, #tpu.memory_space<vmem>>, vector<3x42x64xf32>
    %57 = vector.shape_cast %0 : vector<1x64xf32> to vector<1x1x64xf32>
    %58 = vector.broadcast %57 : vector<1x1x64xf32> to vector<3x42x64xf32>
    %59 = arith.addf %56, %58 : vector<3x42x64xf32>
    %c0_76 = arith.constant 0 : index
    %c0_77 = arith.constant 0 : index
    %60 = vector.load %arg3[%c0_76, %c0_77] : memref<64x576xf32, #tpu.memory_space<vmem>>, vector<64x576xf32>
    %cst_78 = arith.constant dense<0.000000e+00> : vector<3x42x576xf32>
    %61 = tpu.matmul %59, %60, %cst_78 {dimension_numbers = #tpu.dot_dimension_numbers<[2], [0], [0, 1], [1], [0, 0, 0, 1, 1, 1], [], []>} : vector<3x42x64xf32>, vector<64x576xf32>, vector<3x42x576xf32> -> vector<3x42x576xf32>
    %cst_79 = arith.constant 0.000000e+00 : f32
    %62 = vector.broadcast %cst_79 : f32 to vector<3x50x64xf32>
    %c0_80 = arith.constant 0 : index
    %c0_81 = arith.constant 0 : index
    %c0_82 = arith.constant 0 : index
    %63 = vector.load %arg8[%c0_80, %c0_81, %c0_82] : memref<3x50x64xf32, #tpu.memory_space<vmem>>, vector<3x50x64xf32>
    tpu.vector_store %arg8[%c0_80, %c0_81, %c0_82], %62 {strides = array<i32>} : memref<3x50x64xf32, #tpu.memory_space<vmem>>, vector<3x50x64xf32>,
    %c0_83 = arith.constant 0 : index
    %c0_84 = arith.constant 0 : index
    %c0_85 = arith.constant 0 : index
    %64 = vector.load %arg8[%c0_83, %c0_84, %c0_85] : memref<3x50x64xf32, #tpu.memory_space<vmem>>, vector<3x42x64xf32>
    %65 = vector.extract_strided_slice %61 {offsets = [0, 0, 0], sizes = [3, 42, 64], strides = [1, 1, 1]} : vector<3x42x576xf32> to vector<3x42x64xf32>
    %66 = arith.addf %64, %65 : vector<3x42x64xf32>
    %c0_86 = arith.constant 0 : index
    %c0_87 = arith.constant 0 : index
    %c0_88 = arith.constant 0 : index
    %67 = vector.load %arg8[%c0_86, %c0_87, %c0_88] : memref<3x50x64xf32, #tpu.memory_space<vmem>>, vector<3x42x64xf32>
    tpu.vector_store %arg8[%c0_86, %c0_87, %c0_88], %66 {strides = array<i32>} : memref<3x50x64xf32, #tpu.memory_space<vmem>>, vector<3x42x64xf32>,
    %c0_89 = arith.constant 0 : index
    %c1_90 = arith.constant 1 : index
    %c0_91 = arith.constant 0 : index
    %68 = vector.load %arg8[%c0_89, %c1_90, %c0_91] : memref<3x50x64xf32, #tpu.memory_space<vmem>>, vector<3x42x64xf32>
    %69 = vector.extract_strided_slice %61 {offsets = [0, 0, 64], sizes = [3, 42, 64], strides = [1, 1, 1]} : vector<3x42x576xf32> to vector<3x42x64xf32>
    %70 = arith.addf %68, %69 : vector<3x42x64xf32>
    %c0_92 = arith.constant 0 : index
    %c1_93 = arith.constant 1 : index
    %c0_94 = arith.constant 0 : index
    %71 = vector.load %arg8[%c0_92, %c1_93, %c0_94] : memref<3x50x64xf32, #tpu.memory_space<vmem>>, vector<3x42x64xf32>
    tpu.vector_store %arg8[%c0_92, %c1_93, %c0_94], %70 {strides = array<i32>} : memref<3x50x64xf32, #tpu.memory_space<vmem>>, vector<3x42x64xf32>,
    %c0_95 = arith.constant 0 : index
    %c2_96 = arith.constant 2 : index
    %c0_97 = arith.constant 0 : index
    %72 = vector.load %arg8[%c0_95, %c2_96, %c0_97] : memref<3x50x64xf32, #tpu.memory_space<vmem>>, vector<3x42x64xf32>
    %73 = vector.extract_strided_slice %61 {offsets = [0, 0, 128], sizes = [3, 42, 64], strides = [1, 1, 1]} : vector<3x42x576xf32> to vector<3x42x64xf32>
    %74 = arith.addf %72, %73 : vector<3x42x64xf32>
    %c0_98 = arith.constant 0 : index
    %c2_99 = arith.constant 2 : index
    %c0_100 = arith.constant 0 : index
    %75 = vector.load %arg8[%c0_98, %c2_99, %c0_100] : memref<3x50x64xf32, #tpu.memory_space<vmem>>, vector<3x42x64xf32>
    tpu.vector_store %arg8[%c0_98, %c2_99, %c0_100], %74 {strides = array<i32>} : memref<3x50x64xf32, #tpu.memory_space<vmem>>, vector<3x42x64xf32>,
    %c0_101 = arith.constant 0 : index
    %c3_102 = arith.constant 3 : index
    %c0_103 = arith.constant 0 : index
    %76 = vector.load %arg8[%c0_101, %c3_102, %c0_103] : memref<3x50x64xf32, #tpu.memory_space<vmem>>, vector<3x42x64xf32>
    %77 = vector.extract_strided_slice %61 {offsets = [0, 0, 192], sizes = [3, 42, 64], strides = [1, 1, 1]} : vector<3x42x576xf32> to vector<3x42x64xf32>
    %78 = arith.addf %76, %77 : vector<3x42x64xf32>
    %c0_104 = arith.constant 0 : index
    %c3_105 = arith.constant 3 : index
    %c0_106 = arith.constant 0 : index
    %79 = vector.load %arg8[%c0_104, %c3_105, %c0_106] : memref<3x50x64xf32, #tpu.memory_space<vmem>>, vector<3x42x64xf32>
    tpu.vector_store %arg8[%c0_104, %c3_105, %c0_106], %78 {strides = array<i32>} : memref<3x50x64xf32, #tpu.memory_space<vmem>>, vector<3x42x64xf32>,
    %c0_107 = arith.constant 0 : index
    %c4_108 = arith.constant 4 : index
    %c0_109 = arith.constant 0 : index
    %80 = vector.load %arg8[%c0_107, %c4_108, %c0_109] : memref<3x50x64xf32, #tpu.memory_space<vmem>>, vector<3x42x64xf32>
    %81 = vector.extract_strided_slice %61 {offsets = [0, 0, 256], sizes = [3, 42, 64], strides = [1, 1, 1]} : vector<3x42x576xf32> to vector<3x42x64xf32>
    %82 = arith.addf %80, %81 : vector<3x42x64xf32>
    %c0_110 = arith.constant 0 : index
    %c4_111 = arith.constant 4 : index
    %c0_112 = arith.constant 0 : index
    %83 = vector.load %arg8[%c0_110, %c4_111, %c0_112] : memref<3x50x64xf32, #tpu.memory_space<vmem>>, vector<3x42x64xf32>
    tpu.vector_store %arg8[%c0_110, %c4_111, %c0_112], %82 {strides = array<i32>} : memref<3x50x64xf32, #tpu.memory_space<vmem>>, vector<3x42x64xf32>,
    %c0_113 = arith.constant 0 : index
    %c5_114 = arith.constant 5 : index
    %c0_115 = arith.constant 0 : index
    %84 = vector.load %arg8[%c0_113, %c5_114, %c0_115] : memref<3x50x64xf32, #tpu.memory_space<vmem>>, vector<3x42x64xf32>
    %85 = vector.extract_strided_slice %61 {offsets = [0, 0, 320], sizes = [3, 42, 64], strides = [1, 1, 1]} : vector<3x42x576xf32> to vector<3x42x64xf32>
    %86 = arith.addf %84, %85 : vector<3x42x64xf32>
    %c0_116 = arith.constant 0 : index
    %c5_117 = arith.constant 5 : index
    %c0_118 = arith.constant 0 : index
    %87 = vector.load %arg8[%c0_116, %c5_117, %c0_118] : memref<3x50x64xf32, #tpu.memory_space<vmem>>, vector<3x42x64xf32>
    tpu.vector_store %arg8[%c0_116, %c5_117, %c0_118], %86 {strides = array<i32>} : memref<3x50x64xf32, #tpu.memory_space<vmem>>, vector<3x42x64xf32>,
    %c0_119 = arith.constant 0 : index
    %c6_120 = arith.constant 6 : index
    %c0_121 = arith.constant 0 : index
    %88 = vector.load %arg8[%c0_119, %c6_120, %c0_121] : memref<3x50x64xf32, #tpu.memory_space<vmem>>, vector<3x42x64xf32>
    %89 = vector.extract_strided_slice %61 {offsets = [0, 0, 384], sizes = [3, 42, 64], strides = [1, 1, 1]} : vector<3x42x576xf32> to vector<3x42x64xf32>
    %90 = arith.addf %88, %89 : vector<3x42x64xf32>
    %c0_122 = arith.constant 0 : index
    %c6_123 = arith.constant 6 : index
    %c0_124 = arith.constant 0 : index
    %91 = vector.load %arg8[%c0_122, %c6_123, %c0_124] : memref<3x50x64xf32, #tpu.memory_space<vmem>>, vector<3x42x64xf32>
    tpu.vector_store %arg8[%c0_122, %c6_123, %c0_124], %90 {strides = array<i32>} : memref<3x50x64xf32, #tpu.memory_space<vmem>>, vector<3x42x64xf32>,
    %c0_125 = arith.constant 0 : index
    %c7_126 = arith.constant 7 : index
    %c0_127 = arith.constant 0 : index
    %92 = vector.load %arg8[%c0_125, %c7_126, %c0_127] : memref<3x50x64xf32, #tpu.memory_space<vmem>>, vector<3x42x64xf32>
    %93 = vector.extract_strided_slice %61 {offsets = [0, 0, 448], sizes = [3, 42, 64], strides = [1, 1, 1]} : vector<3x42x576xf32> to vector<3x42x64xf32>
    %94 = arith.addf %92, %93 : vector<3x42x64xf32>
    %c0_128 = arith.constant 0 : index
    %c7_129 = arith.constant 7 : index
    %c0_130 = arith.constant 0 : index
    %95 = vector.load %arg8[%c0_128, %c7_129, %c0_130] : memref<3x50x64xf32, #tpu.memory_space<vmem>>, vector<3x42x64xf32>
    tpu.vector_store %arg8[%c0_128, %c7_129, %c0_130], %94 {strides = array<i32>} : memref<3x50x64xf32, #tpu.memory_space<vmem>>, vector<3x42x64xf32>,
    %c0_131 = arith.constant 0 : index
    %c8_132 = arith.constant 8 : index
    %c0_133 = arith.constant 0 : index
    %96 = vector.load %arg8[%c0_131, %c8_132, %c0_133] : memref<3x50x64xf32, #tpu.memory_space<vmem>>, vector<3x42x64xf32>
    %97 = vector.extract_strided_slice %61 {offsets = [0, 0, 512], sizes = [3, 42, 64], strides = [1, 1, 1]} : vector<3x42x576xf32> to vector<3x42x64xf32>
    %98 = arith.addf %96, %97 : vector<3x42x64xf32>
    %c0_134 = arith.constant 0 : index
    %c8_135 = arith.constant 8 : index
    %c0_136 = arith.constant 0 : index
    %99 = vector.load %arg8[%c0_134, %c8_135, %c0_136] : memref<3x50x64xf32, #tpu.memory_space<vmem>>, vector<3x42x64xf32>
    tpu.vector_store %arg8[%c0_134, %c8_135, %c0_136], %98 {strides = array<i32>} : memref<3x50x64xf32, #tpu.memory_space<vmem>>, vector<3x42x64xf32>,
    %c0_137 = arith.constant 0 : index
    %c0_138 = arith.constant 0 : index
    %c0_139 = arith.constant 0 : index
    %100 = vector.load %arg8[%c0_137, %c0_138, %c0_139] : memref<3x50x64xf32, #tpu.memory_space<vmem>>, vector<3x50x64xf32>
    %101 = vector.shape_cast %1 : vector<1x64xf32> to vector<1x1x64xf32>
    %102 = vector.broadcast %101 : vector<1x1x64xf32> to vector<3x50x64xf32>
    %103 = arith.addf %100, %102 : vector<3x50x64xf32>
    %104 = arith.negf %103 : vector<3x50x64xf32>
    %105 = math.exp %104 : vector<3x50x64xf32>
    %cst_140 = arith.constant 1.000000e+00 : f32
    %106 = vector.broadcast %cst_140 : f32 to vector<3x50x64xf32>
    %107 = arith.addf %106, %105 : vector<3x50x64xf32>
    %108 = arith.divf %106, %107 : vector<3x50x64xf32>
    %109 = arith.negf %1 : vector<1x64xf32>
    %110 = math.exp %109 : vector<1x64xf32>
    %cst_141 = arith.constant 1.000000e+00 : f32
    %111 = vector.broadcast %cst_141 : f32 to vector<1x64xf32>
    %112 = arith.addf %111, %110 : vector<1x64xf32>
    %113 = arith.divf %111, %112 : vector<1x64xf32>
    %114 = vector.shape_cast %113 : vector<1x64xf32> to vector<1x1x64xf32>
    %115 = vector.shape_cast %114 : vector<1x1x64xf32> to vector<1x1x64xf32>
    %116 = vector.broadcast %115 : vector<1x1x64xf32> to vector<25x50x64xf32>
    %c0_142 = arith.constant 0 : index
    %c0_143 = arith.constant 0 : index
    %c0_144 = arith.constant 0 : index
    %c0_145 = arith.constant 0 : index
    %117 = vector.load %arg6[%c0_142, %c0_143, %c0_144, %c0_145] : memref<1x25x50x64xf32, #tpu.memory_space<vmem>>, vector<1x25x50x64xf32>
    %118 = vector.shape_cast %117 : vector<1x25x50x64xf32> to vector<25x50x64xf32>
    %119 = vector.shape_cast %116 : vector<25x50x64xf32> to vector<1x25x50x64xf32>
    tpu.vector_store %arg6[%c0_142, %c0_143, %c0_144, %c0_145], %119 {strides = array<i32>} : memref<1x25x50x64xf32, #tpu.memory_space<vmem>>, vector<1x25x50x64xf32>,
    %120 = vector.extract_strided_slice %108 {offsets = [0, 0, 0], sizes = [1, 50, 64], strides = [1, 1, 1]} : vector<3x50x64xf32> to vector<1x50x64xf32>
    %121 = vector.shape_cast %120 : vector<1x50x64xf32> to vector<50x64xf32>
    %c0_146 = arith.constant 0 : index
    %c0_147 = arith.constant 0 : index
    %c0_148 = arith.constant 0 : index
    %c0_149 = arith.constant 0 : index
    %122 = vector.load %arg6[%c0_146, %c0_147, %c0_148, %c0_149] : memref<1x25x50x64xf32, #tpu.memory_space<vmem>>, vector<1x1x50x64xf32>
    %123 = vector.shape_cast %122 : vector<1x1x50x64xf32> to vector<50x64xf32>
    %124 = vector.shape_cast %121 : vector<50x64xf32> to vector<1x1x50x64xf32>
    tpu.vector_store %arg6[%c0_146, %c0_147, %c0_148, %c0_149], %124 {strides = array<i32>} : memref<1x25x50x64xf32, #tpu.memory_space<vmem>>, vector<1x1x50x64xf32>,
    %c0_150 = arith.constant 0 : index
    %c16 = arith.constant 16 : index
    %c0_151 = arith.constant 0 : index
    %c0_152 = arith.constant 0 : index
    %125 = vector.load %arg6[%c0_150, %c16, %c0_151, %c0_152] : memref<1x25x50x64xf32, #tpu.memory_space<vmem>>, vector<1x1x50x64xf32>
    %126 = vector.shape_cast %125 : vector<1x1x50x64xf32> to vector<50x64xf32>
    %127 = vector.shape_cast %121 : vector<50x64xf32> to vector<1x1x50x64xf32>
    tpu.vector_store %arg6[%c0_150, %c16, %c0_151, %c0_152], %127 {strides = array<i32>} : memref<1x25x50x64xf32, #tpu.memory_space<vmem>>, vector<1x1x50x64xf32>,
    %128 = vector.extract_strided_slice %108 {offsets = [1, 0, 0], sizes = [1, 50, 64], strides = [1, 1, 1]} : vector<3x50x64xf32> to vector<1x50x64xf32>
    %129 = vector.shape_cast %128 : vector<1x50x64xf32> to vector<50x64xf32>
    %c0_153 = arith.constant 0 : index
    %c8_154 = arith.constant 8 : index
    %c0_155 = arith.constant 0 : index
    %c0_156 = arith.constant 0 : index
    %130 = vector.load %arg6[%c0_153, %c8_154, %c0_155, %c0_156] : memref<1x25x50x64xf32, #tpu.memory_space<vmem>>, vector<1x1x50x64xf32>
    %131 = vector.shape_cast %130 : vector<1x1x50x64xf32> to vector<50x64xf32>
    %132 = vector.shape_cast %129 : vector<50x64xf32> to vector<1x1x50x64xf32>
    tpu.vector_store %arg6[%c0_153, %c8_154, %c0_155, %c0_156], %132 {strides = array<i32>} : memref<1x25x50x64xf32, #tpu.memory_space<vmem>>, vector<1x1x50x64xf32>,
    %133 = vector.extract_strided_slice %108 {offsets = [2, 0, 0], sizes = [1, 50, 64], strides = [1, 1, 1]} : vector<3x50x64xf32> to vector<1x50x64xf32>
    %134 = vector.shape_cast %133 : vector<1x50x64xf32> to vector<50x64xf32>
    %c0_157 = arith.constant 0 : index
    %c24 = arith.constant 24 : index
    %c0_158 = arith.constant 0 : index
    %c0_159 = arith.constant 0 : index
    %135 = vector.load %arg6[%c0_157, %c24, %c0_158, %c0_159] : memref<1x25x50x64xf32, #tpu.memory_space<vmem>>, vector<1x1x50x64xf32>
    %136 = vector.shape_cast %135 : vector<1x1x50x64xf32> to vector<50x64xf32>
    %137 = vector.shape_cast %134 : vector<50x64xf32> to vector<1x1x50x64xf32>
    tpu.vector_store %arg6[%c0_157, %c24, %c0_158, %c0_159], %137 {strides = array<i32>} : memref<1x25x50x64xf32, #tpu.memory_space<vmem>>, vector<1x1x50x64xf32>,
    return
  }
  func.func @transform_0(%arg0: i32) -> (i32, i32, i32, i32) {
    %c0_i32 = arith.constant 0 : i32
    %c0_i32_0 = arith.constant 0 : i32
    %c0_i32_1 = arith.constant 0 : i32
    %c0_i32_2 = arith.constant 0 : i32
    return %arg0, %c0_i32, %c0_i32_0, %c0_i32_1 : i32, i32, i32, i32
  }
  func.func @transform_1(%arg0: i32) -> (i32, i32) {
    %c0_i32 = arith.constant 0 : i32
    %c0_i32_0 = arith.constant 0 : i32
    %c0_i32_1 = arith.constant 0 : i32
    return %c0_i32, %c0_i32_0 : i32, i32
  }
  func.func @transform_2(%arg0: i32) -> (i32, i32) {
    %c0_i32 = arith.constant 0 : i32
    %c0_i32_0 = arith.constant 0 : i32
    %c0_i32_1 = arith.constant 0 : i32
    return %c0_i32, %c0_i32_0 : i32, i32
  }
  func.func @transform_3(%arg0: i32) -> (i32, i32) {
    %c0_i32 = arith.constant 0 : i32
    %c0_i32_0 = arith.constant 0 : i32
    %c0_i32_1 = arith.constant 0 : i32
    return %c0_i32, %c0_i32_0 : i32, i32
  }
  func.func @transform_4(%arg0: i32) -> (i32, i32) {
    %c0_i32 = arith.constant 0 : i32
    %c0_i32_0 = arith.constant 0 : i32
    %c0_i32_1 = arith.constant 0 : i32
    return %c0_i32, %c0_i32_0 : i32, i32
  }
  func.func @transform_5(%arg0: i32) -> (i32, i32, i32, i32) {
    %c0_i32 = arith.constant 0 : i32
    %c0_i32_0 = arith.constant 0 : i32
    %c0_i32_1 = arith.constant 0 : i32
    %c0_i32_2 = arith.constant 0 : i32
    return %arg0, %c0_i32, %c0_i32_0, %c0_i32_1 : i32, i32, i32, i32
  }
}

</mosaic_0001>

<llo_original>
// kernel: model_forward.1
$region0: #{model_forward.1}
  #allocation0 [shape = 'u32[]', space=smem, size = 0x4, offset = 0x4, fixed_abs, tag = 'smem constant byte address 0x4 - core index']
  #allocation1 [shape = 'u32[72,128]{1,0:T(1,128)}', space=vmem, size = 0x9000, scoped, tag = 'internal scratch']
  #allocation2 [shape = 'f32[3,42,64]{2,1,0:T(8,128)}', space=vmem, size = 0x12000, scoped, tag = 'scratch operand']
  #allocation3 [shape = 'f32[3,50,64]{2,1,0:T(8,128)}', space=vmem, size = 0x15000, scoped, tag = 'scratch operand']
  %s0 = inlined_call_operand.vmem [shape: f32[2,3,32,39], index: 0, kind: input, shape index: {}]
  %s1 = inlined_call_operand.vmem [shape: f32[39,704], index: 1, kind: input, shape index: {}]
  %s2 = inlined_call_operand.vmem [shape: f32[64,576], index: 2, kind: input, shape index: {}]
  %s3 = inlined_call_operand.vmem [shape: f32[1,64], index: 3, kind: input, shape index: {}]
  %s4 = inlined_call_operand.vmem [shape: f32[1,64], index: 4, kind: input, shape index: {}]
  %s5 = inlined_call_operand.vmem [shape: f32[2,25,50,64], index: 5, kind: output, shape index: {}]
  %s6 = sld [smem:[#allocation0]]
  $region53: #{model_forward.1} parent=0
    _
  %s8 = ssub.s32 1, %s6
  %s9 = scalar_select 0, %s8, %s6
  loop: start=0, step=1, limit=4
  $region2: #{model_forward.1} parent=0 // loop_pre_header
    _
  $region3: #{model_forward.1} parent=0 // loop_header
    %s11 = sphi 0, %s15
    %p12 = scmp.ge.s32.totalorder %s11, 4
    %s21 = sphi 0, %s23
    %s24 = sphi 0, %s21
    %s25 = sphi 0, %s24
    %s41 = sphi 0, %s25
    %s45 = sphi 0, %s45
    %s47 = sphi 0, %s45
    %s48 = sphi 0, %s47
    %s62 = sphi 0, %s48
    %s66 = sphi 0, %s66
    %s68 = sphi 0, %s66
    %s69 = sphi 0, %s68
    %s83 = sphi 0, %s69
    %s87 = sphi 0, %s87
    %s89 = sphi 0, %s87
    %s90 = sphi 0, %s89
    %s104 = sphi 0, %s90
    %s108 = sphi 0, %s108
    %s110 = sphi 0, %s108
    %s111 = sphi 0, %s110
    %s125 = sphi 0, %s111
    %s131 = sphi 0, %s133
    %s134 = sphi 0, %s131
    %s135 = sphi 0, %s134
    %s151 = sphi 0, %s135
  $region4: #{model_forward.1} parent=0 // loop_header_branch
    %14 = sbr.rel (%p12) target = $region8
  $region5: #{model_forward.1} parent=0 // loop_body
    %s16 = ssub.s32 %s11, 1
    %s17 = ssub.s32 %s11, 2
    %s18 = sadd.s32 %s11, 1
    %s19 = ssub.s32 %s11, %s18
    %p20 = scmp.eq.s32.totalorder %s19, 0
    %s22 = sadd.s32 %s21, 1
    %s23 = scalar_select %p20, %s21, %s22
    %p26 = pneg %p20
    %p27 = scmp.eq.s32.totalorder %s11, 1
    %p28 = por %p26, %p27
    %p29 = scmp.ne.s32.totalorder %s21, %s24
    %p30 = scmp.eq.s32.totalorder %s11, 0
    %p31 = por %p29, %p30
    %p32 = scmp.ne.s32.totalorder %s21, %s24
    %p33 = scmp.eq.s32.totalorder %s16, 1
    %p34 = por %p32, %p33
    %p35 = scmp.ne.s32.totalorder %s24, %s25
    %p36 = scmp.eq.s32.totalorder %s16, 0
    %p37 = por %p35, %p36
    %p38 = scmp.ne.s32.totalorder %s24, %s25
    %p39 = scmp.eq.s32.totalorder %s17, 1
    %p40 = por %p38, %p39
    %p42 = scmp.ne.s32.totalorder %s25, %s41
    %p43 = scmp.eq.s32.totalorder %s17, 0
    %p44 = por %p42, %p43
    %s46 = sadd.s32 %s45, 1
    %p49 = scmp.eq.s32.totalorder %s11, 1
    %p50 = scmp.ne.s32.totalorder %s45, %s47
    %p51 = scmp.eq.s32.totalorder %s11, 0
    %p52 = por %p50, %p51
    %p53 = scmp.ne.s32.totalorder %s45, %s47
    %p54 = scmp.eq.s32.totalorder %s16, 1
    %p55 = por %p53, %p54
    %p56 = scmp.ne.s32.totalorder %s47, %s48
    %p57 = scmp.eq.s32.totalorder %s16, 0
    %p58 = por %p56, %p57
    %p59 = scmp.ne.s32.totalorder %s47, %s48
    %p60 = scmp.eq.s32.totalorder %s17, 1
    %p61 = por %p59, %p60
    %p63 = scmp.ne.s32.totalorder %s48, %s62
    %p64 = scmp.eq.s32.totalorder %s17, 0
    %p65 = por %p63, %p64
    %s67 = sadd.s32 %s66, 1
    %p70 = scmp.eq.s32.totalorder %s11, 1
    %p71 = scmp.ne.s32.totalorder %s66, %s68
    %p72 = scmp.eq.s32.totalorder %s11, 0
    %p73 = por %p71, %p72
    %p74 = scmp.ne.s32.totalorder %s66, %s68
    %p75 = scmp.eq.s32.totalorder %s16, 1
    %p76 = por %p74, %p75
    %p77 = scmp.ne.s32.totalorder %s68, %s69
    %p78 = scmp.eq.s32.totalorder %s16, 0
    %p79 = por %p77, %p78
    %p80 = scmp.ne.s32.totalorder %s68, %s69
    %p81 = scmp.eq.s32.totalorder %s17, 1
    %p82 = por %p80, %p81
    %p84 = scmp.ne.s32.totalorder %s69, %s83
    %p85 = scmp.eq.s32.totalorder %s17, 0
    %p86 = por %p84, %p85
    %s88 = sadd.s32 %s87, 1
    %p91 = scmp.eq.s32.totalorder %s11, 1
    %p92 = scmp.ne.s32.totalorder %s87, %s89
    %p93 = scmp.eq.s32.totalorder %s11, 0
    %p94 = por %p92, %p93
    %p95 = scmp.ne.s32.totalorder %s87, %s89
    %p96 = scmp.eq.s32.totalorder %s16, 1
    %p97 = por %p95, %p96
    %p98 = scmp.ne.s32.totalorder %s89, %s90
    %p99 = scmp.eq.s32.totalorder %s16, 0
    %p100 = por %p98, %p99
    %p101 = scmp.ne.s32.totalorder %s89, %s90
    %p102 = scmp.eq.s32.totalorder %s17, 1
    %p103 = por %p101, %p102
    %p105 = scmp.ne.s32.totalorder %s90, %s104
    %p106 = scmp.eq.s32.totalorder %s17, 0
    %p107 = por %p105, %p106
    %s109 = sadd.s32 %s108, 1
    %p112 = scmp.eq.s32.totalorder %s11, 1
    %p113 = scmp.ne.s32.totalorder %s108, %s110
    %p114 = scmp.eq.s32.totalorder %s11, 0
    %p115 = por %p113, %p114
    %p116 = scmp.ne.s32.totalorder %s108, %s110
    %p117 = scmp.eq.s32.totalorder %s16, 1
    %p118 = por %p116, %p117
    %p119 = scmp.ne.s32.totalorder %s110, %s111
    %p120 = scmp.eq.s32.totalorder %s16, 0
    %p121 = por %p119, %p120
    %p122 = scmp.ne.s32.totalorder %s110, %s111
    %p123 = scmp.eq.s32.totalorder %s17, 1
    %p124 = por %p122, %p123
    %p126 = scmp.ne.s32.totalorder %s111, %s125
    %p127 = scmp.eq.s32.totalorder %s17, 0
    %p128 = por %p126, %p127
    %s129 = ssub.s32 %s11, %s18
    %p130 = scmp.eq.s32.totalorder %s129, 0
    %s132 = sadd.s32 %s131, 1
    %s133 = scalar_select %p130, %s131, %s132
    %p136 = pneg %p130
    %p137 = scmp.eq.s32.totalorder %s11, 1
    %p138 = por %p136, %p137
    %p139 = scmp.ne.s32.totalorder %s131, %s134
    %p140 = scmp.eq.s32.totalorder %s11, 0
    %p141 = por %p139, %p140
    %p142 = scmp.ne.s32.totalorder %s131, %s134
    %p143 = scmp.eq.s32.totalorder %s16, 1
    %p144 = por %p142, %p143
    %p145 = scmp.ne.s32.totalorder %s134, %s135
    %p146 = scmp.eq.s32.totalorder %s16, 0
    %p147 = por %p145, %p146
    %p148 = scmp.ne.s32.totalorder %s134, %s135
    %p149 = scmp.eq.s32.totalorder %s17, 1
    %p150 = por %p148, %p149
    %p152 = scmp.ne.s32.totalorder %s135, %s151
    %p153 = scmp.eq.s32.totalorder %s17, 0
    %p154 = por %p152, %p153
    %p155 = scmp.le.s32.totalorder 1, %s11
    %p156 = scmp.lt.s32.totalorder %s11, 3
    %p157 = pnand %p155, %p156
    %p158 = pneg %p157
    // Predicated region
    $region9: #{model_forward.1} parent=5 // pred_check
      _
    $region10: #{model_forward.1} parent=5 // pred_check_branch
      %160 = sbr.rel (%p157) target = $region12
    $region11: #{model_forward.1} parent=5 // pred_region
      %s161 = ssub.s32 %s11, 1
      // Predicated region
      $region13: #{model_forward.1} parent=11 // pred_check
        %p162 = pneg %p58
      $region14: #{model_forward.1} parent=11 // pred_check_branch
        %164 = sbr.rel (%p162) target = $region16
      $region15: #{model_forward.1} parent=11 // pred_region
        _
      $region16: #{model_forward.1} parent=11 // pred_fallthru
        _
      // Predicated region
      $region17: #{model_forward.1} parent=11 // pred_check
        %p165 = pneg %p79
      $region18: #{model_forward.1} parent=11 // pred_check_branch
        %167 = sbr.rel (%p165) target = $region20
      $region19: #{model_forward.1} parent=11 // pred_region
        _
      $region20: #{model_forward.1} parent=11 // pred_fallthru
        _
      // Predicated region
      $region21: #{model_forward.1} parent=11 // pred_check
        %p168 = pneg %p100
      $region22: #{model_forward.1} parent=11 // pred_check_branch
        %170 = sbr.rel (%p168) target = $region24
      $region23: #{model_forward.1} parent=11 // pred_region
        _
      $region24: #{model_forward.1} parent=11 // pred_fallthru
        _
      // Predicated region
      $region25: #{model_forward.1} parent=11 // pred_check
        %p171 = pneg %p121
      $region26: #{model_forward.1} parent=11 // pred_check_branch
        %173 = sbr.rel (%p171) target = $region28
      $region27: #{model_forward.1} parent=11 // pred_region
        _
      $region28: #{model_forward.1} parent=11 // pred_fallthru
        _
    $region12: #{model_forward.1} parent=5 // pred_fallthru
      _
    %p174 = scmp.lt.s32.totalorder %s11, 2
    // Predicated region
    $region29: #{model_forward.1} parent=5 // pred_check
      %p175 = pneg %p174
    $region30: #{model_forward.1} parent=5 // pred_check_branch
      %177 = sbr.rel (%p175) target = $region32
    $region31: #{model_forward.1} parent=5 // pred_region
      // Predicated region
      $region33: #{model_forward.1} parent=31 // pred_check
        %p178 = pneg %p31
      $region34: #{model_forward.1} parent=31 // pred_check_branch
        %180 = sbr.rel (%p178) target = $region36
      $region35: #{model_forward.1} parent=31 // pred_region
        %p181 = scmp.lt.s32.totalorder %s11, 1
        %s182 = scalar_select %p181, %s11, 1
        %s183 = smul.addr %s182, 12
        %s184 = smul.addr %s183, 8
        %s185 = scalar_lea.vmem %s0, %s184
      $region36: #{model_forward.1} parent=31 // pred_fallthru
        _
    $region32: #{model_forward.1} parent=5 // pred_fallthru
      _
    %p186 = scmp.le.s32.totalorder 1, %s11
    %p187 = scmp.lt.s32.totalorder %s11, 3
    %p188 = pnand %p186, %p187
    %p189 = pneg %p188
    // Predicated region
    $region37: #{model_forward.1} parent=5 // pred_check
      _
    $region38: #{model_forward.1} parent=5 // pred_check_branch
      %191 = sbr.rel (%p188) target = $region40
    $region39: #{model_forward.1} parent=5 // pred_region
      %s192 = ssub.s32 %s11, 1
      %p193 = scmp.lt.s32.totalorder %s16, 1
      %s194 = scalar_select %p193, %s16, 1
      %s195 = smul.addr %s194, 12
      %s196 = smul.addr %s195, 8
      %s197 = scalar_lea.vmem %s0, %s196
      %p198 = pneg %p37
      %p199 = pneg %p34
      %p200 = pneg %p58
      %p201 = pneg %p55
      %p202 = pneg %p79
      %p203 = pneg %p76
      %p204 = pneg %p100
      %p205 = pneg %p97
      %p206 = pneg %p121
      %p207 = pneg %p118
      %p208 = pneg %p147
      %p209 = pneg %p144
      %p210 = scmp.lt.s32.totalorder %s16, 1
      %s211 = scalar_select %p210, %s16, 1
      %s212 = smul.addr %s211, 175
      %s213 = smul.addr %s212, 8
      %s214 = scalar_lea.vmem %s5, %s213
      %p215 = scmp.lt.s32.totalorder %s16, 1
      %s216 = scalar_select %p215, %s16, 1
      %s217 = smul.addr %s216, 12
      %s218 = smul.addr %s217, 8
      %s219 = scalar_lea.vmem %s0, %s218
      %p220 = scmp.lt.s32.totalorder %s16, 1
      %s221 = scalar_select %p220, %s16, 1
      %s222 = smul.addr %s221, 175
      %s223 = smul.addr %s222, 8
      %s224 = scalar_lea.vmem %s5, %s223
      %v225 = vld [vmem:[%s3] sm:$0x1]
      %v226 = vld [vmem:[%s4] sm:$0x1]
      %v227 = vld [vmem:[%s219] sm:$0xff]
      %v228 = vld [vmem:[%s219 + $0x8] sm:$0xff]
      %v229 = vld [vmem:[%s219 + $0x10] sm:$0xff]
      %v230 = vld [vmem:[%s219 + $0x18] sm:$0xff]
      %v231 = vld [vmem:[%s219 + $0x20] sm:$0xff]
      %v232 = vld [vmem:[%s219 + $0x28] sm:$0xff]
      %v233 = vld [vmem:[%s219 + $0x30] sm:$0xff]
      %v234 = vld [vmem:[%s219 + $0x38] sm:$0xff]
      %v235 = vld [vmem:[%s219 + $0x40] sm:$0xff]
      %v236 = vld [vmem:[%s219 + $0x48] sm:$0xff]
      %v237 = vld [vmem:[%s219 + $0x50] sm:$0xff]
      %v238 = vld [vmem:[%s219 + $0x58] sm:$0xff]
      %v239 = vld [vmem:[%s1] sm:$0xff]
      %v240 = vld [vmem:[%s1 + $0x8] sm:$0xff]
      %v241 = vld [vmem:[%s1 + $0x10] sm:$0xff]
      %v242 = vld [vmem:[%s1 + $0x18] sm:$0xff]
      %v243 = vld [vmem:[%s1 + $0x20] sm:$0xff]
      %v244 = vld [vmem:[%s1 + $0x28] sm:$0xff]
      %v245 = vld [vmem:[%s1 + $0x30] sm:$0xff]
      %v246 = vld [vmem:[%s1 + $0x38] sm:$0xff]
      %v247 = vld [vmem:[%s1 + $0x40] sm:$0xff]
      %v248 = vld [vmem:[%s1 + $0x48] sm:$0xff]
      %v249 = vld [vmem:[%s1 + $0x50] sm:$0xff]
      %v250 = vld [vmem:[%s1 + $0x58] sm:$0xff]
      %v251 = vld [vmem:[%s1 + $0x60] sm:$0xff]
      %v252 = vld [vmem:[%s1 + $0x68] sm:$0xff]
      %v253 = vld [vmem:[%s1 + $0x70] sm:$0xff]
      %v254 = vld [vmem:[%s1 + $0x78] sm:$0xff]
      %v255 = vld [vmem:[%s1 + $0x80] sm:$0xff]
      %v256 = vld [vmem:[%s1 + $0x88] sm:$0xff]
      %v257 = vld [vmem:[%s1 + $0x90] sm:$0xff]
      %v258 = vld [vmem:[%s1 + $0x98] sm:$0xff]
      %v259 = vld [vmem:[%s1 + $0xa0] sm:$0xff]
      %v260 = vld [vmem:[%s1 + $0xa8] sm:$0xff]
      %v261 = vld [vmem:[%s1 + $0xb0] sm:$0xff]
      %v262 = vld [vmem:[%s1 + $0xb8] sm:$0xff]
      %v263 = vld [vmem:[%s1 + $0xc0] sm:$0x7f]
      %v264 = vld [vmem:[%s1 + $0xc8] sm:$0x7f]
      %v265 = vld [vmem:[%s1 + $0xd0] sm:$0x7f]
      %v266 = vld [vmem:[%s1 + $0xd8] sm:$0x7f]
      %v267 = vld [vmem:[%s1 + $0xe0] sm:$0x7f]
      %v268 = vld [vmem:[%s1 + $0xe8] sm:$0x7f]
      %vm269 = vcmask 318464
      %v271 = vsel %vm269, %v227, 0
      %v274 = vsel %vm269, %v228, 0
      %v277 = vsel %vm269, %v229, 0
      %v280 = vsel %vm269, %v230, 0
      %v283 = vsel %vm269, %v231, 0
      %v286 = vsel %vm269, %v232, 0
      %v289 = vsel %vm269, %v233, 0
      %v292 = vsel %vm269, %v234, 0
      %v295 = vsel %vm269, %v235, 0
      %v298 = vsel %vm269, %v236, 0
      %v301 = vsel %vm269, %v237, 0
      %v304 = vsel %vm269, %v238, 0
      %vm306 = vcmask 1046528
      %v308 = vsel %vm306, %v263, 0
      %v311 = vsel %vm306, %v264, 0
      %v314 = vsel %vm306, %v265, 0
      %v317 = vsel %vm306, %v266, 0
      %v320 = vsel %vm306, %v267, 0
      %v323 = vsel %vm306, %v268, 0
      %325 = vmatpush.msra.mxu0 0.0
      %326 = vmatpush.msra.mxu0 0.0
      %327 = vmatpush.msra.mxu0 0.0
      %328 = vmatpush.msra.mxu0 0.0
      %329 = vmatpush.msra.mxu0 0.0
      %330 = vmatpush.msra.mxu0 0.0
      %331 = vmatpush.msra.mxu0 0.0
      %332 = vmatpush.msra.mxu0 0.0
      %333 = vmatpush.msra.mxu0 0.0
      %334 = vmatpush.msra.mxu0 0.0
      %335 = vmatpush.msra.mxu0 0.0
      %336 = vmatpush.msra.mxu0 %v308
      %337 = vmatpush.msra.mxu0 %v257
      %338 = vmatpush.msra.mxu0 %v251
      %339 = vmatpush.msra.mxu0 %v245
      %340 = vmatpush.msra.mxu0 %v239
      %341 = vmatmul.f32.gmra.mxu0 %v271
      %v342 = vpop.f32.mrf.mxu0
      %v343 = vadd.f32 0.0, %v342
      %344 = vmatmul.f32.gmra.mxu0 %v274
      %v345 = vpop.f32.mrf.mxu0
      %v346 = vadd.f32 0.0, %v345
      %347 = vmatmul.f32.gmra.mxu0 %v277
      %v348 = vpop.f32.mrf.mxu0
      %v349 = vadd.f32 0.0, %v348
      %350 = vmatmul.f32.gmra.mxu0 %v280
      %v351 = vpop.f32.mrf.mxu0
      %v352 = vadd.f32 0.0, %v351
      %353 = vmatmul.f32.gmra.mxu0 %v283
      %v354 = vpop.f32.mrf.mxu0
      %v355 = vadd.f32 0.0, %v354
      %356 = vmatmul.f32.gmra.mxu0 %v286
      %v357 = vpop.f32.mrf.mxu0
      %v358 = vadd.f32 0.0, %v357
      %359 = vmatmul.f32.gmra.mxu0 %v289
      %v360 = vpop.f32.mrf.mxu0
      %v361 = vadd.f32 0.0, %v360
      %362 = vmatmul.f32.gmra.mxu0 %v292
      %v363 = vpop.f32.mrf.mxu0
      %v364 = vadd.f32 0.0, %v363
      %365 = vmatmul.f32.gmra.mxu0 %v295
      %v366 = vpop.f32.mrf.mxu0
      %v367 = vadd.f32 0.0, %v366
      %368 = vmatmul.f32.gmra.mxu0 %v298
      %v369 = vpop.f32.mrf.mxu0
      %v370 = vadd.f32 0.0, %v369
      %371 = vmatmul.f32.gmra.mxu0 %v301
      %v372 = vpop.f32.mrf.mxu0
      %v373 = vadd.f32 0.0, %v372
      %374 = vmatmul.f32.gmra.mxu0 %v304
      %v375 = vpop.f32.mrf.mxu0
      %v376 = vadd.f32 0.0, %v375
      %377 = vdwg.mxu0
      %378 = vmatpush.msra.mxu0 0.0
      %379 = vmatpush.msra.mxu0 0.0
      %380 = vmatpush.msra.mxu0 0.0
      %381 = vmatpush.msra.mxu0 0.0
      %382 = vmatpush.msra.mxu0 0.0
      %383 = vmatpush.msra.mxu0 0.0
      %384 = vmatpush.msra.mxu0 0.0
      %385 = vmatpush.msra.mxu0 0.0
      %386 = vmatpush.msra.mxu0 0.0
      %387 = vmatpush.msra.mxu0 0.0
      %388 = vmatpush.msra.mxu0 0.0
      %389 = vmatpush.msra.mxu0 %v311
      %390 = vmatpush.msra.mxu0 %v258
      %391 = vmatpush.msra.mxu0 %v252
      %392 = vmatpush.msra.mxu0 %v246
      %393 = vmatpush.msra.mxu0 %v240
      %394 = vmatmul.f32.gmra.mxu0 %v271
      %v395 = vpop.f32.mrf.mxu0
      %v396 = vadd.f32 0.0, %v395
      %397 = vmatmul.f32.gmra.mxu0 %v274
      %v398 = vpop.f32.mrf.mxu0
      %v399 = vadd.f32 0.0, %v398
      %400 = vmatmul.f32.gmra.mxu0 %v277
      %v401 = vpop.f32.mrf.mxu0
      %v402 = vadd.f32 0.0, %v401
      %403 = vmatmul.f32.gmra.mxu0 %v280
      %v404 = vpop.f32.mrf.mxu0
      %v405 = vadd.f32 0.0, %v404
      %406 = vmatmul.f32.gmra.mxu0 %v283
      %v407 = vpop.f32.mrf.mxu0
      %v408 = vadd.f32 0.0, %v407
      %409 = vmatmul.f32.gmra.mxu0 %v286
      %v410 = vpop.f32.mrf.mxu0
      %v411 = vadd.f32 0.0, %v410
      %412 = vmatmul.f32.gmra.mxu0 %v289
      %v413 = vpop.f32.mrf.mxu0
      %v414 = vadd.f32 0.0, %v413
      %415 = vmatmul.f32.gmra.mxu0 %v292
      %v416 = vpop.f32.mrf.mxu0
      %v417 = vadd.f32 0.0, %v416
      %418 = vmatmul.f32.gmra.mxu0 %v295
      %v419 = vpop.f32.mrf.mxu0
      %v420 = vadd.f32 0.0, %v419
      %421 = vmatmul.f32.gmra.mxu0 %v298
      %v422 = vpop.f32.mrf.mxu0
      %v423 = vadd.f32 0.0, %v422
      %424 = vmatmul.f32.gmra.mxu0 %v301
      %v425 = vpop.f32.mrf.mxu0
      %v426 = vadd.f32 0.0, %v425
      %427 = vmatmul.f32.gmra.mxu0 %v304
      %v428 = vpop.f32.mrf.mxu0
      %v429 = vadd.f32 0.0, %v428
      %430 = vdwg.mxu0
      %431 = vmatpush.msra.mxu0 0.0
      %432 = vmatpush.msra.mxu0 0.0
      %433 = vmatpush.msra.mxu0 0.0
      %434 = vmatpush.msra.mxu0 0.0
      %435 = vmatpush.msra.mxu0 0.0
      %436 = vmatpush.msra.mxu0 0.0
      %437 = vmatpush.msra.mxu0 0.0
      %438 = vmatpush.msra.mxu0 0.0
      %439 = vmatpush.msra.mxu0 0.0
      %440 = vmatpush.msra.mxu0 0.0
      %441 = vmatpush.msra.mxu0 0.0
      %442 = vmatpush.msra.mxu0 %v314
      %443 = vmatpush.msra.mxu0 %v259
      %444 = vmatpush.msra.mxu0 %v253
      %445 = vmatpush.msra.mxu0 %v247
      %446 = vmatpush.msra.mxu0 %v241
      %447 = vmatmul.f32.gmra.mxu0 %v271
      %v448 = vpop.f32.mrf.mxu0
      %v449 = vadd.f32 0.0, %v448
      %450 = vmatmul.f32.gmra.mxu0 %v274
      %v451 = vpop.f32.mrf.mxu0
      %v452 = vadd.f32 0.0, %v451
      %453 = vmatmul.f32.gmra.mxu0 %v277
      %v454 = vpop.f32.mrf.mxu0
      %v455 = vadd.f32 0.0, %v454
      %456 = vmatmul.f32.gmra.mxu0 %v280
      %v457 = vpop.f32.mrf.mxu0
      %v458 = vadd.f32 0.0, %v457
      %459 = vmatmul.f32.gmra.mxu0 %v283
      %v460 = vpop.f32.mrf.mxu0
      %v461 = vadd.f32 0.0, %v460
      %462 = vmatmul.f32.gmra.mxu0 %v286
      %v463 = vpop.f32.mrf.mxu0
      %v464 = vadd.f32 0.0, %v463
      %465 = vmatmul.f32.gmra.mxu0 %v289
      %v466 = vpop.f32.mrf.mxu0
      %v467 = vadd.f32 0.0, %v466
      %468 = vmatmul.f32.gmra.mxu0 %v292
      %v469 = vpop.f32.mrf.mxu0
      %v470 = vadd.f32 0.0, %v469
      %471 = vmatmul.f32.gmra.mxu0 %v295
      %v472 = vpop.f32.mrf.mxu0
      %v473 = vadd.f32 0.0, %v472
      %474 = vmatmul.f32.gmra.mxu0 %v298
      %v475 = vpop.f32.mrf.mxu0
      %v476 = vadd.f32 0.0, %v475
      %477 = vmatmul.f32.gmra.mxu0 %v301
      %v478 = vpop.f32.mrf.mxu0
      %v479 = vadd.f32 0.0, %v478
      %480 = vmatmul.f32.gmra.mxu0 %v304
      %v481 = vpop.f32.mrf.mxu0
      %v482 = vadd.f32 0.0, %v481
      %483 = vdwg.mxu0
      %484 = vmatpush.msra.mxu0 0.0
      %485 = vmatpush.msra.mxu0 0.0
      %486 = vmatpush.msra.mxu0 0.0
      %487 = vmatpush.msra.mxu0 0.0
      %488 = vmatpush.msra.mxu0 0.0
      %489 = vmatpush.msra.mxu0 0.0
      %490 = vmatpush.msra.mxu0 0.0
      %491 = vmatpush.msra.mxu0 0.0
      %492 = vmatpush.msra.mxu0 0.0
      %493 = vmatpush.msra.mxu0 0.0
      %494 = vmatpush.msra.mxu0 0.0
      %495 = vmatpush.msra.mxu0 %v317
      %496 = vmatpush.msra.mxu0 %v260
      %497 = vmatpush.msra.mxu0 %v254
      %498 = vmatpush.msra.mxu0 %v248
      %499 = vmatpush.msra.mxu0 %v242
      %500 = vmatmul.f32.gmra.mxu0 %v271
      %v501 = vpop.f32.mrf.mxu0
      %v502 = vadd.f32 0.0, %v501
      %503 = vmatmul.f32.gmra.mxu0 %v274
      %v504 = vpop.f32.mrf.mxu0
      %v505 = vadd.f32 0.0, %v504
      %506 = vmatmul.f32.gmra.mxu0 %v277
      %v507 = vpop.f32.mrf.mxu0
      %v508 = vadd.f32 0.0, %v507
      %509 = vmatmul.f32.gmra.mxu0 %v280
      %v510 = vpop.f32.mrf.mxu0
      %v511 = vadd.f32 0.0, %v510
      %512 = vmatmul.f32.gmra.mxu0 %v283
      %v513 = vpop.f32.mrf.mxu0
      %v514 = vadd.f32 0.0, %v513
      %515 = vmatmul.f32.gmra.mxu0 %v286
      %v516 = vpop.f32.mrf.mxu0
      %v517 = vadd.f32 0.0, %v516
      %518 = vmatmul.f32.gmra.mxu0 %v289
      %v519 = vpop.f32.mrf.mxu0
      %v520 = vadd.f32 0.0, %v519
      %521 = vmatmul.f32.gmra.mxu0 %v292
      %v522 = vpop.f32.mrf.mxu0
      %v523 = vadd.f32 0.0, %v522
      %524 = vmatmul.f32.gmra.mxu0 %v295
      %v525 = vpop.f32.mrf.mxu0
      %v526 = vadd.f32 0.0, %v525
      %527 = vmatmul.f32.gmra.mxu0 %v298
      %v528 = vpop.f32.mrf.mxu0
      %v529 = vadd.f32 0.0, %v528
      %530 = vmatmul.f32.gmra.mxu0 %v301
      %v531 = vpop.f32.mrf.mxu0
      %v532 = vadd.f32 0.0, %v531
      %533 = vmatmul.f32.gmra.mxu0 %v304
      %v534 = vpop.f32.mrf.mxu0
      %v535 = vadd.f32 0.0, %v534
      %536 = vdwg.mxu0
      %537 = vmatpush.msra.mxu0 0.0
      %538 = vmatpush.msra.mxu0 0.0
      %539 = vmatpush.msra.mxu0 0.0
      %540 = vmatpush.msra.mxu0 0.0
      %541 = vmatpush.msra.mxu0 0.0
      %542 = vmatpush.msra.mxu0 0.0
      %543 = vmatpush.msra.mxu0 0.0
      %544 = vmatpush.msra.mxu0 0.0
      %545 = vmatpush.msra.mxu0 0.0
      %546 = vmatpush.msra.mxu0 0.0
      %547 = vmatpush.msra.mxu0 0.0
      %548 = vmatpush.msra.mxu0 %v320
      %549 = vmatpush.msra.mxu0 %v261
      %550 = vmatpush.msra.mxu0 %v255
      %551 = vmatpush.msra.mxu0 %v249
      %552 = vmatpush.msra.mxu0 %v243
      %553 = vmatmul.f32.gmra.mxu0 %v271
      %v554 = vpop.f32.mrf.mxu0
      %v555 = vadd.f32 0.0, %v554
      %556 = vmatmul.f32.gmra.mxu0 %v274
      %v557 = vpop.f32.mrf.mxu0
      %v558 = vadd.f32 0.0, %v557
      %559 = vmatmul.f32.gmra.mxu0 %v277
      %v560 = vpop.f32.mrf.mxu0
      %v561 = vadd.f32 0.0, %v560
      %562 = vmatmul.f32.gmra.mxu0 %v280
      %v563 = vpop.f32.mrf.mxu0
      %v564 = vadd.f32 0.0, %v563
      %565 = vmatmul.f32.gmra.mxu0 %v283
      %v566 = vpop.f32.mrf.mxu0
      %v567 = vadd.f32 0.0, %v566
      %568 = vmatmul.f32.gmra.mxu0 %v286
      %v569 = vpop.f32.mrf.mxu0
      %v570 = vadd.f32 0.0, %v569
      %571 = vmatmul.f32.gmra.mxu0 %v289
      %v572 = vpop.f32.mrf.mxu0
      %v573 = vadd.f32 0.0, %v572
      %574 = vmatmul.f32.gmra.mxu0 %v292
      %v575 = vpop.f32.mrf.mxu0
      %v576 = vadd.f32 0.0, %v575
      %577 = vmatmul.f32.gmra.mxu0 %v295
      %v578 = vpop.f32.mrf.mxu0
      %v579 = vadd.f32 0.0, %v578
      %580 = vmatmul.f32.gmra.mxu0 %v298
      %v581 = vpop.f32.mrf.mxu0
      %v582 = vadd.f32 0.0, %v581
      %583 = vmatmul.f32.gmra.mxu0 %v301
      %v584 = vpop.f32.mrf.mxu0
      %v585 = vadd.f32 0.0, %v584
      %586 = vmatmul.f32.gmra.mxu0 %v304
      %v587 = vpop.f32.mrf.mxu0
      %v588 = vadd.f32 0.0, %v587
      %589 = vdwg.mxu0
      %590 = vmatpush.msra.mxu0 0.0
      %591 = vmatpush.msra.mxu0 0.0
      %592 = vmatpush.msra.mxu0 0.0
      %593 = vmatpush.msra.mxu0 0.0
      %594 = vmatpush.msra.mxu0 0.0
      %595 = vmatpush.msra.mxu0 0.0
      %596 = vmatpush.msra.mxu0 0.0
      %597 = vmatpush.msra.mxu0 0.0
      %598 = vmatpush.msra.mxu0 0.0
      %599 = vmatpush.msra.mxu0 0.0
      %600 = vmatpush.msra.mxu0 0.0
      %601 = vmatpush.msra.mxu0 %v323
      %602 = vmatpush.msra.mxu0 %v262
      %603 = vmatpush.msra.mxu0 %v256
      %604 = vmatpush.msra.mxu0 %v250
      %605 = vmatpush.msra.mxu0 %v244
      %606 = vmatmul.f32.gmra.mxu0 %v271
      %v607 = vpop.f32.mrf.mxu0
      %v608 = vadd.f32 0.0, %v607
      %609 = vmatmul.f32.gmra.mxu0 %v274
      %v610 = vpop.f32.mrf.mxu0
      %v611 = vadd.f32 0.0, %v610
      %612 = vmatmul.f32.gmra.mxu0 %v277
      %v613 = vpop.f32.mrf.mxu0
      %v614 = vadd.f32 0.0, %v613
      %615 = vmatmul.f32.gmra.mxu0 %v280
      %v616 = vpop.f32.mrf.mxu0
      %v617 = vadd.f32 0.0, %v616
      %618 = vmatmul.f32.gmra.mxu0 %v283
      %v619 = vpop.f32.mrf.mxu0
      %v620 = vadd.f32 0.0, %v619
      %621 = vmatmul.f32.gmra.mxu0 %v286
      %v622 = vpop.f32.mrf.mxu0
      %v623 = vadd.f32 0.0, %v622
      %624 = vmatmul.f32.gmra.mxu0 %v289
      %v625 = vpop.f32.mrf.mxu0
      %v626 = vadd.f32 0.0, %v625
      %627 = vmatmul.f32.gmra.mxu0 %v292
      %v628 = vpop.f32.mrf.mxu0
      %v629 = vadd.f32 0.0, %v628
      %630 = vmatmul.f32.gmra.mxu0 %v295
      %v631 = vpop.f32.mrf.mxu0
      %v632 = vadd.f32 0.0, %v631
      %633 = vmatmul.f32.gmra.mxu0 %v298
      %v634 = vpop.f32.mrf.mxu0
      %v635 = vadd.f32 0.0, %v634
      %636 = vmatmul.f32.gmra.mxu0 %v301
      %v637 = vpop.f32.mrf.mxu0
      %v638 = vadd.f32 0.0, %v637
      %639 = vmatmul.f32.gmra.mxu0 %v304
      %v640 = vpop.f32.mrf.mxu0
      %v641 = vadd.f32 0.0, %v640
      %642 = vdwg.mxu0
      %vm643 = vcmask 523264
      %644 = vst.msk [vmem:[#allocation2] sm:$0xff] %vm643, 0.0
      %645 = vst.msk [vmem:[#allocation2 + $0x8] sm:$0xff] %vm643, 0.0
      %646 = vst.msk [vmem:[#allocation2 + $0x10] sm:$0xff] %vm643, 0.0
      %647 = vst.msk [vmem:[#allocation2 + $0x18] sm:$0xff] %vm643, 0.0
      %648 = vst.msk [vmem:[#allocation2 + $0x20] sm:$0xff] %vm643, 0.0
      %vm649 = vcmask 517120
      %650 = vst.msk [vmem:[#allocation2 + $0x28] sm:$0x3] %vm649, 0.0
      %651 = vst.msk [vmem:[#allocation2 + $0x30] sm:$0xff] %vm643, 0.0
      %652 = vst.msk [vmem:[#allocation2 + $0x38] sm:$0xff] %vm643, 0.0
      %653 = vst.msk [vmem:[#allocation2 + $0x40] sm:$0xff] %vm643, 0.0
      %654 = vst.msk [vmem:[#allocation2 + $0x48] sm:$0xff] %vm643, 0.0
      %655 = vst.msk [vmem:[#allocation2 + $0x50] sm:$0xff] %vm643, 0.0
      %656 = vst.msk [vmem:[#allocation2 + $0x58] sm:$0x3] %vm649, 0.0
      %657 = vst.msk [vmem:[#allocation2 + $0x60] sm:$0xff] %vm643, 0.0
      %658 = vst.msk [vmem:[#allocation2 + $0x68] sm:$0xff] %vm643, 0.0
      %659 = vst.msk [vmem:[#allocation2 + $0x70] sm:$0xff] %vm643, 0.0
      %660 = vst.msk [vmem:[#allocation2 + $0x78] sm:$0xff] %vm643, 0.0
      %661 = vst.msk [vmem:[#allocation2 + $0x80] sm:$0xff] %vm643, 0.0
      %662 = vst.msk [vmem:[#allocation2 + $0x88] sm:$0x3] %vm649, 0.0
      %v663 = vld [vmem:[#allocation2] sm:$0xff]
      %v664 = vld [vmem:[#allocation2 + $0x8] sm:$0xff]
      %v665 = vld [vmem:[#allocation2 + $0x10] sm:$0xff]
      %v666 = vld [vmem:[#allocation2 + $0x18] sm:$0xff]
      %v667 = vld [vmem:[#allocation2 + $0x30] sm:$0xff]
      %v668 = vld [vmem:[#allocation2 + $0x38] sm:$0xff]
      %v669 = vld [vmem:[#allocation2 + $0x40] sm:$0xff]
      %v670 = vld [vmem:[#allocation2 + $0x48] sm:$0xff]
      %v671 = vld [vmem:[#allocation2 + $0x60] sm:$0xff]
      %v672 = vld [vmem:[#allocation2 + $0x68] sm:$0xff]
      %v673 = vld [vmem:[#allocation2 + $0x70] sm:$0xff]
      %v674 = vld [vmem:[#allocation2 + $0x78] sm:$0xff]
      %v675 = vadd.f32 %v663, %v343
      %v676 = vadd.f32 %v664, %v346
      %v677 = vadd.f32 %v665, %v349
      %v678 = vadd.f32 %v666, %v352
      %v679 = vadd.f32 %v667, %v355
      %v680 = vadd.f32 %v668, %v358
      %v681 = vadd.f32 %v669, %v361
      %v682 = vadd.f32 %v670, %v364
      %v683 = vadd.f32 %v671, %v367
      %v684 = vadd.f32 %v672, %v370
      %v685 = vadd.f32 %v673, %v373
      %v686 = vadd.f32 %v674, %v376
      %687 = vst.msk [vmem:[#allocation2] sm:$0xff] %vm643, %v675
      %688 = vst.msk [vmem:[#allocation2 + $0x8] sm:$0xff] %vm643, %v676
      %689 = vst.msk [vmem:[#allocation2 + $0x10] sm:$0xff] %vm643, %v677
      %690 = vst.msk [vmem:[#allocation2 + $0x18] sm:$0xff] %vm643, %v678
      %691 = vst.msk [vmem:[#allocation2 + $0x30] sm:$0xff] %vm643, %v679
      %692 = vst.msk [vmem:[#allocation2 + $0x38] sm:$0xff] %vm643, %v680
      %693 = vst.msk [vmem:[#allocation2 + $0x40] sm:$0xff] %vm643, %v681
      %694 = vst.msk [vmem:[#allocation2 + $0x48] sm:$0xff] %vm643, %v682
      %695 = vst.msk [vmem:[#allocation2 + $0x60] sm:$0xff] %vm643, %v683
      %696 = vst.msk [vmem:[#allocation2 + $0x68] sm:$0xff] %vm643, %v684
      %697 = vst.msk [vmem:[#allocation2 + $0x70] sm:$0xff] %vm643, %v685
      %698 = vst.msk [vmem:[#allocation2 + $0x78] sm:$0xff] %vm643, %v686
      %v699 = vld [vmem:[#allocation2 + $0x1] sm:$0xff]
      %v700 = vld [vmem:[#allocation2 + $0x9] sm:$0xff]
      %v701 = vld [vmem:[#allocation2 + $0x11] sm:$0xff]
      %v702 = vld [vmem:[#allocation2 + $0x19] sm:$0xff]
      %v703 = vld [vmem:[#allocation2 + $0x31] sm:$0xff]
      %v704 = vld [vmem:[#allocation2 + $0x39] sm:$0xff]
      %v705 = vld [vmem:[#allocation2 + $0x41] sm:$0xff]
      %v706 = vld [vmem:[#allocation2 + $0x49] sm:$0xff]
      %v707 = vld [vmem:[#allocation2 + $0x61] sm:$0xff]
      %v708 = vld [vmem:[#allocation2 + $0x69] sm:$0xff]
      %v709 = vld [vmem:[#allocation2 + $0x71] sm:$0xff]
      %v710 = vld [vmem:[#allocation2 + $0x79] sm:$0xff]
      %723 = vrot.lane.b32.xlu0 %v343, 64
      %v724 = vpop.permute.xlu0 %723
      %725 = vrot.lane.b32.xlu0 %v346, 64
      %v726 = vpop.permute.xlu0 %725
      %727 = vrot.lane.b32.xlu0 %v349, 64
      %v728 = vpop.permute.xlu0 %727
      %729 = vrot.lane.b32.xlu0 %v352, 64
      %v730 = vpop.permute.xlu0 %729
      %731 = vrot.lane.b32.xlu0 %v355, 64
      %v732 = vpop.permute.xlu0 %731
      %733 = vrot.lane.b32.xlu0 %v358, 64
      %v734 = vpop.permute.xlu0 %733
      %735 = vrot.lane.b32.xlu0 %v361, 64
      %v736 = vpop.permute.xlu0 %735
      %737 = vrot.lane.b32.xlu0 %v364, 64
      %v738 = vpop.permute.xlu0 %737
      %739 = vrot.lane.b32.xlu0 %v367, 64
      %v740 = vpop.permute.xlu0 %739
      %741 = vrot.lane.b32.xlu0 %v370, 64
      %v742 = vpop.permute.xlu0 %741
      %743 = vrot.lane.b32.xlu0 %v373, 64
      %v744 = vpop.permute.xlu0 %743
      %745 = vrot.lane.b32.xlu0 %v376, 64
      %v746 = vpop.permute.xlu0 %745
      %v759 = vadd.f32 %v699, %v724
      %v760 = vadd.f32 %v700, %v726
      %v761 = vadd.f32 %v701, %v728
      %v762 = vadd.f32 %v702, %v730
      %v763 = vadd.f32 %v703, %v732
      %v764 = vadd.f32 %v704, %v734
      %v765 = vadd.f32 %v705, %v736
      %v766 = vadd.f32 %v706, %v738
      %v767 = vadd.f32 %v707, %v740
      %v768 = vadd.f32 %v708, %v742
      %v769 = vadd.f32 %v709, %v744
      %v770 = vadd.f32 %v710, %v746
      %771 = vst.msk [vmem:[#allocation2 + $0x1] sm:$0xff] %vm643, %v759
      %772 = vst.msk [vmem:[#allocation2 + $0x9] sm:$0xff] %vm643, %v760
      %773 = vst.msk [vmem:[#allocation2 + $0x11] sm:$0xff] %vm643, %v761
      %774 = vst.msk [vmem:[#allocation2 + $0x19] sm:$0xff] %vm643, %v762
      %775 = vst.msk [vmem:[#allocation2 + $0x31] sm:$0xff] %vm643, %v763
      %776 = vst.msk [vmem:[#allocation2 + $0x39] sm:$0xff] %vm643, %v764
      %777 = vst.msk [vmem:[#allocation2 + $0x41] sm:$0xff] %vm643, %v765
      %778 = vst.msk [vmem:[#allocation2 + $0x49] sm:$0xff] %vm643, %v766
      %779 = vst.msk [vmem:[#allocation2 + $0x61] sm:$0xff] %vm643, %v767
      %780 = vst.msk [vmem:[#allocation2 + $0x69] sm:$0xff] %vm643, %v768
      %781 = vst.msk [vmem:[#allocation2 + $0x71] sm:$0xff] %vm643, %v769
      %782 = vst.msk [vmem:[#allocation2 + $0x79] sm:$0xff] %vm643, %v770
      %v783 = vld [vmem:[#allocation2 + $0x2] sm:$0xff]
      %v784 = vld [vmem:[#allocation2 + $0xa] sm:$0xff]
      %v785 = vld [vmem:[#allocation2 + $0x12] sm:$0xff]
      %v786 = vld [vmem:[#allocation2 + $0x1a] sm:$0xff]
      %v787 = vld [vmem:[#allocation2 + $0x32] sm:$0xff]
      %v788 = vld [vmem:[#allocation2 + $0x3a] sm:$0xff]
      %v789 = vld [vmem:[#allocation2 + $0x42] sm:$0xff]
      %v790 = vld [vmem:[#allocation2 + $0x4a] sm:$0xff]
      %v791 = vld [vmem:[#allocation2 + $0x62] sm:$0xff]
      %v792 = vld [vmem:[#allocation2 + $0x6a] sm:$0xff]
      %v793 = vld [vmem:[#allocation2 + $0x72] sm:$0xff]
      %v794 = vld [vmem:[#allocation2 + $0x7a] sm:$0xff]
      %v795 = vadd.f32 %v783, %v396
      %v796 = vadd.f32 %v784, %v399
      %v797 = vadd.f32 %v785, %v402
      %v798 = vadd.f32 %v786, %v405
      %v799 = vadd.f32 %v787, %v408
      %v800 = vadd.f32 %v788, %v411
      %v801 = vadd.f32 %v789, %v414
      %v802 = vadd.f32 %v790, %v417
      %v803 = vadd.f32 %v791, %v420
      %v804 = vadd.f32 %v792, %v423
      %v805 = vadd.f32 %v793, %v426
      %v806 = vadd.f32 %v794, %v429
      %807 = vst.msk [vmem:[#allocation2 + $0x2] sm:$0xff] %vm643, %v795
      %808 = vst.msk [vmem:[#allocation2 + $0xa] sm:$0xff] %vm643, %v796
      %809 = vst.msk [vmem:[#allocation2 + $0x12] sm:$0xff] %vm643, %v797
      %810 = vst.msk [vmem:[#allocation2 + $0x1a] sm:$0xff] %vm643, %v798
      %811 = vst.msk [vmem:[#allocation2 + $0x32] sm:$0xff] %vm643, %v799
      %812 = vst.msk [vmem:[#allocation2 + $0x3a] sm:$0xff] %vm643, %v800
      %813 = vst.msk [vmem:[#allocation2 + $0x42] sm:$0xff] %vm643, %v801
      %814 = vst.msk [vmem:[#allocation2 + $0x4a] sm:$0xff] %vm643, %v802
      %815 = vst.msk [vmem:[#allocation2 + $0x62] sm:$0xff] %vm643, %v803
      %816 = vst.msk [vmem:[#allocation2 + $0x6a] sm:$0xff] %vm643, %v804
      %817 = vst.msk [vmem:[#allocation2 + $0x72] sm:$0xff] %vm643, %v805
      %818 = vst.msk [vmem:[#allocation2 + $0x7a] sm:$0xff] %vm643, %v806
      %v819 = vld [vmem:[#allocation2 + $0x3] sm:$0xff]
      %v820 = vld [vmem:[#allocation2 + $0xb] sm:$0xff]
      %v821 = vld [vmem:[#allocation2 + $0x13] sm:$0xff]
      %v822 = vld [vmem:[#allocation2 + $0x1b] sm:$0xff]
      %v823 = vld [vmem:[#allocation2 + $0x33] sm:$0xff]
      %v824 = vld [vmem:[#allocation2 + $0x3b] sm:$0xff]
      %v825 = vld [vmem:[#allocation2 + $0x43] sm:$0xff]
      %v826 = vld [vmem:[#allocation2 + $0x4b] sm:$0xff]
      %v827 = vld [vmem:[#allocation2 + $0x63] sm:$0xff]
      %v828 = vld [vmem:[#allocation2 + $0x6b] sm:$0xff]
      %v829 = vld [vmem:[#allocation2 + $0x73] sm:$0xff]
      %v830 = vld [vmem:[#allocation2 + $0x7b] sm:$0xff]
      %843 = vrot.lane.b32.xlu0 %v396, 64
      %v844 = vpop.permute.xlu0 %843
      %845 = vrot.lane.b32.xlu0 %v399, 64
      %v846 = vpop.permute.xlu0 %845
      %847 = vrot.lane.b32.xlu0 %v402, 64
      %v848 = vpop.permute.xlu0 %847
      %849 = vrot.lane.b32.xlu0 %v405, 64
      %v850 = vpop.permute.xlu0 %849
      %851 = vrot.lane.b32.xlu0 %v408, 64
      %v852 = vpop.permute.xlu0 %851
      %853 = vrot.lane.b32.xlu0 %v411, 64
      %v854 = vpop.permute.xlu0 %853
      %855 = vrot.lane.b32.xlu0 %v414, 64
      %v856 = vpop.permute.xlu0 %855
      %857 = vrot.lane.b32.xlu0 %v417, 64
      %v858 = vpop.permute.xlu0 %857
      %859 = vrot.lane.b32.xlu0 %v420, 64
      %v860 = vpop.permute.xlu0 %859
      %861 = vrot.lane.b32.xlu0 %v423, 64
      %v862 = vpop.permute.xlu0 %861
      %863 = vrot.lane.b32.xlu0 %v426, 64
      %v864 = vpop.permute.xlu0 %863
      %865 = vrot.lane.b32.xlu0 %v429, 64
      %v866 = vpop.permute.xlu0 %865
      %v879 = vadd.f32 %v819, %v844
      %v880 = vadd.f32 %v820, %v846
      %v881 = vadd.f32 %v821, %v848
      %v882 = vadd.f32 %v822, %v850
      %v883 = vadd.f32 %v823, %v852
      %v884 = vadd.f32 %v824, %v854
      %v885 = vadd.f32 %v825, %v856
      %v886 = vadd.f32 %v826, %v858
      %v887 = vadd.f32 %v827, %v860
      %v888 = vadd.f32 %v828, %v862
      %v889 = vadd.f32 %v829, %v864
      %v890 = vadd.f32 %v830, %v866
      %891 = vst.msk [vmem:[#allocation2 + $0x3] sm:$0xff] %vm643, %v879
      %892 = vst.msk [vmem:[#allocation2 + $0xb] sm:$0xff] %vm643, %v880
      %893 = vst.msk [vmem:[#allocation2 + $0x13] sm:$0xff] %vm643, %v881
      %894 = vst.msk [vmem:[#allocation2 + $0x1b] sm:$0xff] %vm643, %v882
      %895 = vst.msk [vmem:[#allocation2 + $0x33] sm:$0xff] %vm643, %v883
      %896 = vst.msk [vmem:[#allocation2 + $0x3b] sm:$0xff] %vm643, %v884
      %897 = vst.msk [vmem:[#allocation2 + $0x43] sm:$0xff] %vm643, %v885
      %898 = vst.msk [vmem:[#allocation2 + $0x4b] sm:$0xff] %vm643, %v886
      %899 = vst.msk [vmem:[#allocation2 + $0x63] sm:$0xff] %vm643, %v887
      %900 = vst.msk [vmem:[#allocation2 + $0x6b] sm:$0xff] %vm643, %v888
      %901 = vst.msk [vmem:[#allocation2 + $0x73] sm:$0xff] %vm643, %v889
      %902 = vst.msk [vmem:[#allocation2 + $0x7b] sm:$0xff] %vm643, %v890
      %v903 = vld [vmem:[#allocation2 + $0x4] sm:$0xff]
      %v904 = vld [vmem:[#allocation2 + $0xc] sm:$0xff]
      %v905 = vld [vmem:[#allocation2 + $0x14] sm:$0xff]
      %v906 = vld [vmem:[#allocation2 + $0x1c] sm:$0xff]
      %v907 = vld [vmem:[#allocation2 + $0x34] sm:$0xff]
      %v908 = vld [vmem:[#allocation2 + $0x3c] sm:$0xff]
      %v909 = vld [vmem:[#allocation2 + $0x44] sm:$0xff]
      %v910 = vld [vmem:[#allocation2 + $0x4c] sm:$0xff]
      %v911 = vld [vmem:[#allocation2 + $0x64] sm:$0xff]
      %v912 = vld [vmem:[#allocation2 + $0x6c] sm:$0xff]
      %v913 = vld [vmem:[#allocation2 + $0x74] sm:$0xff]
      %v914 = vld [vmem:[#allocation2 + $0x7c] sm:$0xff]
      %v915 = vadd.f32 %v903, %v449
      %v916 = vadd.f32 %v904, %v452
      %v917 = vadd.f32 %v905, %v455
      %v918 = vadd.f32 %v906, %v458
      %v919 = vadd.f32 %v907, %v461
      %v920 = vadd.f32 %v908, %v464
      %v921 = vadd.f32 %v909, %v467
      %v922 = vadd.f32 %v910, %v470
      %v923 = vadd.f32 %v911, %v473
      %v924 = vadd.f32 %v912, %v476
      %v925 = vadd.f32 %v913, %v479
      %v926 = vadd.f32 %v914, %v482
      %927 = vst.msk [vmem:[#allocation2 + $0x4] sm:$0xff] %vm643, %v915
      %928 = vst.msk [vmem:[#allocation2 + $0xc] sm:$0xff] %vm643, %v916
      %929 = vst.msk [vmem:[#allocation2 + $0x14] sm:$0xff] %vm643, %v917
      %930 = vst.msk [vmem:[#allocation2 + $0x1c] sm:$0xff] %vm643, %v918
      %931 = vst.msk [vmem:[#allocation2 + $0x34] sm:$0xff] %vm643, %v919
      %932 = vst.msk [vmem:[#allocation2 + $0x3c] sm:$0xff] %vm643, %v920
      %933 = vst.msk [vmem:[#allocation2 + $0x44] sm:$0xff] %vm643, %v921
      %934 = vst.msk [vmem:[#allocation2 + $0x4c] sm:$0xff] %vm643, %v922
      %935 = vst.msk [vmem:[#allocation2 + $0x64] sm:$0xff] %vm643, %v923
      %936 = vst.msk [vmem:[#allocation2 + $0x6c] sm:$0xff] %vm643, %v924
      %937 = vst.msk [vmem:[#allocation2 + $0x74] sm:$0xff] %vm643, %v925
      %938 = vst.msk [vmem:[#allocation2 + $0x7c] sm:$0xff] %vm643, %v926
      %v939 = vld [vmem:[#allocation2 + $0x5] sm:$0xff]
      %v940 = vld [vmem:[#allocation2 + $0xd] sm:$0xff]
      %v941 = vld [vmem:[#allocation2 + $0x15] sm:$0xff]
      %v942 = vld [vmem:[#allocation2 + $0x1d] sm:$0xff]
      %v943 = vld [vmem:[#allocation2 + $0x35] sm:$0xff]
      %v944 = vld [vmem:[#allocation2 + $0x3d] sm:$0xff]
      %v945 = vld [vmem:[#allocation2 + $0x45] sm:$0xff]
      %v946 = vld [vmem:[#allocation2 + $0x4d] sm:$0xff]
      %v947 = vld [vmem:[#allocation2 + $0x65] sm:$0xff]
      %v948 = vld [vmem:[#allocation2 + $0x6d] sm:$0xff]
      %v949 = vld [vmem:[#allocation2 + $0x75] sm:$0xff]
      %v950 = vld [vmem:[#allocation2 + $0x7d] sm:$0xff]
      %963 = vrot.lane.b32.xlu0 %v449, 64
      %v964 = vpop.permute.xlu0 %963
      %965 = vrot.lane.b32.xlu0 %v452, 64
      %v966 = vpop.permute.xlu0 %965
      %967 = vrot.lane.b32.xlu0 %v455, 64
      %v968 = vpop.permute.xlu0 %967
      %969 = vrot.lane.b32.xlu0 %v458, 64
      %v970 = vpop.permute.xlu0 %969
      %971 = vrot.lane.b32.xlu0 %v461, 64
      %v972 = vpop.permute.xlu0 %971
      %973 = vrot.lane.b32.xlu0 %v464, 64
      %v974 = vpop.permute.xlu0 %973
      %975 = vrot.lane.b32.xlu0 %v467, 64
      %v976 = vpop.permute.xlu0 %975
      %977 = vrot.lane.b32.xlu0 %v470, 64
      %v978 = vpop.permute.xlu0 %977
      %979 = vrot.lane.b32.xlu0 %v473, 64
      %v980 = vpop.permute.xlu0 %979
      %981 = vrot.lane.b32.xlu0 %v476, 64
      %v982 = vpop.permute.xlu0 %981
      %983 = vrot.lane.b32.xlu0 %v479, 64
      %v984 = vpop.permute.xlu0 %983
      %985 = vrot.lane.b32.xlu0 %v482, 64
      %v986 = vpop.permute.xlu0 %985
      %v999 = vadd.f32 %v939, %v964
      %v1000 = vadd.f32 %v940, %v966
      %v1001 = vadd.f32 %v941, %v968
      %v1002 = vadd.f32 %v942, %v970
      %v1003 = vadd.f32 %v943, %v972
      %v1004 = vadd.f32 %v944, %v974
      %v1005 = vadd.f32 %v945, %v976
      %v1006 = vadd.f32 %v946, %v978
      %v1007 = vadd.f32 %v947, %v980
      %v1008 = vadd.f32 %v948, %v982
      %v1009 = vadd.f32 %v949, %v984
      %v1010 = vadd.f32 %v950, %v986
      %1011 = vst.msk [vmem:[#allocation2 + $0x5] sm:$0xff] %vm643, %v999
      %1012 = vst.msk [vmem:[#allocation2 + $0xd] sm:$0xff] %vm643, %v1000
      %1013 = vst.msk [vmem:[#allocation2 + $0x15] sm:$0xff] %vm643, %v1001
      %1014 = vst.msk [vmem:[#allocation2 + $0x1d] sm:$0xff] %vm643, %v1002
      %1015 = vst.msk [vmem:[#allocation2 + $0x35] sm:$0xff] %vm643, %v1003
      %1016 = vst.msk [vmem:[#allocation2 + $0x3d] sm:$0xff] %vm643, %v1004
      %1017 = vst.msk [vmem:[#allocation2 + $0x45] sm:$0xff] %vm643, %v1005
      %1018 = vst.msk [vmem:[#allocation2 + $0x4d] sm:$0xff] %vm643, %v1006
      %1019 = vst.msk [vmem:[#allocation2 + $0x65] sm:$0xff] %vm643, %v1007
      %1020 = vst.msk [vmem:[#allocation2 + $0x6d] sm:$0xff] %vm643, %v1008
      %1021 = vst.msk [vmem:[#allocation2 + $0x75] sm:$0xff] %vm643, %v1009
      %1022 = vst.msk [vmem:[#allocation2 + $0x7d] sm:$0xff] %vm643, %v1010
      %v1023 = vld [vmem:[#allocation2 + $0x6] sm:$0xff]
      %v1024 = vld [vmem:[#allocation2 + $0xe] sm:$0xff]
      %v1025 = vld [vmem:[#allocation2 + $0x16] sm:$0xff]
      %v1026 = vld [vmem:[#allocation2 + $0x1e] sm:$0xff]
      %v1027 = vld [vmem:[#allocation2 + $0x36] sm:$0xff]
      %v1028 = vld [vmem:[#allocation2 + $0x3e] sm:$0xff]
      %v1029 = vld [vmem:[#allocation2 + $0x46] sm:$0xff]
      %v1030 = vld [vmem:[#allocation2 + $0x4e] sm:$0xff]
      %v1031 = vld [vmem:[#allocation2 + $0x66] sm:$0xff]
      %v1032 = vld [vmem:[#allocation2 + $0x6e] sm:$0xff]
      %v1033 = vld [vmem:[#allocation2 + $0x76] sm:$0xff]
      %v1034 = vld [vmem:[#allocation2 + $0x7e] sm:$0xff]
      %v1035 = vadd.f32 %v1023, %v502
      %v1036 = vadd.f32 %v1024, %v505
      %v1037 = vadd.f32 %v1025, %v508
      %v1038 = vadd.f32 %v1026, %v511
      %v1039 = vadd.f32 %v1027, %v514
      %v1040 = vadd.f32 %v1028, %v517
      %v1041 = vadd.f32 %v1029, %v520
      %v1042 = vadd.f32 %v1030, %v523
      %v1043 = vadd.f32 %v1031, %v526
      %v1044 = vadd.f32 %v1032, %v529
      %v1045 = vadd.f32 %v1033, %v532
      %v1046 = vadd.f32 %v1034, %v535
      %1047 = vst.msk [vmem:[#allocation2 + $0x6] sm:$0xff] %vm643, %v1035
      %1048 = vst.msk [vmem:[#allocation2 + $0xe] sm:$0xff] %vm643, %v1036
      %1049 = vst.msk [vmem:[#allocation2 + $0x16] sm:$0xff] %vm643, %v1037
      %1050 = vst.msk [vmem:[#allocation2 + $0x1e] sm:$0xff] %vm643, %v1038
      %1051 = vst.msk [vmem:[#allocation2 + $0x36] sm:$0xff] %vm643, %v1039
      %1052 = vst.msk [vmem:[#allocation2 + $0x3e] sm:$0xff] %vm643, %v1040
      %1053 = vst.msk [vmem:[#allocation2 + $0x46] sm:$0xff] %vm643, %v1041
      %1054 = vst.msk [vmem:[#allocation2 + $0x4e] sm:$0xff] %vm643, %v1042
      %1055 = vst.msk [vmem:[#allocation2 + $0x66] sm:$0xff] %vm643, %v1043
      %1056 = vst.msk [vmem:[#allocation2 + $0x6e] sm:$0xff] %vm643, %v1044
      %1057 = vst.msk [vmem:[#allocation2 + $0x76] sm:$0xff] %vm643, %v1045
      %1058 = vst.msk [vmem:[#allocation2 + $0x7e] sm:$0xff] %vm643, %v1046
      %v1059 = vld [vmem:[#allocation2 + $0x7] sm:$0xff]
      %v1060 = vld [vmem:[#allocation2 + $0xf] sm:$0xff]
      %v1061 = vld [vmem:[#allocation2 + $0x17] sm:$0xff]
      %v1062 = vld [vmem:[#allocation2 + $0x1f] sm:$0xff]
      %v1063 = vld [vmem:[#allocation2 + $0x37] sm:$0xff]
      %v1064 = vld [vmem:[#allocation2 + $0x3f] sm:$0xff]
      %v1065 = vld [vmem:[#allocation2 + $0x47] sm:$0xff]
      %v1066 = vld [vmem:[#allocation2 + $0x4f] sm:$0xff]
      %v1067 = vld [vmem:[#allocation2 + $0x67] sm:$0xff]
      %v1068 = vld [vmem:[#allocation2 + $0x6f] sm:$0xff]
      %v1069 = vld [vmem:[#allocation2 + $0x77] sm:$0xff]
      %v1070 = vld [vmem:[#allocation2 + $0x7f] sm:$0xff]
      %1083 = vrot.lane.b32.xlu0 %v502, 64
      %v1084 = vpop.permute.xlu0 %1083
      %1085 = vrot.lane.b32.xlu0 %v505, 64
      %v1086 = vpop.permute.xlu0 %1085
      %1087 = vrot.lane.b32.xlu0 %v508, 64
      %v1088 = vpop.permute.xlu0 %1087
      %1089 = vrot.lane.b32.xlu0 %v511, 64
      %v1090 = vpop.permute.xlu0 %1089
      %1091 = vrot.lane.b32.xlu0 %v514, 64
      %v1092 = vpop.permute.xlu0 %1091
      %1093 = vrot.lane.b32.xlu0 %v517, 64
      %v1094 = vpop.permute.xlu0 %1093
      %1095 = vrot.lane.b32.xlu0 %v520, 64
      %v1096 = vpop.permute.xlu0 %1095
      %1097 = vrot.lane.b32.xlu0 %v523, 64
      %v1098 = vpop.permute.xlu0 %1097
      %1099 = vrot.lane.b32.xlu0 %v526, 64
      %v1100 = vpop.permute.xlu0 %1099
      %1101 = vrot.lane.b32.xlu0 %v529, 64
      %v1102 = vpop.permute.xlu0 %1101
      %1103 = vrot.lane.b32.xlu0 %v532, 64
      %v1104 = vpop.permute.xlu0 %1103
      %1105 = vrot.lane.b32.xlu0 %v535, 64
      %v1106 = vpop.permute.xlu0 %1105
      %v1119 = vadd.f32 %v1059, %v1084
      %v1120 = vadd.f32 %v1060, %v1086
      %v1121 = vadd.f32 %v1061, %v1088
      %v1122 = vadd.f32 %v1062, %v1090
      %v1123 = vadd.f32 %v1063, %v1092
      %v1124 = vadd.f32 %v1064, %v1094
      %v1125 = vadd.f32 %v1065, %v1096
      %v1126 = vadd.f32 %v1066, %v1098
      %v1127 = vadd.f32 %v1067, %v1100
      %v1128 = vadd.f32 %v1068, %v1102
      %v1129 = vadd.f32 %v1069, %v1104
      %v1130 = vadd.f32 %v1070, %v1106
      %1131 = vst.msk [vmem:[#allocation2 + $0x7] sm:$0xff] %vm643, %v1119
      %1132 = vst.msk [vmem:[#allocation2 + $0xf] sm:$0xff] %vm643, %v1120
      %1133 = vst.msk [vmem:[#allocation2 + $0x17] sm:$0xff] %vm643, %v1121
      %1134 = vst.msk [vmem:[#allocation2 + $0x1f] sm:$0xff] %vm643, %v1122
      %1135 = vst.msk [vmem:[#allocation2 + $0x37] sm:$0xff] %vm643, %v1123
      %1136 = vst.msk [vmem:[#allocation2 + $0x3f] sm:$0xff] %vm643, %v1124
      %1137 = vst.msk [vmem:[#allocation2 + $0x47] sm:$0xff] %vm643, %v1125
      %1138 = vst.msk [vmem:[#allocation2 + $0x4f] sm:$0xff] %vm643, %v1126
      %1139 = vst.msk [vmem:[#allocation2 + $0x67] sm:$0xff] %vm643, %v1127
      %1140 = vst.msk [vmem:[#allocation2 + $0x6f] sm:$0xff] %vm643, %v1128
      %1141 = vst.msk [vmem:[#allocation2 + $0x77] sm:$0xff] %vm643, %v1129
      %1142 = vst.msk [vmem:[#allocation2 + $0x7f] sm:$0xff] %vm643, %v1130
      %v1143 = vld [vmem:[#allocation2 + $0x8] sm:$0xff]
      %v1144 = vld [vmem:[#allocation2 + $0x10] sm:$0xff]
      %v1145 = vld [vmem:[#allocation2 + $0x18] sm:$0xff]
      %v1146 = vld [vmem:[#allocation2 + $0x20] sm:$0xff]
      %v1147 = vld [vmem:[#allocation2 + $0x38] sm:$0xff]
      %v1148 = vld [vmem:[#allocation2 + $0x40] sm:$0xff]
      %v1149 = vld [vmem:[#allocation2 + $0x48] sm:$0xff]
      %v1150 = vld [vmem:[#allocation2 + $0x50] sm:$0xff]
      %v1151 = vld [vmem:[#allocation2 + $0x68] sm:$0xff]
      %v1152 = vld [vmem:[#allocation2 + $0x70] sm:$0xff]
      %v1153 = vld [vmem:[#allocation2 + $0x78] sm:$0xff]
      %v1154 = vld [vmem:[#allocation2 + $0x80] sm:$0xff]
      %v1155 = vadd.f32 %v1143, %v555
      %v1156 = vadd.f32 %v1144, %v558
      %v1157 = vadd.f32 %v1145, %v561
      %v1158 = vadd.f32 %v1146, %v564
      %v1159 = vadd.f32 %v1147, %v567
      %v1160 = vadd.f32 %v1148, %v570
      %v1161 = vadd.f32 %v1149, %v573
      %v1162 = vadd.f32 %v1150, %v576
      %v1163 = vadd.f32 %v1151, %v579
      %v1164 = vadd.f32 %v1152, %v582
      %v1165 = vadd.f32 %v1153, %v585
      %v1166 = vadd.f32 %v1154, %v588
      %1167 = vst.msk [vmem:[#allocation2 + $0x8] sm:$0xff] %vm643, %v1155
      %1168 = vst.msk [vmem:[#allocation2 + $0x10] sm:$0xff] %vm643, %v1156
      %1169 = vst.msk [vmem:[#allocation2 + $0x18] sm:$0xff] %vm643, %v1157
      %1170 = vst.msk [vmem:[#allocation2 + $0x20] sm:$0xff] %vm643, %v1158
      %1171 = vst.msk [vmem:[#allocation2 + $0x38] sm:$0xff] %vm643, %v1159
      %1172 = vst.msk [vmem:[#allocation2 + $0x40] sm:$0xff] %vm643, %v1160
      %1173 = vst.msk [vmem:[#allocation2 + $0x48] sm:$0xff] %vm643, %v1161
      %1174 = vst.msk [vmem:[#allocation2 + $0x50] sm:$0xff] %vm643, %v1162
      %1175 = vst.msk [vmem:[#allocation2 + $0x68] sm:$0xff] %vm643, %v1163
      %1176 = vst.msk [vmem:[#allocation2 + $0x70] sm:$0xff] %vm643, %v1164
      %1177 = vst.msk [vmem:[#allocation2 + $0x78] sm:$0xff] %vm643, %v1165
      %1178 = vst.msk [vmem:[#allocation2 + $0x80] sm:$0xff] %vm643, %v1166
      %v1179 = vld [vmem:[#allocation2 + $0x9] sm:$0xff]
      %v1180 = vld [vmem:[#allocation2 + $0x11] sm:$0xff]
      %v1181 = vld [vmem:[#allocation2 + $0x19] sm:$0xff]
      %v1182 = vld [vmem:[#allocation2 + $0x21] sm:$0xff]
      %v1183 = vld [vmem:[#allocation2 + $0x39] sm:$0xff]
      %v1184 = vld [vmem:[#allocation2 + $0x41] sm:$0xff]
      %v1185 = vld [vmem:[#allocation2 + $0x49] sm:$0xff]
      %v1186 = vld [vmem:[#allocation2 + $0x51] sm:$0xff]
      %v1187 = vld [vmem:[#allocation2 + $0x69] sm:$0xff]
      %v1188 = vld [vmem:[#allocation2 + $0x71] sm:$0xff]
      %v1189 = vld [vmem:[#allocation2 + $0x79] sm:$0xff]
      %v1190 = vld [vmem:[#allocation2 + $0x81] sm:$0xff]
      %1203 = vrot.lane.b32.xlu0 %v555, 64
      %v1204 = vpop.permute.xlu0 %1203
      %1205 = vrot.lane.b32.xlu0 %v558, 64
      %v1206 = vpop.permute.xlu0 %1205
      %1207 = vrot.lane.b32.xlu0 %v561, 64
      %v1208 = vpop.permute.xlu0 %1207
      %1209 = vrot.lane.b32.xlu0 %v564, 64
      %v1210 = vpop.permute.xlu0 %1209
      %1211 = vrot.lane.b32.xlu0 %v567, 64
      %v1212 = vpop.permute.xlu0 %1211
      %1213 = vrot.lane.b32.xlu0 %v570, 64
      %v1214 = vpop.permute.xlu0 %1213
      %1215 = vrot.lane.b32.xlu0 %v573, 64
      %v1216 = vpop.permute.xlu0 %1215
      %1217 = vrot.lane.b32.xlu0 %v576, 64
      %v1218 = vpop.permute.xlu0 %1217
      %1219 = vrot.lane.b32.xlu0 %v579, 64
      %v1220 = vpop.permute.xlu0 %1219
      %1221 = vrot.lane.b32.xlu0 %v582, 64
      %v1222 = vpop.permute.xlu0 %1221
      %1223 = vrot.lane.b32.xlu0 %v585, 64
      %v1224 = vpop.permute.xlu0 %1223
      %1225 = vrot.lane.b32.xlu0 %v588, 64
      %v1226 = vpop.permute.xlu0 %1225
      %v1239 = vadd.f32 %v1179, %v1204
      %v1240 = vadd.f32 %v1180, %v1206
      %v1241 = vadd.f32 %v1181, %v1208
      %v1242 = vadd.f32 %v1182, %v1210
      %v1243 = vadd.f32 %v1183, %v1212
      %v1244 = vadd.f32 %v1184, %v1214
      %v1245 = vadd.f32 %v1185, %v1216
      %v1246 = vadd.f32 %v1186, %v1218
      %v1247 = vadd.f32 %v1187, %v1220
      %v1248 = vadd.f32 %v1188, %v1222
      %v1249 = vadd.f32 %v1189, %v1224
      %v1250 = vadd.f32 %v1190, %v1226
      %1251 = vst.msk [vmem:[#allocation2 + $0x9] sm:$0xff] %vm643, %v1239
      %1252 = vst.msk [vmem:[#allocation2 + $0x11] sm:$0xff] %vm643, %v1240
      %1253 = vst.msk [vmem:[#allocation2 + $0x19] sm:$0xff] %vm643, %v1241
      %1254 = vst.msk [vmem:[#allocation2 + $0x21] sm:$0xff] %vm643, %v1242
      %1255 = vst.msk [vmem:[#allocation2 + $0x39] sm:$0xff] %vm643, %v1243
      %1256 = vst.msk [vmem:[#allocation2 + $0x41] sm:$0xff] %vm643, %v1244
      %1257 = vst.msk [vmem:[#allocation2 + $0x49] sm:$0xff] %vm643, %v1245
      %1258 = vst.msk [vmem:[#allocation2 + $0x51] sm:$0xff] %vm643, %v1246
      %1259 = vst.msk [vmem:[#allocation2 + $0x69] sm:$0xff] %vm643, %v1247
      %1260 = vst.msk [vmem:[#allocation2 + $0x71] sm:$0xff] %vm643, %v1248
      %1261 = vst.msk [vmem:[#allocation2 + $0x79] sm:$0xff] %vm643, %v1249
      %1262 = vst.msk [vmem:[#allocation2 + $0x81] sm:$0xff] %vm643, %v1250
      %v1263 = vld [vmem:[#allocation2 + $0xa] sm:$0xff]
      %v1264 = vld [vmem:[#allocation2 + $0x12] sm:$0xff]
      %v1265 = vld [vmem:[#allocation2 + $0x1a] sm:$0xff]
      %v1266 = vld [vmem:[#allocation2 + $0x22] sm:$0xff]
      %v1267 = vld [vmem:[#allocation2 + $0x3a] sm:$0xff]
      %v1268 = vld [vmem:[#allocation2 + $0x42] sm:$0xff]
      %v1269 = vld [vmem:[#allocation2 + $0x4a] sm:$0xff]
      %v1270 = vld [vmem:[#allocation2 + $0x52] sm:$0xff]
      %v1271 = vld [vmem:[#allocation2 + $0x6a] sm:$0xff]
      %v1272 = vld [vmem:[#allocation2 + $0x72] sm:$0xff]
      %v1273 = vld [vmem:[#allocation2 + $0x7a] sm:$0xff]
      %v1274 = vld [vmem:[#allocation2 + $0x82] sm:$0xff]
      %v1275 = vadd.f32 %v1263, %v608
      %v1276 = vadd.f32 %v1264, %v611
      %v1277 = vadd.f32 %v1265, %v614
      %v1278 = vadd.f32 %v1266, %v617
      %v1279 = vadd.f32 %v1267, %v620
      %v1280 = vadd.f32 %v1268, %v623
      %v1281 = vadd.f32 %v1269, %v626
      %v1282 = vadd.f32 %v1270, %v629
      %v1283 = vadd.f32 %v1271, %v632
      %v1284 = vadd.f32 %v1272, %v635
      %v1285 = vadd.f32 %v1273, %v638
      %v1286 = vadd.f32 %v1274, %v641
      %1287 = vst.msk [vmem:[#allocation2 + $0xa] sm:$0xff] %vm643, %v1275
      %1288 = vst.msk [vmem:[#allocation2 + $0x12] sm:$0xff] %vm643, %v1276
      %1289 = vst.msk [vmem:[#allocation2 + $0x1a] sm:$0xff] %vm643, %v1277
      %1290 = vst.msk [vmem:[#allocation2 + $0x22] sm:$0xff] %vm643, %v1278
      %1291 = vst.msk [vmem:[#allocation2 + $0x3a] sm:$0xff] %vm643, %v1279
      %1292 = vst.msk [vmem:[#allocation2 + $0x42] sm:$0xff] %vm643, %v1280
      %1293 = vst.msk [vmem:[#allocation2 + $0x4a] sm:$0xff] %vm643, %v1281
      %1294 = vst.msk [vmem:[#allocation2 + $0x52] sm:$0xff] %vm643, %v1282
      %1295 = vst.msk [vmem:[#allocation2 + $0x6a] sm:$0xff] %vm643, %v1283
      %1296 = vst.msk [vmem:[#allocation2 + $0x72] sm:$0xff] %vm643, %v1284
      %1297 = vst.msk [vmem:[#allocation2 + $0x7a] sm:$0xff] %vm643, %v1285
      %1298 = vst.msk [vmem:[#allocation2 + $0x82] sm:$0xff] %vm643, %v1286
      %1299 = vst.msk [vmem:[#allocation2] sm:$0xff] %vm643, 0.0
      %1300 = vst.msk [vmem:[#allocation2 + $0x8] sm:$0xff] %vm643, 0.0
      %1301 = vst.msk [vmem:[#allocation2 + $0x10] sm:$0xff] %vm643, 0.0
      %1302 = vst.msk [vmem:[#allocation2 + $0x18] sm:$0xff] %vm643, 0.0
      %1303 = vst.msk [vmem:[#allocation2 + $0x20] sm:$0xff] %vm643, 0.0
      %1304 = vst.msk [vmem:[#allocation2 + $0x28] sm:$0x3] %vm649, 0.0
      %v1305 = vld [vmem:[#allocation2] sm:$0xff]
      %v1306 = vld [vmem:[#allocation2 + $0x8] sm:$0xff]
      %v1307 = vld [vmem:[#allocation2 + $0x10] sm:$0xff]
      %v1308 = vld [vmem:[#allocation2 + $0x18] sm:$0xff]
      %v1309 = vld [vmem:[#allocation2 + $0x20] sm:$0xff]
      %v1310 = vld [vmem:[#allocation2 + $0x28] sm:$0x3]
      %v1311 = vld [vmem:[#allocation2 + $0x30] sm:$0xff]
      %v1312 = vld [vmem:[#allocation2 + $0x38] sm:$0xff]
      %v1313 = vld [vmem:[#allocation2 + $0x40] sm:$0xff]
      %v1314 = vld [vmem:[#allocation2 + $0x48] sm:$0xff]
      %v1315 = vld [vmem:[#allocation2 + $0x50] sm:$0xff]
      %v1316 = vld [vmem:[#allocation2 + $0x58] sm:$0x3]
      %v1317 = vld [vmem:[#allocation2 + $0x60] sm:$0xff]
      %v1318 = vld [vmem:[#allocation2 + $0x68] sm:$0xff]
      %v1319 = vld [vmem:[#allocation2 + $0x70] sm:$0xff]
      %v1320 = vld [vmem:[#allocation2 + $0x78] sm:$0xff]
      %v1321 = vld [vmem:[#allocation2 + $0x80] sm:$0xff]
      %v1322 = vld [vmem:[#allocation2 + $0x88] sm:$0x3]
      %v1324 = vperm.slane %v225, 0
      %v1326 = vadd.f32 %v1305, %v1324
      %v1327 = vadd.f32 %v1306, %v1324
      %v1328 = vadd.f32 %v1307, %v1324
      %v1329 = vadd.f32 %v1308, %v1324
      %v1330 = vadd.f32 %v1309, %v1324
      %v1331 = vadd.f32 %v1310, %v1324
      %v1332 = vadd.f32 %v1311, %v1324
      %v1333 = vadd.f32 %v1312, %v1324
      %v1334 = vadd.f32 %v1313, %v1324
      %v1335 = vadd.f32 %v1314, %v1324
      %v1336 = vadd.f32 %v1315, %v1324
      %v1337 = vadd.f32 %v1316, %v1324
      %v1338 = vadd.f32 %v1317, %v1324
      %v1339 = vadd.f32 %v1318, %v1324
      %v1340 = vadd.f32 %v1319, %v1324
      %v1341 = vadd.f32 %v1320, %v1324
      %v1342 = vadd.f32 %v1321, %v1324
      %v1343 = vadd.f32 %v1322, %v1324
      %v1344 = vld [vmem:[%s2] sm:$0xff]
      %v1345 = vld [vmem:[%s2 + $0x8] sm:$0xff]
      %v1346 = vld [vmem:[%s2 + $0x10] sm:$0xff]
      %v1347 = vld [vmem:[%s2 + $0x18] sm:$0xff]
      %v1348 = vld [vmem:[%s2 + $0x20] sm:$0xff]
      %v1349 = vld [vmem:[%s2 + $0x28] sm:$0xff]
      %v1350 = vld [vmem:[%s2 + $0x30] sm:$0xff]
      %v1351 = vld [vmem:[%s2 + $0x38] sm:$0xff]
      %v1352 = vld [vmem:[%s2 + $0x40] sm:$0xff]
      %v1353 = vld [vmem:[%s2 + $0x48] sm:$0xff]
      %v1354 = vld [vmem:[%s2 + $0x50] sm:$0xff]
      %v1355 = vld [vmem:[%s2 + $0x58] sm:$0xff]
      %v1356 = vld [vmem:[%s2 + $0x60] sm:$0xff]
      %v1357 = vld [vmem:[%s2 + $0x68] sm:$0xff]
      %v1358 = vld [vmem:[%s2 + $0x70] sm:$0xff]
      %v1359 = vld [vmem:[%s2 + $0x78] sm:$0xff]
      %v1360 = vld [vmem:[%s2 + $0x80] sm:$0xff]
      %v1361 = vld [vmem:[%s2 + $0x88] sm:$0xff]
      %v1362 = vld [vmem:[%s2 + $0x90] sm:$0xff]
      %v1363 = vld [vmem:[%s2 + $0x98] sm:$0xff]
      %v1364 = vld [vmem:[%s2 + $0xa0] sm:$0xff]
      %v1365 = vld [vmem:[%s2 + $0xa8] sm:$0xff]
      %v1366 = vld [vmem:[%s2 + $0xb0] sm:$0xff]
      %v1367 = vld [vmem:[%s2 + $0xb8] sm:$0xff]
      %v1368 = vld [vmem:[%s2 + $0xc0] sm:$0xff]
      %v1369 = vld [vmem:[%s2 + $0xc8] sm:$0xff]
      %v1370 = vld [vmem:[%s2 + $0xd0] sm:$0xff]
      %v1371 = vld [vmem:[%s2 + $0xd8] sm:$0xff]
      %v1372 = vld [vmem:[%s2 + $0xe0] sm:$0xff]
      %v1373 = vld [vmem:[%s2 + $0xe8] sm:$0xff]
      %v1374 = vld [vmem:[%s2 + $0xf0] sm:$0xff]
      %v1375 = vld [vmem:[%s2 + $0xf8] sm:$0xff]
      %v1376 = vld [vmem:[%s2 + $0x100] sm:$0xff]
      %v1377 = vld [vmem:[%s2 + $0x108] sm:$0xff]
      %v1378 = vld [vmem:[%s2 + $0x110] sm:$0xff]
      %v1379 = vld [vmem:[%s2 + $0x118] sm:$0xff]
      %v1380 = vld [vmem:[%s2 + $0x120] sm:$0xff]
      %v1381 = vld [vmem:[%s2 + $0x128] sm:$0xff]
      %v1382 = vld [vmem:[%s2 + $0x130] sm:$0xff]
      %v1383 = vld [vmem:[%s2 + $0x138] sm:$0xff]
      %v1402 = vrot.slane %v1326, 2
      %v1403 = vrot.slane %v1326, 4
      %v1404 = vrot.slane %v1326, 6
      %v1405 = vrot.slane %v1327, 2
      %v1406 = vrot.slane %v1327, 4
      %v1407 = vrot.slane %v1327, 6
      %v1408 = vrot.slane %v1328, 2
      %v1409 = vrot.slane %v1328, 4
      %v1410 = vrot.slane %v1328, 6
      %v1411 = vrot.slane %v1329, 2
      %v1412 = vrot.slane %v1329, 4
      %v1413 = vrot.slane %v1329, 6
      %v1414 = vrot.slane %v1330, 2
      %v1415 = vrot.slane %v1330, 4
      %v1416 = vrot.slane %v1330, 6
      %v1417 = vrot.slane %v1332, 2
      %v1418 = vrot.slane %v1332, 4
      %v1419 = vrot.slane %v1332, 6
      %v1420 = vrot.slane %v1333, 2
      %v1421 = vrot.slane %v1333, 4
      %v1422 = vrot.slane %v1333, 6
      %v1423 = vrot.slane %v1334, 2
      %v1424 = vrot.slane %v1334, 4
      %v1425 = vrot.slane %v1334, 6
      %v1426 = vrot.slane %v1335, 2
      %v1427 = vrot.slane %v1335, 4
      %v1428 = vrot.slane %v1335, 6
      %v1429 = vrot.slane %v1336, 2
      %v1430 = vrot.slane %v1336, 4
      %v1431 = vrot.slane %v1336, 6
      %v1432 = vrot.slane %v1338, 2
      %v1433 = vrot.slane %v1338, 4
      %v1434 = vrot.slane %v1338, 6
      %v1435 = vrot.slane %v1339, 2
      %v1436 = vrot.slane %v1339, 4
      %v1437 = vrot.slane %v1339, 6
      %v1438 = vrot.slane %v1340, 2
      %v1439 = vrot.slane %v1340, 4
      %v1440 = vrot.slane %v1340, 6
      %v1441 = vrot.slane %v1341, 2
      %v1442 = vrot.slane %v1341, 4
      %v1443 = vrot.slane %v1341, 6
      %v1444 = vrot.slane %v1342, 2
      %v1445 = vrot.slane %v1342, 4
      %v1446 = vrot.slane %v1342, 6
      %1447 = vst [vmem:[#allocation1] ss:$4 sm:$0xff] %v1326
      %s1448 = scalar_lea.vmem [#allocation1], 1
      %1449 = vst [vmem:[%s1448] ss:$4 sm:$0xff] %v1402
      %s1450 = scalar_lea.vmem [#allocation1], 2
      %1451 = vst [vmem:[%s1450] ss:$4 sm:$0xff] %v1403
      %s1452 = scalar_lea.vmem [#allocation1], 3
      %1453 = vst [vmem:[%s1452] ss:$4 sm:$0xff] %v1404
      %s1454 = scalar_lea.vmem [#allocation1], 32
      %1455 = vst [vmem:[%s1454] ss:$4 sm:$0xff] %v1327
      %s1456 = scalar_lea.vmem [#allocation1], 33
      %1457 = vst [vmem:[%s1456] ss:$4 sm:$0xff] %v1405
      %s1458 = scalar_lea.vmem [#allocation1], 34
      %1459 = vst [vmem:[%s1458] ss:$4 sm:$0xff] %v1406
      %s1460 = scalar_lea.vmem [#allocation1], 35
      %1461 = vst [vmem:[%s1460] ss:$4 sm:$0xff] %v1407
      %v1462 = vld.sshfl [vmem:[#allocation1] sm:$0xff pattern:$0x73625140]
      %v1463 = vld.sshfl [vmem:[#allocation1 + $0x20] sm:$0xff pattern:$0x73625140]
      %1464 = vst [vmem:[#allocation1] ss:$4 sm:$0xff] %v1328
      %1465 = vst [vmem:[%s1448] ss:$4 sm:$0xff] %v1408
      %1466 = vst [vmem:[%s1450] ss:$4 sm:$0xff] %v1409
      %1467 = vst [vmem:[%s1452] ss:$4 sm:$0xff] %v1410
      %1468 = vst [vmem:[%s1454] ss:$4 sm:$0xff] %v1329
      %1469 = vst [vmem:[%s1456] ss:$4 sm:$0xff] %v1411
      %1470 = vst [vmem:[%s1458] ss:$4 sm:$0xff] %v1412
      %1471 = vst [vmem:[%s1460] ss:$4 sm:$0xff] %v1413
      %v1472 = vld.sshfl [vmem:[#allocation1] sm:$0xff pattern:$0x73625140]
      %v1473 = vld.sshfl [vmem:[#allocation1 + $0x20] sm:$0xff pattern:$0x73625140]
      %1474 = vst [vmem:[#allocation1] ss:$4 sm:$0xff] %v1330
      %1475 = vst [vmem:[%s1448] ss:$4 sm:$0xff] %v1414
      %1476 = vst [vmem:[%s1450] ss:$4 sm:$0xff] %v1415
      %1477 = vst [vmem:[%s1452] ss:$4 sm:$0xff] %v1416
      %1478 = vst [vmem:[%s1454] ss:$4 sm:$0xff] %v1331
      %1479 = vst [vmem:[%s1456] ss:$4 sm:$0xff] %v1332
      %1480 = vst [vmem:[%s1458] ss:$4 sm:$0xff] %v1417
      %1481 = vst [vmem:[%s1460] ss:$4 sm:$0xff] %v1418
      %v1482 = vld.sshfl [vmem:[#allocation1] sm:$0xff pattern:$0x73625140]
      %v1483 = vld.sshfl [vmem:[#allocation1 + $0x20] sm:$0xff pattern:$0x73625140]
      %1484 = vst [vmem:[#allocation1] ss:$4 sm:$0xff] %v1419
      %1485 = vst [vmem:[%s1448] ss:$4 sm:$0xff] %v1333
      %1486 = vst [vmem:[%s1450] ss:$4 sm:$0xff] %v1420
      %1487 = vst [vmem:[%s1452] ss:$4 sm:$0xff] %v1421
      %1488 = vst [vmem:[%s1454] ss:$4 sm:$0xff] %v1422
      %1489 = vst [vmem:[%s1456] ss:$4 sm:$0xff] %v1334
      %1490 = vst [vmem:[%s1458] ss:$4 sm:$0xff] %v1423
      %1491 = vst [vmem:[%s1460] ss:$4 sm:$0xff] %v1424
      %v1492 = vld.sshfl [vmem:[#allocation1] sm:$0xff pattern:$0x73625140]
      %v1493 = vld.sshfl [vmem:[#allocation1 + $0x20] sm:$0xff pattern:$0x73625140]
      %1494 = vst [vmem:[#allocation1] ss:$4 sm:$0xff] %v1425
      %1495 = vst [vmem:[%s1448] ss:$4 sm:$0xff] %v1335
      %1496 = vst [vmem:[%s1450] ss:$4 sm:$0xff] %v1426
      %1497 = vst [vmem:[%s1452] ss:$4 sm:$0xff] %v1427
      %1498 = vst [vmem:[%s1454] ss:$4 sm:$0xff] %v1428
      %1499 = vst [vmem:[%s1456] ss:$4 sm:$0xff] %v1336
      %1500 = vst [vmem:[%s1458] ss:$4 sm:$0xff] %v1429
      %1501 = vst [vmem:[%s1460] ss:$4 sm:$0xff] %v1430
      %v1502 = vld.sshfl [vmem:[#allocation1] sm:$0xff pattern:$0x73625140]
      %v1503 = vld.sshfl [vmem:[#allocation1 + $0x20] sm:$0xff pattern:$0x73625140]
      %1504 = vst [vmem:[#allocation1] ss:$4 sm:$0xff] %v1431
      %1505 = vst [vmem:[%s1448] ss:$4 sm:$0xff] %v1337
      %1506 = vst [vmem:[%s1450] ss:$4 sm:$0xff] %v1338
      %1507 = vst [vmem:[%s1452] ss:$4 sm:$0xff] %v1432
      %1508 = vst [vmem:[%s1454] ss:$4 sm:$0xff] %v1433
      %1509 = vst [vmem:[%s1456] ss:$4 sm:$0xff] %v1434
      %1510 = vst [vmem:[%s1458] ss:$4 sm:$0xff] %v1339
      %1511 = vst [vmem:[%s1460] ss:$4 sm:$0xff] %v1435
      %v1512 = vld.sshfl [vmem:[#allocation1] sm:$0xff pattern:$0x73625140]
      %v1513 = vld.sshfl [vmem:[#allocation1 + $0x20] sm:$0xff pattern:$0x73625140]
      %1514 = vst [vmem:[#allocation1] ss:$4 sm:$0xff] %v1436
      %1515 = vst [vmem:[%s1448] ss:$4 sm:$0xff] %v1437
      %1516 = vst [vmem:[%s1450] ss:$4 sm:$0xff] %v1340
      %1517 = vst [vmem:[%s1452] ss:$4 sm:$0xff] %v1438
      %1518 = vst [vmem:[%s1454] ss:$4 sm:$0xff] %v1439
      %1519 = vst [vmem:[%s1456] ss:$4 sm:$0xff] %v1440
      %1520 = vst [vmem:[%s1458] ss:$4 sm:$0xff] %v1341
      %1521 = vst [vmem:[%s1460] ss:$4 sm:$0xff] %v1441
      %v1522 = vld.sshfl [vmem:[#allocation1] sm:$0xff pattern:$0x73625140]
      %v1523 = vld.sshfl [vmem:[#allocation1 + $0x20] sm:$0xff pattern:$0x73625140]
      %1524 = vst [vmem:[#allocation1] ss:$4 sm:$0xff] %v1442
      %1525 = vst [vmem:[%s1448] ss:$4 sm:$0xff] %v1443
      %1526 = vst [vmem:[%s1450] ss:$4 sm:$0xff] %v1342
      %1527 = vst [vmem:[%s1452] ss:$4 sm:$0xff] %v1444
      %1528 = vst [vmem:[%s1454] ss:$4 sm:$0xff] %v1445
      %1529 = vst [vmem:[%s1456] ss:$4 sm:$0xff] %v1446
      %1530 = vst [vmem:[%s1458] ss:$4 sm:$0xff] %v1343
      %v1531 = vld.sshfl [vmem:[#allocation1] sm:$0xff pattern:$0x73625140]
      %v1532 = vld.sshfl [vmem:[#allocation1 + $0x20] sm:$0xff pattern:$0x73625140]
      %v1533 = vsel %vm643, %v1462, 0
      %v1535 = vsel %vm643, %v1463, 0
      %v1537 = vsel %vm643, %v1472, 0
      %v1539 = vsel %vm643, %v1473, 0
      %v1541 = vsel %vm643, %v1482, 0
      %v1543 = vsel %vm643, %v1483, 0
      %v1545 = vsel %vm643, %v1492, 0
      %v1547 = vsel %vm643, %v1493, 0
      %v1549 = vsel %vm643, %v1502, 0
      %v1551 = vsel %vm643, %v1503, 0
      %v1553 = vsel %vm643, %v1512, 0
      %v1555 = vsel %vm643, %v1513, 0
      %v1557 = vsel %vm643, %v1522, 0
      %v1559 = vsel %vm643, %v1523, 0
      %v1561 = vsel %vm643, %v1531, 0
      %v1563 = vsel %vm643, %v1532, 0
      %1565 = vmatpush.msra.mxu0 0.0
      %1566 = vmatpush.msra.mxu0 0.0
      %1567 = vmatpush.msra.mxu0 0.0
      %1568 = vmatpush.msra.mxu0 0.0
      %1569 = vmatpush.msra.mxu0 0.0
      %1570 = vmatpush.msra.mxu0 0.0
      %1571 = vmatpush.msra.mxu0 0.0
      %1572 = vmatpush.msra.mxu0 0.0
      %1573 = vmatpush.msra.mxu0 %v1379
      %1574 = vmatpush.msra.mxu0 %v1374
      %1575 = vmatpush.msra.mxu0 %v1369
      %1576 = vmatpush.msra.mxu0 %v1364
      %1577 = vmatpush.msra.mxu0 %v1359
      %1578 = vmatpush.msra.mxu0 %v1354
      %1579 = vmatpush.msra.mxu0 %v1349
      %1580 = vmatpush.msra.mxu0 %v1344
      %1581 = vmatmul.f32.gmra.mxu0 %v1533
      %v1582 = vpop.f32.mrf.mxu0
      %v1583 = vadd.f32 0.0, %v1582
      %1584 = vmatmul.f32.gmra.mxu0 %v1535
      %v1585 = vpop.f32.mrf.mxu0
      %v1586 = vadd.f32 0.0, %v1585
      %1587 = vmatmul.f32.gmra.mxu0 %v1537
      %v1588 = vpop.f32.mrf.mxu0
      %v1589 = vadd.f32 0.0, %v1588
      %1590 = vmatmul.f32.gmra.mxu0 %v1539
      %v1591 = vpop.f32.mrf.mxu0
      %v1592 = vadd.f32 0.0, %v1591
      %1593 = vmatmul.f32.gmra.mxu0 %v1541
      %v1594 = vpop.f32.mrf.mxu0
      %v1595 = vadd.f32 0.0, %v1594
      %1596 = vmatmul.f32.gmra.mxu0 %v1543
      %v1597 = vpop.f32.mrf.mxu0
      %v1598 = vadd.f32 0.0, %v1597
      %1599 = vmatmul.f32.gmra.mxu0 %v1545
      %v1600 = vpop.f32.mrf.mxu0
      %v1601 = vadd.f32 0.0, %v1600
      %1602 = vmatmul.f32.gmra.mxu0 %v1547
      %v1603 = vpop.f32.mrf.mxu0
      %v1604 = vadd.f32 0.0, %v1603
      %1605 = vmatmul.f32.gmra.mxu0 %v1549
      %v1606 = vpop.f32.mrf.mxu0
      %v1607 = vadd.f32 0.0, %v1606
      %1608 = vmatmul.f32.gmra.mxu0 %v1551
      %v1609 = vpop.f32.mrf.mxu0
      %v1610 = vadd.f32 0.0, %v1609
      %1611 = vmatmul.f32.gmra.mxu0 %v1553
      %v1612 = vpop.f32.mrf.mxu0
      %v1613 = vadd.f32 0.0, %v1612
      %1614 = vmatmul.f32.gmra.mxu0 %v1555
      %v1615 = vpop.f32.mrf.mxu0
      %v1616 = vadd.f32 0.0, %v1615
      %1617 = vmatmul.f32.gmra.mxu0 %v1557
      %v1618 = vpop.f32.mrf.mxu0
      %v1619 = vadd.f32 0.0, %v1618
      %1620 = vmatmul.f32.gmra.mxu0 %v1559
      %v1621 = vpop.f32.mrf.mxu0
      %v1622 = vadd.f32 0.0, %v1621
      %1623 = vmatmul.f32.gmra.mxu0 %v1561
      %v1624 = vpop.f32.mrf.mxu0
      %v1625 = vadd.f32 0.0, %v1624
      %1626 = vmatmul.f32.gmra.mxu0 %v1563
      %v1627 = vpop.f32.mrf.mxu0
      %v1628 = vadd.f32 0.0, %v1627
      %1629 = vdwg.mxu0
      %1630 = vmatpush.msra.mxu0 0.0
      %1631 = vmatpush.msra.mxu0 0.0
      %1632 = vmatpush.msra.mxu0 0.0
      %1633 = vmatpush.msra.mxu0 0.0
      %1634 = vmatpush.msra.mxu0 0.0
      %1635 = vmatpush.msra.mxu0 0.0
      %1636 = vmatpush.msra.mxu0 0.0
      %1637 = vmatpush.msra.mxu0 0.0
      %1638 = vmatpush.msra.mxu0 %v1380
      %1639 = vmatpush.msra.mxu0 %v1375
      %1640 = vmatpush.msra.mxu0 %v1370
      %1641 = vmatpush.msra.mxu0 %v1365
      %1642 = vmatpush.msra.mxu0 %v1360
      %1643 = vmatpush.msra.mxu0 %v1355
      %1644 = vmatpush.msra.mxu0 %v1350
      %1645 = vmatpush.msra.mxu0 %v1345
      %1646 = vmatmul.f32.gmra.mxu0 %v1533
      %v1647 = vpop.f32.mrf.mxu0
      %v1648 = vadd.f32 0.0, %v1647
      %1649 = vmatmul.f32.gmra.mxu0 %v1535
      %v1650 = vpop.f32.mrf.mxu0
      %v1651 = vadd.f32 0.0, %v1650
      %1652 = vmatmul.f32.gmra.mxu0 %v1537
      %v1653 = vpop.f32.mrf.mxu0
      %v1654 = vadd.f32 0.0, %v1653
      %1655 = vmatmul.f32.gmra.mxu0 %v1539
      %v1656 = vpop.f32.mrf.mxu0
      %v1657 = vadd.f32 0.0, %v1656
      %1658 = vmatmul.f32.gmra.mxu0 %v1541
      %v1659 = vpop.f32.mrf.mxu0
      %v1660 = vadd.f32 0.0, %v1659
      %1661 = vmatmul.f32.gmra.mxu0 %v1543
      %v1662 = vpop.f32.mrf.mxu0
      %v1663 = vadd.f32 0.0, %v1662
      %1664 = vmatmul.f32.gmra.mxu0 %v1545
      %v1665 = vpop.f32.mrf.mxu0
      %v1666 = vadd.f32 0.0, %v1665
      %1667 = vmatmul.f32.gmra.mxu0 %v1547
      %v1668 = vpop.f32.mrf.mxu0
      %v1669 = vadd.f32 0.0, %v1668
      %1670 = vmatmul.f32.gmra.mxu0 %v1549
      %v1671 = vpop.f32.mrf.mxu0
      %v1672 = vadd.f32 0.0, %v1671
      %1673 = vmatmul.f32.gmra.mxu0 %v1551
      %v1674 = vpop.f32.mrf.mxu0
      %v1675 = vadd.f32 0.0, %v1674
      %1676 = vmatmul.f32.gmra.mxu0 %v1553
      %v1677 = vpop.f32.mrf.mxu0
      %v1678 = vadd.f32 0.0, %v1677
      %1679 = vmatmul.f32.gmra.mxu0 %v1555
      %v1680 = vpop.f32.mrf.mxu0
      %v1681 = vadd.f32 0.0, %v1680
      %1682 = vmatmul.f32.gmra.mxu0 %v1557
      %v1683 = vpop.f32.mrf.mxu0
      %v1684 = vadd.f32 0.0, %v1683
      %1685 = vmatmul.f32.gmra.mxu0 %v1559
      %v1686 = vpop.f32.mrf.mxu0
      %v1687 = vadd.f32 0.0, %v1686
      %1688 = vmatmul.f32.gmra.mxu0 %v1561
      %v1689 = vpop.f32.mrf.mxu0
      %v1690 = vadd.f32 0.0, %v1689
      %1691 = vmatmul.f32.gmra.mxu0 %v1563
      %v1692 = vpop.f32.mrf.mxu0
      %v1693 = vadd.f32 0.0, %v1692
      %1694 = vdwg.mxu0
      %1695 = vmatpush.msra.mxu0 0.0
      %1696 = vmatpush.msra.mxu0 0.0
      %1697 = vmatpush.msra.mxu0 0.0
      %1698 = vmatpush.msra.mxu0 0.0
      %1699 = vmatpush.msra.mxu0 0.0
      %1700 = vmatpush.msra.mxu0 0.0
      %1701 = vmatpush.msra.mxu0 0.0
      %1702 = vmatpush.msra.mxu0 0.0
      %1703 = vmatpush.msra.mxu0 %v1381
      %1704 = vmatpush.msra.mxu0 %v1376
      %1705 = vmatpush.msra.mxu0 %v1371
      %1706 = vmatpush.msra.mxu0 %v1366
      %1707 = vmatpush.msra.mxu0 %v1361
      %1708 = vmatpush.msra.mxu0 %v1356
      %1709 = vmatpush.msra.mxu0 %v1351
      %1710 = vmatpush.msra.mxu0 %v1346
      %1711 = vmatmul.f32.gmra.mxu0 %v1533
      %v1712 = vpop.f32.mrf.mxu0
      %v1713 = vadd.f32 0.0, %v1712
      %1714 = vmatmul.f32.gmra.mxu0 %v1535
      %v1715 = vpop.f32.mrf.mxu0
      %v1716 = vadd.f32 0.0, %v1715
      %1717 = vmatmul.f32.gmra.mxu0 %v1537
      %v1718 = vpop.f32.mrf.mxu0
      %v1719 = vadd.f32 0.0, %v1718
      %1720 = vmatmul.f32.gmra.mxu0 %v1539
      %v1721 = vpop.f32.mrf.mxu0
      %v1722 = vadd.f32 0.0, %v1721
      %1723 = vmatmul.f32.gmra.mxu0 %v1541
      %v1724 = vpop.f32.mrf.mxu0
      %v1725 = vadd.f32 0.0, %v1724
      %1726 = vmatmul.f32.gmra.mxu0 %v1543
      %v1727 = vpop.f32.mrf.mxu0
      %v1728 = vadd.f32 0.0, %v1727
      %1729 = vmatmul.f32.gmra.mxu0 %v1545
      %v1730 = vpop.f32.mrf.mxu0
      %v1731 = vadd.f32 0.0, %v1730
      %1732 = vmatmul.f32.gmra.mxu0 %v1547
      %v1733 = vpop.f32.mrf.mxu0
      %v1734 = vadd.f32 0.0, %v1733
      %1735 = vmatmul.f32.gmra.mxu0 %v1549
      %v1736 = vpop.f32.mrf.mxu0
      %v1737 = vadd.f32 0.0, %v1736
      %1738 = vmatmul.f32.gmra.mxu0 %v1551
      %v1739 = vpop.f32.mrf.mxu0
      %v1740 = vadd.f32 0.0, %v1739
      %1741 = vmatmul.f32.gmra.mxu0 %v1553
      %v1742 = vpop.f32.mrf.mxu0
      %v1743 = vadd.f32 0.0, %v1742
      %1744 = vmatmul.f32.gmra.mxu0 %v1555
      %v1745 = vpop.f32.mrf.mxu0
      %v1746 = vadd.f32 0.0, %v1745
      %1747 = vmatmul.f32.gmra.mxu0 %v1557
      %v1748 = vpop.f32.mrf.mxu0
      %v1749 = vadd.f32 0.0, %v1748
      %1750 = vmatmul.f32.gmra.mxu0 %v1559
      %v1751 = vpop.f32.mrf.mxu0
      %v1752 = vadd.f32 0.0, %v1751
      %1753 = vmatmul.f32.gmra.mxu0 %v1561
      %v1754 = vpop.f32.mrf.mxu0
      %v1755 = vadd.f32 0.0, %v1754
      %1756 = vmatmul.f32.gmra.mxu0 %v1563
      %v1757 = vpop.f32.mrf.mxu0
      %v1758 = vadd.f32 0.0, %v1757
      %1759 = vdwg.mxu0
      %1760 = vmatpush.msra.mxu0 0.0
      %1761 = vmatpush.msra.mxu0 0.0
      %1762 = vmatpush.msra.mxu0 0.0
      %1763 = vmatpush.msra.mxu0 0.0
      %1764 = vmatpush.msra.mxu0 0.0
      %1765 = vmatpush.msra.mxu0 0.0
      %1766 = vmatpush.msra.mxu0 0.0
      %1767 = vmatpush.msra.mxu0 0.0
      %1768 = vmatpush.msra.mxu0 %v1382
      %1769 = vmatpush.msra.mxu0 %v1377
      %1770 = vmatpush.msra.mxu0 %v1372
      %1771 = vmatpush.msra.mxu0 %v1367
      %1772 = vmatpush.msra.mxu0 %v1362
      %1773 = vmatpush.msra.mxu0 %v1357
      %1774 = vmatpush.msra.mxu0 %v1352
      %1775 = vmatpush.msra.mxu0 %v1347
      %1776 = vmatmul.f32.gmra.mxu0 %v1533
      %v1777 = vpop.f32.mrf.mxu0
      %v1778 = vadd.f32 0.0, %v1777
      %1779 = vmatmul.f32.gmra.mxu0 %v1535
      %v1780 = vpop.f32.mrf.mxu0
      %v1781 = vadd.f32 0.0, %v1780
      %1782 = vmatmul.f32.gmra.mxu0 %v1537
      %v1783 = vpop.f32.mrf.mxu0
      %v1784 = vadd.f32 0.0, %v1783
      %1785 = vmatmul.f32.gmra.mxu0 %v1539
      %v1786 = vpop.f32.mrf.mxu0
      %v1787 = vadd.f32 0.0, %v1786
      %1788 = vmatmul.f32.gmra.mxu0 %v1541
      %v1789 = vpop.f32.mrf.mxu0
      %v1790 = vadd.f32 0.0, %v1789
      %1791 = vmatmul.f32.gmra.mxu0 %v1543
      %v1792 = vpop.f32.mrf.mxu0
      %v1793 = vadd.f32 0.0, %v1792
      %1794 = vmatmul.f32.gmra.mxu0 %v1545
      %v1795 = vpop.f32.mrf.mxu0
      %v1796 = vadd.f32 0.0, %v1795
      %1797 = vmatmul.f32.gmra.mxu0 %v1547
      %v1798 = vpop.f32.mrf.mxu0
      %v1799 = vadd.f32 0.0, %v1798
      %1800 = vmatmul.f32.gmra.mxu0 %v1549
      %v1801 = vpop.f32.mrf.mxu0
      %v1802 = vadd.f32 0.0, %v1801
      %1803 = vmatmul.f32.gmra.mxu0 %v1551
      %v1804 = vpop.f32.mrf.mxu0
      %v1805 = vadd.f32 0.0, %v1804
      %1806 = vmatmul.f32.gmra.mxu0 %v1553
      %v1807 = vpop.f32.mrf.mxu0
      %v1808 = vadd.f32 0.0, %v1807
      %1809 = vmatmul.f32.gmra.mxu0 %v1555
      %v1810 = vpop.f32.mrf.mxu0
      %v1811 = vadd.f32 0.0, %v1810
      %1812 = vmatmul.f32.gmra.mxu0 %v1557
      %v1813 = vpop.f32.mrf.mxu0
      %v1814 = vadd.f32 0.0, %v1813
      %1815 = vmatmul.f32.gmra.mxu0 %v1559
      %v1816 = vpop.f32.mrf.mxu0
      %v1817 = vadd.f32 0.0, %v1816
      %1818 = vmatmul.f32.gmra.mxu0 %v1561
      %v1819 = vpop.f32.mrf.mxu0
      %v1820 = vadd.f32 0.0, %v1819
      %1821 = vmatmul.f32.gmra.mxu0 %v1563
      %v1822 = vpop.f32.mrf.mxu0
      %v1823 = vadd.f32 0.0, %v1822
      %1824 = vdwg.mxu0
      %1825 = vmatpush.msra.mxu0 0.0
      %1826 = vmatpush.msra.mxu0 0.0
      %1827 = vmatpush.msra.mxu0 0.0
      %1828 = vmatpush.msra.mxu0 0.0
      %1829 = vmatpush.msra.mxu0 0.0
      %1830 = vmatpush.msra.mxu0 0.0
      %1831 = vmatpush.msra.mxu0 0.0
      %1832 = vmatpush.msra.mxu0 0.0
      %1833 = vmatpush.msra.mxu0 %v1383
      %1834 = vmatpush.msra.mxu0 %v1378
      %1835 = vmatpush.msra.mxu0 %v1373
      %1836 = vmatpush.msra.mxu0 %v1368
      %1837 = vmatpush.msra.mxu0 %v1363
      %1838 = vmatpush.msra.mxu0 %v1358
      %1839 = vmatpush.msra.mxu0 %v1353
      %1840 = vmatpush.msra.mxu0 %v1348
      %1841 = vmatmul.f32.gmra.mxu0 %v1533
      %v1842 = vpop.f32.mrf.mxu0
      %v1843 = vadd.f32 0.0, %v1842
      %1844 = vmatmul.f32.gmra.mxu0 %v1535
      %v1845 = vpop.f32.mrf.mxu0
      %v1846 = vadd.f32 0.0, %v1845
      %1847 = vmatmul.f32.gmra.mxu0 %v1537
      %v1848 = vpop.f32.mrf.mxu0
      %v1849 = vadd.f32 0.0, %v1848
      %1850 = vmatmul.f32.gmra.mxu0 %v1539
      %v1851 = vpop.f32.mrf.mxu0
      %v1852 = vadd.f32 0.0, %v1851
      %1853 = vmatmul.f32.gmra.mxu0 %v1541
      %v1854 = vpop.f32.mrf.mxu0
      %v1855 = vadd.f32 0.0, %v1854
      %1856 = vmatmul.f32.gmra.mxu0 %v1543
      %v1857 = vpop.f32.mrf.mxu0
      %v1858 = vadd.f32 0.0, %v1857
      %1859 = vmatmul.f32.gmra.mxu0 %v1545
      %v1860 = vpop.f32.mrf.mxu0
      %v1861 = vadd.f32 0.0, %v1860
      %1862 = vmatmul.f32.gmra.mxu0 %v1547
      %v1863 = vpop.f32.mrf.mxu0
      %v1864 = vadd.f32 0.0, %v1863
      %1865 = vmatmul.f32.gmra.mxu0 %v1549
      %v1866 = vpop.f32.mrf.mxu0
      %v1867 = vadd.f32 0.0, %v1866
      %1868 = vmatmul.f32.gmra.mxu0 %v1551
      %v1869 = vpop.f32.mrf.mxu0
      %v1870 = vadd.f32 0.0, %v1869
      %1871 = vmatmul.f32.gmra.mxu0 %v1553
      %v1872 = vpop.f32.mrf.mxu0
      %v1873 = vadd.f32 0.0, %v1872
      %1874 = vmatmul.f32.gmra.mxu0 %v1555
      %v1875 = vpop.f32.mrf.mxu0
      %v1876 = vadd.f32 0.0, %v1875
      %1877 = vmatmul.f32.gmra.mxu0 %v1557
      %v1878 = vpop.f32.mrf.mxu0
      %v1879 = vadd.f32 0.0, %v1878
      %1880 = vmatmul.f32.gmra.mxu0 %v1559
      %v1881 = vpop.f32.mrf.mxu0
      %v1882 = vadd.f32 0.0, %v1881
      %1883 = vmatmul.f32.gmra.mxu0 %v1561
      %v1884 = vpop.f32.mrf.mxu0
      %v1885 = vadd.f32 0.0, %v1884
      %1886 = vmatmul.f32.gmra.mxu0 %v1563
      %v1887 = vpop.f32.mrf.mxu0
      %v1888 = vadd.f32 0.0, %v1887
      %1889 = vdwg.mxu0
      %v1970 = vrot.slane %v1648, 6
      %v1971 = vrot.slane %v1713, 4
      %v1972 = vrot.slane %v1778, 2
      %v1973 = vrot.slane %v1651, 6
      %v1974 = vrot.slane %v1716, 4
      %v1975 = vrot.slane %v1781, 2
      %v1976 = vrot.slane %v1654, 6
      %v1977 = vrot.slane %v1719, 4
      %v1978 = vrot.slane %v1784, 2
      %v1979 = vrot.slane %v1657, 6
      %v1980 = vrot.slane %v1722, 4
      %v1981 = vrot.slane %v1787, 2
      %v1982 = vrot.slane %v1660, 6
      %v1983 = vrot.slane %v1725, 4
      %v1984 = vrot.slane %v1790, 2
      %v1985 = vrot.slane %v1663, 6
      %v1986 = vrot.slane %v1728, 4
      %v1987 = vrot.slane %v1793, 2
      %v1988 = vrot.slane %v1666, 6
      %v1989 = vrot.slane %v1731, 4
      %v1990 = vrot.slane %v1796, 2
      %v1991 = vrot.slane %v1669, 6
      %v1992 = vrot.slane %v1734, 4
      %v1993 = vrot.slane %v1799, 2
      %v1994 = vrot.slane %v1672, 6
      %v1995 = vrot.slane %v1737, 4
      %v1996 = vrot.slane %v1802, 2
      %v1997 = vrot.slane %v1675, 6
      %v1998 = vrot.slane %v1740, 4
      %v1999 = vrot.slane %v1805, 2
      %v2000 = vrot.slane %v1678, 6
      %v2001 = vrot.slane %v1743, 4
      %v2002 = vrot.slane %v1808, 2
      %v2003 = vrot.slane %v1681, 6
      %v2004 = vrot.slane %v1746, 4
      %v2005 = vrot.slane %v1811, 2
      %v2006 = vrot.slane %v1684, 6
      %v2007 = vrot.slane %v1749, 4
      %v2008 = vrot.slane %v1814, 2
      %v2009 = vrot.slane %v1687, 6
      %v2010 = vrot.slane %v1752, 4
      %v2011 = vrot.slane %v1817, 2
      %v2012 = vrot.slane %v1690, 6
      %v2013 = vrot.slane %v1755, 4
      %v2014 = vrot.slane %v1820, 2
      %v2015 = vrot.slane %v1693, 6
      %v2016 = vrot.slane %v1758, 4
      %v2017 = vrot.slane %v1823, 2
      %vm2018 = vcmask 1041408
      %v2019 = vsel %vm2018, %v1583, %v1970
      %vm2020 = vcmask 1045508
      %v2021 = vsel %vm2020, %v1971, %v1972
      %vm2022 = vcmask 1043456
      %v2023 = vsel %vm2022, %v2019, %v2021
      %vm2024 = vcmask 1043458
      %v2025 = vsel %vm2024, %v1583, %v1970
      %vm2026 = vcmask 1045504
      %v2027 = vsel %vm2026, %v1972, %v1971
      %vm2028 = vcmask 1045506
      %v2029 = vsel %vm2028, %v2025, %v2027
      %v2030 = vrot.slane %v2029, 2
      %v2031 = vrot.slane %v1843, 2
      %v2032 = vsel %vm2020, %v1583, %v1970
      %v2033 = vsel %vm2018, %v1971, %v1972
      %v2034 = vsel %vm2022, %v2033, %v2032
      %v2035 = vrot.slane %v2034, 4
      %v2036 = vrot.slane %v1843, 4
      %v2037 = vsel %vm2026, %v1970, %v1583
      %v2038 = vsel %vm2024, %v1971, %v1972
      %v2039 = vsel %vm2028, %v2038, %v2037
      %v2040 = vrot.slane %v2039, 6
      %v2041 = vrot.slane %v1843, 6
      %v2042 = vsel %vm2018, %v1586, %v1973
      %v2043 = vsel %vm2020, %v1974, %v1975
      %v2044 = vsel %vm2022, %v2042, %v2043
      %v2045 = vsel %vm2024, %v1586, %v1973
      %v2046 = vsel %vm2026, %v1975, %v1974
      %v2047 = vsel %vm2028, %v2045, %v2046
      %v2048 = vrot.slane %v2047, 2
      %v2049 = vrot.slane %v1846, 2
      %v2050 = vsel %vm2020, %v1586, %v1973
      %v2051 = vsel %vm2018, %v1974, %v1975
      %v2052 = vsel %vm2022, %v2051, %v2050
      %v2053 = vrot.slane %v2052, 4
      %v2054 = vrot.slane %v1846, 4
      %v2055 = vsel %vm2026, %v1973, %v1586
      %v2056 = vsel %vm2024, %v1974, %v1975
      %v2057 = vsel %vm2028, %v2056, %v2055
      %v2058 = vrot.slane %v2057, 6
      %v2059 = vrot.slane %v1846, 6
      %v2060 = vsel %vm2018, %v1589, %v1976
      %v2061 = vsel %vm2020, %v1977, %v1978
      %v2062 = vsel %vm2022, %v2060, %v2061
      %v2063 = vsel %vm2024, %v1589, %v1976
      %v2064 = vsel %vm2026, %v1978, %v1977
      %v2065 = vsel %vm2028, %v2063, %v2064
      %v2066 = vrot.slane %v2065, 2
      %v2067 = vrot.slane %v1849, 2
      %v2068 = vsel %vm2020, %v1589, %v1976
      %v2069 = vsel %vm2018, %v1977, %v1978
      %v2070 = vsel %vm2022, %v2069, %v2068
      %v2071 = vrot.slane %v2070, 4
      %v2072 = vrot.slane %v1849, 4
      %v2073 = vsel %vm2026, %v1976, %v1589
      %v2074 = vsel %vm2024, %v1977, %v1978
      %v2075 = vsel %vm2028, %v2074, %v2073
      %v2076 = vrot.slane %v2075, 6
      %v2077 = vrot.slane %v1849, 6
      %v2078 = vsel %vm2018, %v1592, %v1979
      %v2079 = vsel %vm2020, %v1980, %v1981
      %v2080 = vsel %vm2022, %v2078, %v2079
      %v2081 = vsel %vm2024, %v1592, %v1979
      %v2082 = vsel %vm2026, %v1981, %v1980
      %v2083 = vsel %vm2028, %v2081, %v2082
      %v2084 = vrot.slane %v2083, 2
      %v2085 = vrot.slane %v1852, 2
      %v2086 = vsel %vm2020, %v1592, %v1979
      %v2087 = vsel %vm2018, %v1980, %v1981
      %v2088 = vsel %vm2022, %v2087, %v2086
      %v2089 = vrot.slane %v2088, 4
      %v2090 = vrot.slane %v1852, 4
      %v2091 = vsel %vm2026, %v1979, %v1592
      %v2092 = vsel %vm2024, %v1980, %v1981
      %v2093 = vsel %vm2028, %v2092, %v2091
      %v2094 = vrot.slane %v2093, 6
      %v2095 = vrot.slane %v1852, 6
      %v2096 = vsel %vm2018, %v1595, %v1982
      %v2097 = vsel %vm2020, %v1983, %v1984
      %v2098 = vsel %vm2022, %v2096, %v2097
      %v2099 = vsel %vm2024, %v1595, %v1982
      %v2100 = vsel %vm2026, %v1984, %v1983
      %v2101 = vsel %vm2028, %v2099, %v2100
      %v2102 = vrot.slane %v2101, 2
      %v2103 = vrot.slane %v1855, 2
      %v2104 = vsel %vm2020, %v1595, %v1982
      %v2105 = vsel %vm2018, %v1983, %v1984
      %v2106 = vsel %vm2022, %v2105, %v2104
      %v2107 = vrot.slane %v2106, 4
      %v2108 = vrot.slane %v1855, 4
      %v2109 = vsel %vm2026, %v1982, %v1595
      %v2110 = vsel %vm2024, %v1983, %v1984
      %v2111 = vsel %vm2028, %v2110, %v2109
      %v2112 = vrot.slane %v2111, 6
      %v2113 = vrot.slane %v1855, 6
      %v2114 = vsel %vm2018, %v1598, %v1985
      %v2115 = vsel %vm2020, %v1986, %v1987
      %v2116 = vsel %vm2022, %v2114, %v2115
      %v2117 = vsel %vm2024, %v1598, %v1985
      %v2118 = vsel %vm2026, %v1987, %v1986
      %v2119 = vsel %vm2028, %v2117, %v2118
      %v2120 = vrot.slane %v2119, 2
      %v2121 = vrot.slane %v1858, 2
      %v2122 = vsel %vm2020, %v1598, %v1985
      %v2123 = vsel %vm2018, %v1986, %v1987
      %v2124 = vsel %vm2022, %v2123, %v2122
      %v2125 = vrot.slane %v2124, 4
      %v2126 = vrot.slane %v1858, 4
      %v2127 = vsel %vm2026, %v1985, %v1598
      %v2128 = vsel %vm2024, %v1986, %v1987
      %v2129 = vsel %vm2028, %v2128, %v2127
      %v2130 = vrot.slane %v2129, 6
      %v2131 = vrot.slane %v1858, 6
      %v2132 = vsel %vm2018, %v1601, %v1988
      %v2133 = vsel %vm2020, %v1989, %v1990
      %v2134 = vsel %vm2022, %v2132, %v2133
      %v2135 = vsel %vm2024, %v1601, %v1988
      %v2136 = vsel %vm2026, %v1990, %v1989
      %v2137 = vsel %vm2028, %v2135, %v2136
      %v2138 = vrot.slane %v2137, 2
      %v2139 = vrot.slane %v1861, 2
      %v2140 = vsel %vm2020, %v1601, %v1988
      %v2141 = vsel %vm2018, %v1989, %v1990
      %v2142 = vsel %vm2022, %v2141, %v2140
      %v2143 = vrot.slane %v2142, 4
      %v2144 = vrot.slane %v1861, 4
      %v2145 = vsel %vm2026, %v1988, %v1601
      %v2146 = vsel %vm2024, %v1989, %v1990
      %v2147 = vsel %vm2028, %v2146, %v2145
      %v2148 = vrot.slane %v2147, 6
      %v2149 = vrot.slane %v1861, 6
      %v2150 = vsel %vm2018, %v1604, %v1991
      %v2151 = vsel %vm2020, %v1992, %v1993
      %v2152 = vsel %vm2022, %v2150, %v2151
      %v2153 = vsel %vm2024, %v1604, %v1991
      %v2154 = vsel %vm2026, %v1993, %v1992
      %v2155 = vsel %vm2028, %v2153, %v2154
      %v2156 = vrot.slane %v2155, 2
      %v2157 = vrot.slane %v1864, 2
      %v2158 = vsel %vm2020, %v1604, %v1991
      %v2159 = vsel %vm2018, %v1992, %v1993
      %v2160 = vsel %vm2022, %v2159, %v2158
      %v2161 = vrot.slane %v2160, 4
      %v2162 = vrot.slane %v1864, 4
      %v2163 = vsel %vm2026, %v1991, %v1604
      %v2164 = vsel %vm2024, %v1992, %v1993
      %v2165 = vsel %vm2028, %v2164, %v2163
      %v2166 = vrot.slane %v2165, 6
      %v2167 = vrot.slane %v1864, 6
      %v2168 = vsel %vm2018, %v1607, %v1994
      %v2169 = vsel %vm2020, %v1995, %v1996
      %v2170 = vsel %vm2022, %v2168, %v2169
      %v2171 = vsel %vm2024, %v1607, %v1994
      %v2172 = vsel %vm2026, %v1996, %v1995
      %v2173 = vsel %vm2028, %v2171, %v2172
      %v2174 = vrot.slane %v2173, 2
      %v2175 = vrot.slane %v1867, 2
      %v2176 = vsel %vm2020, %v1607, %v1994
      %v2177 = vsel %vm2018, %v1995, %v1996
      %v2178 = vsel %vm2022, %v2177, %v2176
      %v2179 = vrot.slane %v2178, 4
      %v2180 = vrot.slane %v1867, 4
      %v2181 = vsel %vm2026, %v1994, %v1607
      %v2182 = vsel %vm2024, %v1995, %v1996
      %v2183 = vsel %vm2028, %v2182, %v2181
      %v2184 = vrot.slane %v2183, 6
      %v2185 = vrot.slane %v1867, 6
      %v2186 = vsel %vm2018, %v1610, %v1997
      %v2187 = vsel %vm2020, %v1998, %v1999
      %v2188 = vsel %vm2022, %v2186, %v2187
      %v2189 = vsel %vm2024, %v1610, %v1997
      %v2190 = vsel %vm2026, %v1999, %v1998
      %v2191 = vsel %vm2028, %v2189, %v2190
      %v2192 = vrot.slane %v2191, 2
      %v2193 = vrot.slane %v1870, 2
      %v2194 = vsel %vm2020, %v1610, %v1997
      %v2195 = vsel %vm2018, %v1998, %v1999
      %v2196 = vsel %vm2022, %v2195, %v2194
      %v2197 = vrot.slane %v2196, 4
      %v2198 = vrot.slane %v1870, 4
      %v2199 = vsel %vm2026, %v1997, %v1610
      %v2200 = vsel %vm2024, %v1998, %v1999
      %v2201 = vsel %vm2028, %v2200, %v2199
      %v2202 = vrot.slane %v2201, 6
      %v2203 = vrot.slane %v1870, 6
      %v2204 = vsel %vm2018, %v1613, %v2000
      %v2205 = vsel %vm2020, %v2001, %v2002
      %v2206 = vsel %vm2022, %v2204, %v2205
      %v2207 = vsel %vm2024, %v1613, %v2000
      %v2208 = vsel %vm2026, %v2002, %v2001
      %v2209 = vsel %vm2028, %v2207, %v2208
      %v2210 = vrot.slane %v2209, 2
      %v2211 = vrot.slane %v1873, 2
      %v2212 = vsel %vm2020, %v1613, %v2000
      %v2213 = vsel %vm2018, %v2001, %v2002
      %v2214 = vsel %vm2022, %v2213, %v2212
      %v2215 = vrot.slane %v2214, 4
      %v2216 = vrot.slane %v1873, 4
      %v2217 = vsel %vm2026, %v2000, %v1613
      %v2218 = vsel %vm2024, %v2001, %v2002
      %v2219 = vsel %vm2028, %v2218, %v2217
      %v2220 = vrot.slane %v2219, 6
      %v2221 = vrot.slane %v1873, 6
      %v2222 = vsel %vm2018, %v1616, %v2003
      %v2223 = vsel %vm2020, %v2004, %v2005
      %v2224 = vsel %vm2022, %v2222, %v2223
      %v2225 = vsel %vm2024, %v1616, %v2003
      %v2226 = vsel %vm2026, %v2005, %v2004
      %v2227 = vsel %vm2028, %v2225, %v2226
      %v2228 = vrot.slane %v2227, 2
      %v2229 = vrot.slane %v1876, 2
      %v2230 = vsel %vm2020, %v1616, %v2003
      %v2231 = vsel %vm2018, %v2004, %v2005
      %v2232 = vsel %vm2022, %v2231, %v2230
      %v2233 = vrot.slane %v2232, 4
      %v2234 = vrot.slane %v1876, 4
      %v2235 = vsel %vm2026, %v2003, %v1616
      %v2236 = vsel %vm2024, %v2004, %v2005
      %v2237 = vsel %vm2028, %v2236, %v2235
      %v2238 = vrot.slane %v2237, 6
      %v2239 = vrot.slane %v1876, 6
      %v2240 = vsel %vm2018, %v1619, %v2006
      %v2241 = vsel %vm2020, %v2007, %v2008
      %v2242 = vsel %vm2022, %v2240, %v2241
      %v2243 = vsel %vm2024, %v1619, %v2006
      %v2244 = vsel %vm2026, %v2008, %v2007
      %v2245 = vsel %vm2028, %v2243, %v2244
      %v2246 = vrot.slane %v2245, 2
      %v2247 = vrot.slane %v1879, 2
      %v2248 = vsel %vm2020, %v1619, %v2006
      %v2249 = vsel %vm2018, %v2007, %v2008
      %v2250 = vsel %vm2022, %v2249, %v2248
      %v2251 = vrot.slane %v2250, 4
      %v2252 = vrot.slane %v1879, 4
      %v2253 = vsel %vm2026, %v2006, %v1619
      %v2254 = vsel %vm2024, %v2007, %v2008
      %v2255 = vsel %vm2028, %v2254, %v2253
      %v2256 = vrot.slane %v2255, 6
      %v2257 = vrot.slane %v1879, 6
      %v2258 = vsel %vm2018, %v1622, %v2009
      %v2259 = vsel %vm2020, %v2010, %v2011
      %v2260 = vsel %vm2022, %v2258, %v2259
      %v2261 = vsel %vm2024, %v1622, %v2009
      %v2262 = vsel %vm2026, %v2011, %v2010
      %v2263 = vsel %vm2028, %v2261, %v2262
      %v2264 = vrot.slane %v2263, 2
      %v2265 = vrot.slane %v1882, 2
      %v2266 = vsel %vm2020, %v1622, %v2009
      %v2267 = vsel %vm2018, %v2010, %v2011
      %v2268 = vsel %vm2022, %v2267, %v2266
      %v2269 = vrot.slane %v2268, 4
      %v2270 = vrot.slane %v1882, 4
      %v2271 = vsel %vm2026, %v2009, %v1622
      %v2272 = vsel %vm2024, %v2010, %v2011
      %v2273 = vsel %vm2028, %v2272, %v2271
      %v2274 = vrot.slane %v2273, 6
      %v2275 = vrot.slane %v1882, 6
      %v2276 = vsel %vm2018, %v1625, %v2012
      %v2277 = vsel %vm2020, %v2013, %v2014
      %v2278 = vsel %vm2022, %v2276, %v2277
      %v2279 = vsel %vm2024, %v1625, %v2012
      %v2280 = vsel %vm2026, %v2014, %v2013
      %v2281 = vsel %vm2028, %v2279, %v2280
      %v2282 = vrot.slane %v2281, 2
      %v2283 = vrot.slane %v1885, 2
      %v2284 = vsel %vm2020, %v1625, %v2012
      %v2285 = vsel %vm2018, %v2013, %v2014
      %v2286 = vsel %vm2022, %v2285, %v2284
      %v2287 = vrot.slane %v2286, 4
      %v2288 = vrot.slane %v1885, 4
      %v2289 = vsel %vm2026, %v2012, %v1625
      %v2290 = vsel %vm2024, %v2013, %v2014
      %v2291 = vsel %vm2028, %v2290, %v2289
      %v2292 = vrot.slane %v2291, 6
      %v2293 = vrot.slane %v1885, 6
      %v2294 = vsel %vm2018, %v1628, %v2015
      %v2295 = vsel %vm2020, %v2016, %v2017
      %v2296 = vsel %vm2022, %v2294, %v2295
      %v2297 = vsel %vm2024, %v1628, %v2015
      %v2298 = vsel %vm2026, %v2017, %v2016
      %v2299 = vsel %vm2028, %v2297, %v2298
      %v2300 = vrot.slane %v2299, 2
      %v2301 = vrot.slane %v1888, 2
      %v2302 = vsel %vm2020, %v1628, %v2015
      %v2303 = vsel %vm2018, %v2016, %v2017
      %v2304 = vsel %vm2022, %v2303, %v2302
      %v2305 = vrot.slane %v2304, 4
      %v2306 = vrot.slane %v1888, 4
      %2307 = vst.msk [vmem:[#allocation3] sm:$0xff] %vm643, 0.0
      %2308 = vst.msk [vmem:[#allocation3 + $0x8] sm:$0xff] %vm643, 0.0
      %2309 = vst.msk [vmem:[#allocation3 + $0x10] sm:$0xff] %vm643, 0.0
      %2310 = vst.msk [vmem:[#allocation3 + $0x18] sm:$0xff] %vm643, 0.0
      %2311 = vst.msk [vmem:[#allocation3 + $0x20] sm:$0xff] %vm643, 0.0
      %2312 = vst.msk [vmem:[#allocation3 + $0x28] sm:$0xff] %vm643, 0.0
      %2313 = vst.msk [vmem:[#allocation3 + $0x30] sm:$0x3] %vm649, 0.0
      %2314 = vst.msk [vmem:[#allocation3 + $0x38] sm:$0xff] %vm643, 0.0
      %2315 = vst.msk [vmem:[#allocation3 + $0x40] sm:$0xff] %vm643, 0.0
      %2316 = vst.msk [vmem:[#allocation3 + $0x48] sm:$0xff] %vm643, 0.0
      %2317 = vst.msk [vmem:[#allocation3 + $0x50] sm:$0xff] %vm643, 0.0
      %2318 = vst.msk [vmem:[#allocation3 + $0x58] sm:$0xff] %vm643, 0.0
      %2319 = vst.msk [vmem:[#allocation3 + $0x60] sm:$0xff] %vm643, 0.0
      %2320 = vst.msk [vmem:[#allocation3 + $0x68] sm:$0x3] %vm649, 0.0
      %2321 = vst.msk [vmem:[#allocation3 + $0x70] sm:$0xff] %vm643, 0.0
      %2322 = vst.msk [vmem:[#allocation3 + $0x78] sm:$0xff] %vm643, 0.0
      %2323 = vst.msk [vmem:[#allocation3 + $0x80] sm:$0xff] %vm643, 0.0
      %2324 = vst.msk [vmem:[#allocation3 + $0x88] sm:$0xff] %vm643, 0.0
      %2325 = vst.msk [vmem:[#allocation3 + $0x90] sm:$0xff] %vm643, 0.0
      %2326 = vst.msk [vmem:[#allocation3 + $0x98] sm:$0xff] %vm643, 0.0
      %2327 = vst.msk [vmem:[#allocation3 + $0xa0] sm:$0x3] %vm649, 0.0
      %v2328 = vld [vmem:[#allocation3] sm:$0xff]
      %v2329 = vld [vmem:[#allocation3 + $0x8] sm:$0xff]
      %v2330 = vld [vmem:[#allocation3 + $0x10] sm:$0xff]
      %v2331 = vld [vmem:[#allocation3 + $0x18] sm:$0xff]
      %v2332 = vld [vmem:[#allocation3 + $0x20] sm:$0xff]
      %v2333 = vld [vmem:[#allocation3 + $0x28] sm:$0x3]
      %v2334 = vld [vmem:[#allocation3 + $0x38] sm:$0xff]
      %v2335 = vld [vmem:[#allocation3 + $0x40] sm:$0xff]
      %v2336 = vld [vmem:[#allocation3 + $0x48] sm:$0xff]
      %v2337 = vld [vmem:[#allocation3 + $0x50] sm:$0xff]
      %v2338 = vld [vmem:[#allocation3 + $0x58] sm:$0xff]
      %v2339 = vld [vmem:[#allocation3 + $0x60] sm:$0x3]
      %v2340 = vld [vmem:[#allocation3 + $0x70] sm:$0xff]
      %v2341 = vld [vmem:[#allocation3 + $0x78] sm:$0xff]
      %v2342 = vld [vmem:[#allocation3 + $0x80] sm:$0xff]
      %v2343 = vld [vmem:[#allocation3 + $0x88] sm:$0xff]
      %v2344 = vld [vmem:[#allocation3 + $0x90] sm:$0xff]
      %v2345 = vld [vmem:[#allocation3 + $0x98] sm:$0x3]
      %2346 = vst [vmem:[#allocation1] ss:$4 sm:$0xff] %v2023
      %s2347 = scalar_lea.vmem [#allocation1], 1
      %2348 = vst [vmem:[%s2347] ss:$4 sm:$0xff] %v2030
      %s2349 = scalar_lea.vmem [#allocation1], 2
      %2350 = vst [vmem:[%s2349] ss:$4 sm:$0xff] %v2035
      %s2351 = scalar_lea.vmem [#allocation1], 3
      %2352 = vst [vmem:[%s2351] ss:$4 sm:$0xff] %v2040
      %s2353 = scalar_lea.vmem [#allocation1], 32
      %2354 = vst [vmem:[%s2353] ss:$4 sm:$0xff] %v2044
      %s2355 = scalar_lea.vmem [#allocation1], 33
      %2356 = vst [vmem:[%s2355] ss:$4 sm:$0xff] %v2048
      %s2357 = scalar_lea.vmem [#allocation1], 34
      %2358 = vst [vmem:[%s2357] ss:$4 sm:$0xff] %v2053
      %s2359 = scalar_lea.vmem [#allocation1], 35
      %2360 = vst [vmem:[%s2359] ss:$4 sm:$0xff] %v2058
      %v2361 = vld.sshfl [vmem:[#allocation1] sm:$0xff pattern:$0x73625140]
      %v2362 = vld.sshfl [vmem:[#allocation1 + $0x20] sm:$0xff pattern:$0x73625140]
      %2363 = vst [vmem:[#allocation1] ss:$4 sm:$0xff] %v2062
      %2364 = vst [vmem:[%s2347] ss:$4 sm:$0xff] %v2066
      %2365 = vst [vmem:[%s2349] ss:$4 sm:$0xff] %v2071
      %2366 = vst [vmem:[%s2351] ss:$4 sm:$0xff] %v2076
      %2367 = vst [vmem:[%s2353] ss:$4 sm:$0xff] %v2080
      %2368 = vst [vmem:[%s2355] ss:$4 sm:$0xff] %v2084
      %2369 = vst [vmem:[%s2357] ss:$4 sm:$0xff] %v2089
      %2370 = vst [vmem:[%s2359] ss:$4 sm:$0xff] %v2094
      %v2371 = vld.sshfl [vmem:[#allocation1] sm:$0xff pattern:$0x73625140]
      %v2372 = vld.sshfl [vmem:[#allocation1 + $0x20] sm:$0xff pattern:$0x73625140]
      %2373 = vst [vmem:[#allocation1] ss:$4 sm:$0xff] %v2098
      %2374 = vst [vmem:[%s2347] ss:$4 sm:$0xff] %v2102
      %2375 = vst [vmem:[%s2349] ss:$4 sm:$0xff] %v2107
      %2376 = vst [vmem:[%s2351] ss:$4 sm:$0xff] %v2112
      %2377 = vst [vmem:[%s2353] ss:$4 sm:$0xff] %v2116
      %v2378 = vld.sshfl [vmem:[#allocation1] sm:$0xff pattern:$0x73625140]
      %v2379 = vld.sshfl [vmem:[#allocation1 + $0x20] sm:$0xff pattern:$0x73625140]
      %2380 = vst [vmem:[#allocation1] ss:$4 sm:$0xff] %v2120
      %2381 = vst [vmem:[%s2347] ss:$4 sm:$0xff] %v2125
      %2382 = vst [vmem:[%s2349] ss:$4 sm:$0xff] %v2130
      %2383 = vst [vmem:[%s2351] ss:$4 sm:$0xff] %v2134
      %2384 = vst [vmem:[%s2353] ss:$4 sm:$0xff] %v2138
      %2385 = vst [vmem:[%s2355] ss:$4 sm:$0xff] %v2143
      %2386 = vst [vmem:[%s2357] ss:$4 sm:$0xff] %v2148
      %2387 = vst [vmem:[%s2359] ss:$4 sm:$0xff] %v2152
      %v2388 = vld.sshfl [vmem:[#allocation1] sm:$0xff pattern:$0x73625140]
      %v2389 = vld.sshfl [vmem:[#allocation1 + $0x20] sm:$0xff pattern:$0x73625140]
      %2390 = vst [vmem:[#allocation1] ss:$4 sm:$0xff] %v2156
      %2391 = vst [vmem:[%s2347] ss:$4 sm:$0xff] %v2161
      %2392 = vst [vmem:[%s2349] ss:$4 sm:$0xff] %v2166
      %2393 = vst [vmem:[%s2351] ss:$4 sm:$0xff] %v2170
      %2394 = vst [vmem:[%s2353] ss:$4 sm:$0xff] %v2174
      %2395 = vst [vmem:[%s2355] ss:$4 sm:$0xff] %v2179
      %2396 = vst [vmem:[%s2357] ss:$4 sm:$0xff] %v2184
      %2397 = vst [vmem:[%s2359] ss:$4 sm:$0xff] %v2188
      %v2398 = vld.sshfl [vmem:[#allocation1] sm:$0xff pattern:$0x73625140]
      %v2399 = vld.sshfl [vmem:[#allocation1 + $0x20] sm:$0xff pattern:$0x73625140]
      %2400 = vst [vmem:[#allocation1] ss:$4 sm:$0xff] %v2192
      %2401 = vst [vmem:[%s2347] ss:$4 sm:$0xff] %v2197
      %2402 = vst [vmem:[%s2349] ss:$4 sm:$0xff] %v2202
      %2403 = vst [vmem:[%s2351] ss:$4 sm:$0xff] %v2206
      %2404 = vst [vmem:[%s2353] ss:$4 sm:$0xff] %v2210
      %v2405 = vld.sshfl [vmem:[#allocation1] sm:$0xff pattern:$0x73625140]
      %v2406 = vld.sshfl [vmem:[#allocation1 + $0x20] sm:$0xff pattern:$0x73625140]
      %2407 = vst [vmem:[#allocation1] ss:$4 sm:$0xff] %v2215
      %2408 = vst [vmem:[%s2347] ss:$4 sm:$0xff] %v2220
      %2409 = vst [vmem:[%s2349] ss:$4 sm:$0xff] %v2224
      %2410 = vst [vmem:[%s2351] ss:$4 sm:$0xff] %v2228
      %2411 = vst [vmem:[%s2353] ss:$4 sm:$0xff] %v2233
      %2412 = vst [vmem:[%s2355] ss:$4 sm:$0xff] %v2238
      %2413 = vst [vmem:[%s2357] ss:$4 sm:$0xff] %v2242
      %2414 = vst [vmem:[%s2359] ss:$4 sm:$0xff] %v2246
      %v2415 = vld.sshfl [vmem:[#allocation1] sm:$0xff pattern:$0x73625140]
      %v2416 = vld.sshfl [vmem:[#allocation1 + $0x20] sm:$0xff pattern:$0x73625140]
      %2417 = vst [vmem:[#allocation1] ss:$4 sm:$0xff] %v2251
      %2418 = vst [vmem:[%s2347] ss:$4 sm:$0xff] %v2256
      %2419 = vst [vmem:[%s2349] ss:$4 sm:$0xff] %v2260
      %2420 = vst [vmem:[%s2351] ss:$4 sm:$0xff] %v2264
      %2421 = vst [vmem:[%s2353] ss:$4 sm:$0xff] %v2269
      %2422 = vst [vmem:[%s2355] ss:$4 sm:$0xff] %v2274
      %2423 = vst [vmem:[%s2357] ss:$4 sm:$0xff] %v2278
      %2424 = vst [vmem:[%s2359] ss:$4 sm:$0xff] %v2282
      %v2425 = vld.sshfl [vmem:[#allocation1] sm:$0xff pattern:$0x73625140]
      %v2426 = vld.sshfl [vmem:[#allocation1 + $0x20] sm:$0xff pattern:$0x73625140]
      %2427 = vst [vmem:[#allocation1] ss:$4 sm:$0xff] %v2287
      %2428 = vst [vmem:[%s2347] ss:$4 sm:$0xff] %v2292
      %2429 = vst [vmem:[%s2349] ss:$4 sm:$0xff] %v2296
      %2430 = vst [vmem:[%s2351] ss:$4 sm:$0xff] %v2300
      %2431 = vst [vmem:[%s2353] ss:$4 sm:$0xff] %v2305
      %v2432 = vld.sshfl [vmem:[#allocation1] sm:$0xff pattern:$0x73625140]
      %v2433 = vld.sshfl [vmem:[#allocation1 + $0x20] sm:$0xff pattern:$0x73625140]
      %v2452 = vadd.f32 %v2328, %v2361
      %v2453 = vadd.f32 %v2329, %v2362
      %v2454 = vadd.f32 %v2330, %v2371
      %v2455 = vadd.f32 %v2331, %v2372
      %v2456 = vadd.f32 %v2332, %v2378
      %v2457 = vadd.f32 %v2333, %v2379
      %v2458 = vadd.f32 %v2334, %v2388
      %v2459 = vadd.f32 %v2335, %v2389
      %v2460 = vadd.f32 %v2336, %v2398
      %v2461 = vadd.f32 %v2337, %v2399
      %v2462 = vadd.f32 %v2338, %v2405
      %v2463 = vadd.f32 %v2339, %v2406
      %v2464 = vadd.f32 %v2340, %v2415
      %v2465 = vadd.f32 %v2341, %v2416
      %v2466 = vadd.f32 %v2342, %v2425
      %v2467 = vadd.f32 %v2343, %v2426
      %v2468 = vadd.f32 %v2344, %v2432
      %v2469 = vadd.f32 %v2345, %v2433
      %2470 = vst.msk [vmem:[#allocation3] sm:$0xff] %vm643, %v2452
      %2471 = vst.msk [vmem:[#allocation3 + $0x8] sm:$0xff] %vm643, %v2453
      %2472 = vst.msk [vmem:[#allocation3 + $0x10] sm:$0xff] %vm643, %v2454
      %2473 = vst.msk [vmem:[#allocation3 + $0x18] sm:$0xff] %vm643, %v2455
      %2474 = vst.msk [vmem:[#allocation3 + $0x20] sm:$0xff] %vm643, %v2456
      %2475 = vst.msk [vmem:[#allocation3 + $0x28] sm:$0x3] %vm649, %v2457
      %2476 = vst.msk [vmem:[#allocation3 + $0x38] sm:$0xff] %vm643, %v2458
      %2477 = vst.msk [vmem:[#allocation3 + $0x40] sm:$0xff] %vm643, %v2459
      %2478 = vst.msk [vmem:[#allocation3 + $0x48] sm:$0xff] %vm643, %v2460
      %2479 = vst.msk [vmem:[#allocation3 + $0x50] sm:$0xff] %vm643, %v2461
      %2480 = vst.msk [vmem:[#allocation3 + $0x58] sm:$0xff] %vm643, %v2462
      %2481 = vst.msk [vmem:[#allocation3 + $0x60] sm:$0x3] %vm649, %v2463
      %2482 = vst.msk [vmem:[#allocation3 + $0x70] sm:$0xff] %vm643, %v2464
      %2483 = vst.msk [vmem:[#allocation3 + $0x78] sm:$0xff] %vm643, %v2465
      %2484 = vst.msk [vmem:[#allocation3 + $0x80] sm:$0xff] %vm643, %v2466
      %2485 = vst.msk [vmem:[#allocation3 + $0x88] sm:$0xff] %vm643, %v2467
      %2486 = vst.msk [vmem:[#allocation3 + $0x90] sm:$0xff] %vm643, %v2468
      %2487 = vst.msk [vmem:[#allocation3 + $0x98] sm:$0x3] %vm649, %v2469
      %v2488 = vld [vmem:[#allocation3 + $0x1] sm:$0xff]
      %v2489 = vld [vmem:[#allocation3 + $0x9] sm:$0xff]
      %v2490 = vld [vmem:[#allocation3 + $0x11] sm:$0xff]
      %v2491 = vld [vmem:[#allocation3 + $0x19] sm:$0xff]
      %v2492 = vld [vmem:[#allocation3 + $0x21] sm:$0xff]
      %v2493 = vld [vmem:[#allocation3 + $0x29] sm:$0x3]
      %v2494 = vld [vmem:[#allocation3 + $0x39] sm:$0xff]
      %v2495 = vld [vmem:[#allocation3 + $0x41] sm:$0xff]
      %v2496 = vld [vmem:[#allocation3 + $0x49] sm:$0xff]
      %v2497 = vld [vmem:[#allocation3 + $0x51] sm:$0xff]
      %v2498 = vld [vmem:[#allocation3 + $0x59] sm:$0xff]
      %v2499 = vld [vmem:[#allocation3 + $0x61] sm:$0x3]
      %v2500 = vld [vmem:[#allocation3 + $0x71] sm:$0xff]
      %v2501 = vld [vmem:[#allocation3 + $0x79] sm:$0xff]
      %v2502 = vld [vmem:[#allocation3 + $0x81] sm:$0xff]
      %v2503 = vld [vmem:[#allocation3 + $0x89] sm:$0xff]
      %v2504 = vld [vmem:[#allocation3 + $0x91] sm:$0xff]
      %v2505 = vld [vmem:[#allocation3 + $0x99] sm:$0x3]
      %2506 = vst [vmem:[#allocation1] ss:$4 sm:$0xff] %v2023
      %s2507 = scalar_lea.vmem [#allocation1], 1
      %2508 = vst [vmem:[%s2507] ss:$4 sm:$0xff] %v2030
      %s2509 = scalar_lea.vmem [#allocation1], 2
      %2510 = vst [vmem:[%s2509] ss:$4 sm:$0xff] %v2035
      %s2511 = scalar_lea.vmem [#allocation1], 3
      %2512 = vst [vmem:[%s2511] ss:$4 sm:$0xff] %v2040
      %s2513 = scalar_lea.vmem [#allocation1], 32
      %2514 = vst [vmem:[%s2513] ss:$4 sm:$0xff] %v2044
      %s2515 = scalar_lea.vmem [#allocation1], 33
      %2516 = vst [vmem:[%s2515] ss:$4 sm:$0xff] %v2048
      %s2517 = scalar_lea.vmem [#allocation1], 34
      %2518 = vst [vmem:[%s2517] ss:$4 sm:$0xff] %v2053
      %s2519 = scalar_lea.vmem [#allocation1], 35
      %2520 = vst [vmem:[%s2519] ss:$4 sm:$0xff] %v2058
      %v2521 = vld.sshfl [vmem:[#allocation1] sm:$0xff pattern:$0x73625140]
      %v2522 = vld.sshfl [vmem:[#allocation1 + $0x20] sm:$0xff pattern:$0x73625140]
      %2523 = vst [vmem:[#allocation1] ss:$4 sm:$0xff] %v2062
      %2524 = vst [vmem:[%s2507] ss:$4 sm:$0xff] %v2066
      %2525 = vst [vmem:[%s2509] ss:$4 sm:$0xff] %v2071
      %2526 = vst [vmem:[%s2511] ss:$4 sm:$0xff] %v2076
      %2527 = vst [vmem:[%s2513] ss:$4 sm:$0xff] %v2080
      %2528 = vst [vmem:[%s2515] ss:$4 sm:$0xff] %v2084
      %2529 = vst [vmem:[%s2517] ss:$4 sm:$0xff] %v2089
      %2530 = vst [vmem:[%s2519] ss:$4 sm:$0xff] %v2094
      %v2531 = vld.sshfl [vmem:[#allocation1] sm:$0xff pattern:$0x73625140]
      %v2532 = vld.sshfl [vmem:[#allocation1 + $0x20] sm:$0xff pattern:$0x73625140]
      %2533 = vst [vmem:[#allocation1] ss:$4 sm:$0xff] %v2098
      %2534 = vst [vmem:[%s2507] ss:$4 sm:$0xff] %v2102
      %2535 = vst [vmem:[%s2509] ss:$4 sm:$0xff] %v2107
      %2536 = vst [vmem:[%s2511] ss:$4 sm:$0xff] %v2112
      %2537 = vst [vmem:[%s2513] ss:$4 sm:$0xff] %v2116
      %v2538 = vld.sshfl [vmem:[#allocation1] sm:$0xff pattern:$0x73625140]
      %v2539 = vld.sshfl [vmem:[#allocation1 + $0x20] sm:$0xff pattern:$0x73625140]
      %2540 = vst [vmem:[#allocation1] ss:$4 sm:$0xff] %v2120
      %2541 = vst [vmem:[%s2507] ss:$4 sm:$0xff] %v2125
      %2542 = vst [vmem:[%s2509] ss:$4 sm:$0xff] %v2130
      %2543 = vst [vmem:[%s2511] ss:$4 sm:$0xff] %v2134
      %2544 = vst [vmem:[%s2513] ss:$4 sm:$0xff] %v2138
      %2545 = vst [vmem:[%s2515] ss:$4 sm:$0xff] %v2143
      %2546 = vst [vmem:[%s2517] ss:$4 sm:$0xff] %v2148
      %2547 = vst [vmem:[%s2519] ss:$4 sm:$0xff] %v2152
      %v2548 = vld.sshfl [vmem:[#allocation1] sm:$0xff pattern:$0x73625140]
      %v2549 = vld.sshfl [vmem:[#allocation1 + $0x20] sm:$0xff pattern:$0x73625140]
      %2550 = vst [vmem:[#allocation1] ss:$4 sm:$0xff] %v2156
      %2551 = vst [vmem:[%s2507] ss:$4 sm:$0xff] %v2161
      %2552 = vst [vmem:[%s2509] ss:$4 sm:$0xff] %v2166
      %2553 = vst [vmem:[%s2511] ss:$4 sm:$0xff] %v2170
      %2554 = vst [vmem:[%s2513] ss:$4 sm:$0xff] %v2174
      %2555 = vst [vmem:[%s2515] ss:$4 sm:$0xff] %v2179
      %2556 = vst [vmem:[%s2517] ss:$4 sm:$0xff] %v2184
      %2557 = vst [vmem:[%s2519] ss:$4 sm:$0xff] %v2188
      %v2558 = vld.sshfl [vmem:[#allocation1] sm:$0xff pattern:$0x73625140]
      %v2559 = vld.sshfl [vmem:[#allocation1 + $0x20] sm:$0xff pattern:$0x73625140]
      %2560 = vst [vmem:[#allocation1] ss:$4 sm:$0xff] %v2192
      %2561 = vst [vmem:[%s2507] ss:$4 sm:$0xff] %v2197
      %2562 = vst [vmem:[%s2509] ss:$4 sm:$0xff] %v2202
      %2563 = vst [vmem:[%s2511] ss:$4 sm:$0xff] %v2206
      %2564 = vst [vmem:[%s2513] ss:$4 sm:$0xff] %v2210
      %v2565 = vld.sshfl [vmem:[#allocation1] sm:$0xff pattern:$0x73625140]
      %v2566 = vld.sshfl [vmem:[#allocation1 + $0x20] sm:$0xff pattern:$0x73625140]
      %2567 = vst [vmem:[#allocation1] ss:$4 sm:$0xff] %v2215
      %2568 = vst [vmem:[%s2507] ss:$4 sm:$0xff] %v2220
      %2569 = vst [vmem:[%s2509] ss:$4 sm:$0xff] %v2224
      %2570 = vst [vmem:[%s2511] ss:$4 sm:$0xff] %v2228
      %2571 = vst [vmem:[%s2513] ss:$4 sm:$0xff] %v2233
      %2572 = vst [vmem:[%s2515] ss:$4 sm:$0xff] %v2238
      %2573 = vst [vmem:[%s2517] ss:$4 sm:$0xff] %v2242
      %2574 = vst [vmem:[%s2519] ss:$4 sm:$0xff] %v2246
      %v2575 = vld.sshfl [vmem:[#allocation1] sm:$0xff pattern:$0x73625140]
      %v2576 = vld.sshfl [vmem:[#allocation1 + $0x20] sm:$0xff pattern:$0x73625140]
      %2577 = vst [vmem:[#allocation1] ss:$4 sm:$0xff] %v2251
      %2578 = vst [vmem:[%s2507] ss:$4 sm:$0xff] %v2256
      %2579 = vst [vmem:[%s2509] ss:$4 sm:$0xff] %v2260
      %2580 = vst [vmem:[%s2511] ss:$4 sm:$0xff] %v2264
      %2581 = vst [vmem:[%s2513] ss:$4 sm:$0xff] %v2269
      %2582 = vst [vmem:[%s2515] ss:$4 sm:$0xff] %v2274
      %2583 = vst [vmem:[%s2517] ss:$4 sm:$0xff] %v2278
      %2584 = vst [vmem:[%s2519] ss:$4 sm:$0xff] %v2282
      %v2585 = vld.sshfl [vmem:[#allocation1] sm:$0xff pattern:$0x73625140]
      %v2586 = vld.sshfl [vmem:[#allocation1 + $0x20] sm:$0xff pattern:$0x73625140]
      %2587 = vst [vmem:[#allocation1] ss:$4 sm:$0xff] %v2287
      %2588 = vst [vmem:[%s2507] ss:$4 sm:$0xff] %v2292
      %2589 = vst [vmem:[%s2509] ss:$4 sm:$0xff] %v2296
      %2590 = vst [vmem:[%s2511] ss:$4 sm:$0xff] %v2300
      %2591 = vst [vmem:[%s2513] ss:$4 sm:$0xff] %v2305
      %v2592 = vld.sshfl [vmem:[#allocation1] sm:$0xff pattern:$0x73625140]
      %v2593 = vld.sshfl [vmem:[#allocation1 + $0x20] sm:$0xff pattern:$0x73625140]
      %2594 = vrot.lane.b32.xlu0 %v2521, 64
      %v2595 = vpop.permute.xlu0 %2594
      %2596 = vrot.lane.b32.xlu0 %v2522, 64
      %v2597 = vpop.permute.xlu0 %2596
      %2598 = vrot.lane.b32.xlu0 %v2531, 64
      %v2599 = vpop.permute.xlu0 %2598
      %2600 = vrot.lane.b32.xlu0 %v2532, 64
      %v2601 = vpop.permute.xlu0 %2600
      %2602 = vrot.lane.b32.xlu0 %v2538, 64
      %v2603 = vpop.permute.xlu0 %2602
      %2604 = vrot.lane.b32.xlu0 %v2539, 64
      %v2605 = vpop.permute.xlu0 %2604
      %2606 = vrot.lane.b32.xlu0 %v2548, 64
      %v2607 = vpop.permute.xlu0 %2606
      %2608 = vrot.lane.b32.xlu0 %v2549, 64
      %v2609 = vpop.permute.xlu0 %2608
      %2610 = vrot.lane.b32.xlu0 %v2558, 64
      %v2611 = vpop.permute.xlu0 %2610
      %2612 = vrot.lane.b32.xlu0 %v2559, 64
      %v2613 = vpop.permute.xlu0 %2612
      %2614 = vrot.lane.b32.xlu0 %v2565, 64
      %v2615 = vpop.permute.xlu0 %2614
      %2616 = vrot.lane.b32.xlu0 %v2566, 64
      %v2617 = vpop.permute.xlu0 %2616
      %2618 = vrot.lane.b32.xlu0 %v2575, 64
      %v2619 = vpop.permute.xlu0 %2618
      %2620 = vrot.lane.b32.xlu0 %v2576, 64
      %v2621 = vpop.permute.xlu0 %2620
      %2622 = vrot.lane.b32.xlu0 %v2585, 64
      %v2623 = vpop.permute.xlu0 %2622
      %2624 = vrot.lane.b32.xlu0 %v2586, 64
      %v2625 = vpop.permute.xlu0 %2624
      %2626 = vrot.lane.b32.xlu0 %v2592, 64
      %v2627 = vpop.permute.xlu0 %2626
      %2628 = vrot.lane.b32.xlu0 %v2593, 64
      %v2629 = vpop.permute.xlu0 %2628
      %v2648 = vadd.f32 %v2488, %v2595
      %v2649 = vadd.f32 %v2489, %v2597
      %v2650 = vadd.f32 %v2490, %v2599
      %v2651 = vadd.f32 %v2491, %v2601
      %v2652 = vadd.f32 %v2492, %v2603
      %v2653 = vadd.f32 %v2493, %v2605
      %v2654 = vadd.f32 %v2494, %v2607
      %v2655 = vadd.f32 %v2495, %v2609
      %v2656 = vadd.f32 %v2496, %v2611
      %v2657 = vadd.f32 %v2497, %v2613
      %v2658 = vadd.f32 %v2498, %v2615
      %v2659 = vadd.f32 %v2499, %v2617
      %v2660 = vadd.f32 %v2500, %v2619
      %v2661 = vadd.f32 %v2501, %v2621
      %v2662 = vadd.f32 %v2502, %v2623
      %v2663 = vadd.f32 %v2503, %v2625
      %v2664 = vadd.f32 %v2504, %v2627
      %v2665 = vadd.f32 %v2505, %v2629
      %2666 = vst.msk [vmem:[#allocation3 + $0x1] sm:$0xff] %vm643, %v2648
      %2667 = vst.msk [vmem:[#allocation3 + $0x9] sm:$0xff] %vm643, %v2649
      %2668 = vst.msk [vmem:[#allocation3 + $0x11] sm:$0xff] %vm643, %v2650
      %2669 = vst.msk [vmem:[#allocation3 + $0x19] sm:$0xff] %vm643, %v2651
      %2670 = vst.msk [vmem:[#allocation3 + $0x21] sm:$0xff] %vm643, %v2652
      %2671 = vst.msk [vmem:[#allocation3 + $0x29] sm:$0x3] %vm649, %v2653
      %2672 = vst.msk [vmem:[#allocation3 + $0x39] sm:$0xff] %vm643, %v2654
      %2673 = vst.msk [vmem:[#allocation3 + $0x41] sm:$0xff] %vm643, %v2655
      %2674 = vst.msk [vmem:[#allocation3 + $0x49] sm:$0xff] %vm643, %v2656
      %2675 = vst.msk [vmem:[#allocation3 + $0x51] sm:$0xff] %vm643, %v2657
      %2676 = vst.msk [vmem:[#allocation3 + $0x59] sm:$0xff] %vm643, %v2658
      %2677 = vst.msk [vmem:[#allocation3 + $0x61] sm:$0x3] %vm649, %v2659
      %2678 = vst.msk [vmem:[#allocation3 + $0x71] sm:$0xff] %vm643, %v2660
      %2679 = vst.msk [vmem:[#allocation3 + $0x79] sm:$0xff] %vm643, %v2661
      %2680 = vst.msk [vmem:[#allocation3 + $0x81] sm:$0xff] %vm643, %v2662
      %2681 = vst.msk [vmem:[#allocation3 + $0x89] sm:$0xff] %vm643, %v2663
      %2682 = vst.msk [vmem:[#allocation3 + $0x91] sm:$0xff] %vm643, %v2664
      %2683 = vst.msk [vmem:[#allocation3 + $0x99] sm:$0x3] %vm649, %v2665
      %v2684 = vld [vmem:[#allocation3 + $0x2] sm:$0xff]
      %v2685 = vld [vmem:[#allocation3 + $0xa] sm:$0xff]
      %v2686 = vld [vmem:[#allocation3 + $0x12] sm:$0xff]
      %v2687 = vld [vmem:[#allocation3 + $0x1a] sm:$0xff]
      %v2688 = vld [vmem:[#allocation3 + $0x22] sm:$0xff]
      %v2689 = vld [vmem:[#allocation3 + $0x2a] sm:$0x3]
      %v2690 = vld [vmem:[#allocation3 + $0x3a] sm:$0xff]
      %v2691 = vld [vmem:[#allocation3 + $0x42] sm:$0xff]
      %v2692 = vld [vmem:[#allocation3 + $0x4a] sm:$0xff]
      %v2693 = vld [vmem:[#allocation3 + $0x52] sm:$0xff]
      %v2694 = vld [vmem:[#allocation3 + $0x5a] sm:$0xff]
      %v2695 = vld [vmem:[#allocation3 + $0x62] sm:$0x3]
      %v2696 = vld [vmem:[#allocation3 + $0x72] sm:$0xff]
      %v2697 = vld [vmem:[#allocation3 + $0x7a] sm:$0xff]
      %v2698 = vld [vmem:[#allocation3 + $0x82] sm:$0xff]
      %v2699 = vld [vmem:[#allocation3 + $0x8a] sm:$0xff]
      %v2700 = vld [vmem:[#allocation3 + $0x92] sm:$0xff]
      %v2701 = vld [vmem:[#allocation3 + $0x9a] sm:$0x3]
      %2702 = vst [vmem:[#allocation1] ss:$4 sm:$0xff] %v2023
      %s2703 = scalar_lea.vmem [#allocation1], 1
      %2704 = vst [vmem:[%s2703] ss:$4 sm:$0xff] %v2030
      %s2705 = scalar_lea.vmem [#allocation1], 2
      %2706 = vst [vmem:[%s2705] ss:$4 sm:$0xff] %v2035
      %s2707 = scalar_lea.vmem [#allocation1], 3
      %2708 = vst [vmem:[%s2707] ss:$4 sm:$0xff] %v2040
      %s2709 = scalar_lea.vmem [#allocation1], 32
      %2710 = vst [vmem:[%s2709] ss:$4 sm:$0xff] %v2044
      %s2711 = scalar_lea.vmem [#allocation1], 33
      %2712 = vst [vmem:[%s2711] ss:$4 sm:$0xff] %v2048
      %s2713 = scalar_lea.vmem [#allocation1], 34
      %2714 = vst [vmem:[%s2713] ss:$4 sm:$0xff] %v2053
      %s2715 = scalar_lea.vmem [#allocation1], 35
      %2716 = vst [vmem:[%s2715] ss:$4 sm:$0xff] %v2058
      %v2717 = vld.sshfl [vmem:[#allocation1 + $0x8] sm:$0xff pattern:$0x73625140]
      %v2718 = vld.sshfl [vmem:[#allocation1 + $0x28] sm:$0xff pattern:$0x73625140]
      %2719 = vst [vmem:[#allocation1] ss:$4 sm:$0xff] %v2062
      %2720 = vst [vmem:[%s2703] ss:$4 sm:$0xff] %v2066
      %2721 = vst [vmem:[%s2705] ss:$4 sm:$0xff] %v2071
      %2722 = vst [vmem:[%s2707] ss:$4 sm:$0xff] %v2076
      %2723 = vst [vmem:[%s2709] ss:$4 sm:$0xff] %v2080
      %2724 = vst [vmem:[%s2711] ss:$4 sm:$0xff] %v2084
      %2725 = vst [vmem:[%s2713] ss:$4 sm:$0xff] %v2089
      %2726 = vst [vmem:[%s2715] ss:$4 sm:$0xff] %v2094
      %v2727 = vld.sshfl [vmem:[#allocation1 + $0x8] sm:$0xff pattern:$0x73625140]
      %v2728 = vld.sshfl [vmem:[#allocation1 + $0x28] sm:$0xff pattern:$0x73625140]
      %2729 = vst [vmem:[#allocation1] ss:$4 sm:$0xff] %v2098
      %2730 = vst [vmem:[%s2703] ss:$4 sm:$0xff] %v2102
      %2731 = vst [vmem:[%s2705] ss:$4 sm:$0xff] %v2107
      %2732 = vst [vmem:[%s2707] ss:$4 sm:$0xff] %v2112
      %2733 = vst [vmem:[%s2709] ss:$4 sm:$0xff] %v2116
      %v2734 = vld.sshfl [vmem:[#allocation1 + $0x8] sm:$0xff pattern:$0x73625140]
      %v2735 = vld.sshfl [vmem:[#allocation1 + $0x28] sm:$0xff pattern:$0x73625140]
      %2736 = vst [vmem:[#allocation1] ss:$4 sm:$0xff] %v2120
      %2737 = vst [vmem:[%s2703] ss:$4 sm:$0xff] %v2125
      %2738 = vst [vmem:[%s2705] ss:$4 sm:$0xff] %v2130
      %2739 = vst [vmem:[%s2707] ss:$4 sm:$0xff] %v2134
      %2740 = vst [vmem:[%s2709] ss:$4 sm:$0xff] %v2138
      %2741 = vst [vmem:[%s2711] ss:$4 sm:$0xff] %v2143
      %2742 = vst [vmem:[%s2713] ss:$4 sm:$0xff] %v2148
      %2743 = vst [vmem:[%s2715] ss:$4 sm:$0xff] %v2152
      %v2744 = vld.sshfl [vmem:[#allocation1 + $0x8] sm:$0xff pattern:$0x73625140]
      %v2745 = vld.sshfl [vmem:[#allocation1 + $0x28] sm:$0xff pattern:$0x73625140]
      %2746 = vst [vmem:[#allocation1] ss:$4 sm:$0xff] %v2156
      %2747 = vst [vmem:[%s2703] ss:$4 sm:$0xff] %v2161
      %2748 = vst [vmem:[%s2705] ss:$4 sm:$0xff] %v2166
      %2749 = vst [vmem:[%s2707] ss:$4 sm:$0xff] %v2170
      %2750 = vst [vmem:[%s2709] ss:$4 sm:$0xff] %v2174
      %2751 = vst [vmem:[%s2711] ss:$4 sm:$0xff] %v2179
      %2752 = vst [vmem:[%s2713] ss:$4 sm:$0xff] %v2184
      %2753 = vst [vmem:[%s2715] ss:$4 sm:$0xff] %v2188
      %v2754 = vld.sshfl [vmem:[#allocation1 + $0x8] sm:$0xff pattern:$0x73625140]
      %v2755 = vld.sshfl [vmem:[#allocation1 + $0x28] sm:$0xff pattern:$0x73625140]
      %2756 = vst [vmem:[#allocation1] ss:$4 sm:$0xff] %v2192
      %2757 = vst [vmem:[%s2703] ss:$4 sm:$0xff] %v2197
      %2758 = vst [vmem:[%s2705] ss:$4 sm:$0xff] %v2202
      %2759 = vst [vmem:[%s2707] ss:$4 sm:$0xff] %v2206
      %2760 = vst [vmem:[%s2709] ss:$4 sm:$0xff] %v2210
      %v2761 = vld.sshfl [vmem:[#allocation1 + $0x8] sm:$0xff pattern:$0x73625140]
      %v2762 = vld.sshfl [vmem:[#allocation1 + $0x28] sm:$0xff pattern:$0x73625140]
      %2763 = vst [vmem:[#allocation1] ss:$4 sm:$0xff] %v2215
      %2764 = vst [vmem:[%s2703] ss:$4 sm:$0xff] %v2220
      %2765 = vst [vmem:[%s2705] ss:$4 sm:$0xff] %v2224
      %2766 = vst [vmem:[%s2707] ss:$4 sm:$0xff] %v2228
      %2767 = vst [vmem:[%s2709] ss:$4 sm:$0xff] %v2233
      %2768 = vst [vmem:[%s2711] ss:$4 sm:$0xff] %v2238
      %2769 = vst [vmem:[%s2713] ss:$4 sm:$0xff] %v2242
      %2770 = vst [vmem:[%s2715] ss:$4 sm:$0xff] %v2246
      %v2771 = vld.sshfl [vmem:[#allocation1 + $0x8] sm:$0xff pattern:$0x73625140]
      %v2772 = vld.sshfl [vmem:[#allocation1 + $0x28] sm:$0xff pattern:$0x73625140]
      %2773 = vst [vmem:[#allocation1] ss:$4 sm:$0xff] %v2251
      %2774 = vst [vmem:[%s2703] ss:$4 sm:$0xff] %v2256
      %2775 = vst [vmem:[%s2705] ss:$4 sm:$0xff] %v2260
      %2776 = vst [vmem:[%s2707] ss:$4 sm:$0xff] %v2264
      %2777 = vst [vmem:[%s2709] ss:$4 sm:$0xff] %v2269
      %2778 = vst [vmem:[%s2711] ss:$4 sm:$0xff] %v2274
      %2779 = vst [vmem:[%s2713] ss:$4 sm:$0xff] %v2278
      %2780 = vst [vmem:[%s2715] ss:$4 sm:$0xff] %v2282
      %v2781 = vld.sshfl [vmem:[#allocation1 + $0x8] sm:$0xff pattern:$0x73625140]
      %v2782 = vld.sshfl [vmem:[#allocation1 + $0x28] sm:$0xff pattern:$0x73625140]
      %2783 = vst [vmem:[#allocation1] ss:$4 sm:$0xff] %v2287
      %2784 = vst [vmem:[%s2703] ss:$4 sm:$0xff] %v2292
      %2785 = vst [vmem:[%s2705] ss:$4 sm:$0xff] %v2296
      %2786 = vst [vmem:[%s2707] ss:$4 sm:$0xff] %v2300
      %2787 = vst [vmem:[%s2709] ss:$4 sm:$0xff] %v2305
      %v2788 = vld.sshfl [vmem:[#allocation1 + $0x8] sm:$0xff pattern:$0x73625140]
      %v2789 = vld.sshfl [vmem:[#allocation1 + $0x28] sm:$0xff pattern:$0x73625140]
      %v2808 = vadd.f32 %v2684, %v2717
      %v2809 = vadd.f32 %v2685, %v2718
      %v2810 = vadd.f32 %v2686, %v2727
      %v2811 = vadd.f32 %v2687, %v2728
      %v2812 = vadd.f32 %v2688, %v2734
      %v2813 = vadd.f32 %v2689, %v2735
      %v2814 = vadd.f32 %v2690, %v2744
      %v2815 = vadd.f32 %v2691, %v2745
      %v2816 = vadd.f32 %v2692, %v2754
      %v2817 = vadd.f32 %v2693, %v2755
      %v2818 = vadd.f32 %v2694, %v2761
      %v2819 = vadd.f32 %v2695, %v2762
      %v2820 = vadd.f32 %v2696, %v2771
      %v2821 = vadd.f32 %v2697, %v2772
      %v2822 = vadd.f32 %v2698, %v2781
      %v2823 = vadd.f32 %v2699, %v2782
      %v2824 = vadd.f32 %v2700, %v2788
      %v2825 = vadd.f32 %v2701, %v2789
      %2826 = vst.msk [vmem:[#allocation3 + $0x2] sm:$0xff] %vm643, %v2808
      %2827 = vst.msk [vmem:[#allocation3 + $0xa] sm:$0xff] %vm643, %v2809
      %2828 = vst.msk [vmem:[#allocation3 + $0x12] sm:$0xff] %vm643, %v2810
      %2829 = vst.msk [vmem:[#allocation3 + $0x1a] sm:$0xff] %vm643, %v2811
      %2830 = vst.msk [vmem:[#allocation3 + $0x22] sm:$0xff] %vm643, %v2812
      %2831 = vst.msk [vmem:[#allocation3 + $0x2a] sm:$0x3] %vm649, %v2813
      %2832 = vst.msk [vmem:[#allocation3 + $0x3a] sm:$0xff] %vm643, %v2814
      %2833 = vst.msk [vmem:[#allocation3 + $0x42] sm:$0xff] %vm643, %v2815
      %2834 = vst.msk [vmem:[#allocation3 + $0x4a] sm:$0xff] %vm643, %v2816
      %2835 = vst.msk [vmem:[#allocation3 + $0x52] sm:$0xff] %vm643, %v2817
      %2836 = vst.msk [vmem:[#allocation3 + $0x5a] sm:$0xff] %vm643, %v2818
      %2837 = vst.msk [vmem:[#allocation3 + $0x62] sm:$0x3] %vm649, %v2819
      %2838 = vst.msk [vmem:[#allocation3 + $0x72] sm:$0xff] %vm643, %v2820
      %2839 = vst.msk [vmem:[#allocation3 + $0x7a] sm:$0xff] %vm643, %v2821
      %2840 = vst.msk [vmem:[#allocation3 + $0x82] sm:$0xff] %vm643, %v2822
      %2841 = vst.msk [vmem:[#allocation3 + $0x8a] sm:$0xff] %vm643, %v2823
      %2842 = vst.msk [vmem:[#allocation3 + $0x92] sm:$0xff] %vm643, %v2824
      %2843 = vst.msk [vmem:[#allocation3 + $0x9a] sm:$0x3] %vm649, %v2825
      %v2844 = vld [vmem:[#allocation3 + $0x3] sm:$0xff]
      %v2845 = vld [vmem:[#allocation3 + $0xb] sm:$0xff]
      %v2846 = vld [vmem:[#allocation3 + $0x13] sm:$0xff]
      %v2847 = vld [vmem:[#allocation3 + $0x1b] sm:$0xff]
      %v2848 = vld [vmem:[#allocation3 + $0x23] sm:$0xff]
      %v2849 = vld [vmem:[#allocation3 + $0x2b] sm:$0x3]
      %v2850 = vld [vmem:[#allocation3 + $0x3b] sm:$0xff]
      %v2851 = vld [vmem:[#allocation3 + $0x43] sm:$0xff]
      %v2852 = vld [vmem:[#allocation3 + $0x4b] sm:$0xff]
      %v2853 = vld [vmem:[#allocation3 + $0x53] sm:$0xff]
      %v2854 = vld [vmem:[#allocation3 + $0x5b] sm:$0xff]
      %v2855 = vld [vmem:[#allocation3 + $0x63] sm:$0x3]
      %v2856 = vld [vmem:[#allocation3 + $0x73] sm:$0xff]
      %v2857 = vld [vmem:[#allocation3 + $0x7b] sm:$0xff]
      %v2858 = vld [vmem:[#allocation3 + $0x83] sm:$0xff]
      %v2859 = vld [vmem:[#allocation3 + $0x8b] sm:$0xff]
      %v2860 = vld [vmem:[#allocation3 + $0x93] sm:$0xff]
      %v2861 = vld [vmem:[#allocation3 + $0x9b] sm:$0x3]
      %2862 = vst [vmem:[#allocation1] ss:$4 sm:$0xff] %v2023
      %s2863 = scalar_lea.vmem [#allocation1], 1
      %2864 = vst [vmem:[%s2863] ss:$4 sm:$0xff] %v2030
      %s2865 = scalar_lea.vmem [#allocation1], 2
      %2866 = vst [vmem:[%s2865] ss:$4 sm:$0xff] %v2035
      %s2867 = scalar_lea.vmem [#allocation1], 3
      %2868 = vst [vmem:[%s2867] ss:$4 sm:$0xff] %v2040
      %s2869 = scalar_lea.vmem [#allocation1], 32
      %2870 = vst [vmem:[%s2869] ss:$4 sm:$0xff] %v2044
      %s2871 = scalar_lea.vmem [#allocation1], 33
      %2872 = vst [vmem:[%s2871] ss:$4 sm:$0xff] %v2048
      %s2873 = scalar_lea.vmem [#allocation1], 34
      %2874 = vst [vmem:[%s2873] ss:$4 sm:$0xff] %v2053
      %s2875 = scalar_lea.vmem [#allocation1], 35
      %2876 = vst [vmem:[%s2875] ss:$4 sm:$0xff] %v2058
      %v2877 = vld.sshfl [vmem:[#allocation1 + $0x8] sm:$0xff pattern:$0x73625140]
      %v2878 = vld.sshfl [vmem:[#allocation1 + $0x28] sm:$0xff pattern:$0x73625140]
      %2879 = vst [vmem:[#allocation1] ss:$4 sm:$0xff] %v2062
      %2880 = vst [vmem:[%s2863] ss:$4 sm:$0xff] %v2066
      %2881 = vst [vmem:[%s2865] ss:$4 sm:$0xff] %v2071
      %2882 = vst [vmem:[%s2867] ss:$4 sm:$0xff] %v2076
      %2883 = vst [vmem:[%s2869] ss:$4 sm:$0xff] %v2080
      %2884 = vst [vmem:[%s2871] ss:$4 sm:$0xff] %v2084
      %2885 = vst [vmem:[%s2873] ss:$4 sm:$0xff] %v2089
      %2886 = vst [vmem:[%s2875] ss:$4 sm:$0xff] %v2094
      %v2887 = vld.sshfl [vmem:[#allocation1 + $0x8] sm:$0xff pattern:$0x73625140]
      %v2888 = vld.sshfl [vmem:[#allocation1 + $0x28] sm:$0xff pattern:$0x73625140]
      %2889 = vst [vmem:[#allocation1] ss:$4 sm:$0xff] %v2098
      %2890 = vst [vmem:[%s2863] ss:$4 sm:$0xff] %v2102
      %2891 = vst [vmem:[%s2865] ss:$4 sm:$0xff] %v2107
      %2892 = vst [vmem:[%s2867] ss:$4 sm:$0xff] %v2112
      %2893 = vst [vmem:[%s2869] ss:$4 sm:$0xff] %v2116
      %v2894 = vld.sshfl [vmem:[#allocation1 + $0x8] sm:$0xff pattern:$0x73625140]
      %v2895 = vld.sshfl [vmem:[#allocation1 + $0x28] sm:$0xff pattern:$0x73625140]
      %2896 = vst [vmem:[#allocation1] ss:$4 sm:$0xff] %v2120
      %2897 = vst [vmem:[%s2863] ss:$4 sm:$0xff] %v2125
      %2898 = vst [vmem:[%s2865] ss:$4 sm:$0xff] %v2130
      %2899 = vst [vmem:[%s2867] ss:$4 sm:$0xff] %v2134
      %2900 = vst [vmem:[%s2869] ss:$4 sm:$0xff] %v2138
      %2901 = vst [vmem:[%s2871] ss:$4 sm:$0xff] %v2143
      %2902 = vst [vmem:[%s2873] ss:$4 sm:$0xff] %v2148
      %2903 = vst [vmem:[%s2875] ss:$4 sm:$0xff] %v2152
      %v2904 = vld.sshfl [vmem:[#allocation1 + $0x8] sm:$0xff pattern:$0x73625140]
      %v2905 = vld.sshfl [vmem:[#allocation1 + $0x28] sm:$0xff pattern:$0x73625140]
      %2906 = vst [vmem:[#allocation1] ss:$4 sm:$0xff] %v2156
      %2907 = vst [vmem:[%s2863] ss:$4 sm:$0xff] %v2161
      %2908 = vst [vmem:[%s2865] ss:$4 sm:$0xff] %v2166
      %2909 = vst [vmem:[%s2867] ss:$4 sm:$0xff] %v2170
      %2910 = vst [vmem:[%s2869] ss:$4 sm:$0xff] %v2174
      %2911 = vst [vmem:[%s2871] ss:$4 sm:$0xff] %v2179
      %2912 = vst [vmem:[%s2873] ss:$4 sm:$0xff] %v2184
      %2913 = vst [vmem:[%s2875] ss:$4 sm:$0xff] %v2188
      %v2914 = vld.sshfl [vmem:[#allocation1 + $0x8] sm:$0xff pattern:$0x73625140]
      %v2915 = vld.sshfl [vmem:[#allocation1 + $0x28] sm:$0xff pattern:$0x73625140]
      %2916 = vst [vmem:[#allocation1] ss:$4 sm:$0xff] %v2192
      %2917 = vst [vmem:[%s2863] ss:$4 sm:$0xff] %v2197
      %2918 = vst [vmem:[%s2865] ss:$4 sm:$0xff] %v2202
      %2919 = vst [vmem:[%s2867] ss:$4 sm:$0xff] %v2206
      %2920 = vst [vmem:[%s2869] ss:$4 sm:$0xff] %v2210
      %v2921 = vld.sshfl [vmem:[#allocation1 + $0x8] sm:$0xff pattern:$0x73625140]
      %v2922 = vld.sshfl [vmem:[#allocation1 + $0x28] sm:$0xff pattern:$0x73625140]
      %2923 = vst [vmem:[#allocation1] ss:$4 sm:$0xff] %v2215
      %2924 = vst [vmem:[%s2863] ss:$4 sm:$0xff] %v2220
      %2925 = vst [vmem:[%s2865] ss:$4 sm:$0xff] %v2224
      %2926 = vst [vmem:[%s2867] ss:$4 sm:$0xff] %v2228
      %2927 = vst [vmem:[%s2869] ss:$4 sm:$0xff] %v2233
      %2928 = vst [vmem:[%s2871] ss:$4 sm:$0xff] %v2238
      %2929 = vst [vmem:[%s2873] ss:$4 sm:$0xff] %v2242
      %2930 = vst [vmem:[%s2875] ss:$4 sm:$0xff] %v2246
      %v2931 = vld.sshfl [vmem:[#allocation1 + $0x8] sm:$0xff pattern:$0x73625140]
      %v2932 = vld.sshfl [vmem:[#allocation1 + $0x28] sm:$0xff pattern:$0x73625140]
      %2933 = vst [vmem:[#allocation1] ss:$4 sm:$0xff] %v2251
      %2934 = vst [vmem:[%s2863] ss:$4 sm:$0xff] %v2256
      %2935 = vst [vmem:[%s2865] ss:$4 sm:$0xff] %v2260
      %2936 = vst [vmem:[%s2867] ss:$4 sm:$0xff] %v2264
      %2937 = vst [vmem:[%s2869] ss:$4 sm:$0xff] %v2269
      %2938 = vst [vmem:[%s2871] ss:$4 sm:$0xff] %v2274
      %2939 = vst [vmem:[%s2873] ss:$4 sm:$0xff] %v2278
      %2940 = vst [vmem:[%s2875] ss:$4 sm:$0xff] %v2282
      %v2941 = vld.sshfl [vmem:[#allocation1 + $0x8] sm:$0xff pattern:$0x73625140]
      %v2942 = vld.sshfl [vmem:[#allocation1 + $0x28] sm:$0xff pattern:$0x73625140]
      %2943 = vst [vmem:[#allocation1] ss:$4 sm:$0xff] %v2287
      %2944 = vst [vmem:[%s2863] ss:$4 sm:$0xff] %v2292
      %2945 = vst [vmem:[%s2865] ss:$4 sm:$0xff] %v2296
      %2946 = vst [vmem:[%s2867] ss:$4 sm:$0xff] %v2300
      %2947 = vst [vmem:[%s2869] ss:$4 sm:$0xff] %v2305
      %v2948 = vld.sshfl [vmem:[#allocation1 + $0x8] sm:$0xff pattern:$0x73625140]
      %v2949 = vld.sshfl [vmem:[#allocation1 + $0x28] sm:$0xff pattern:$0x73625140]
      %2950 = vrot.lane.b32.xlu0 %v2877, 64
      %v2951 = vpop.permute.xlu0 %2950
      %2952 = vrot.lane.b32.xlu0 %v2878, 64
      %v2953 = vpop.permute.xlu0 %2952
      %2954 = vrot.lane.b32.xlu0 %v2887, 64
      %v2955 = vpop.permute.xlu0 %2954
      %2956 = vrot.lane.b32.xlu0 %v2888, 64
      %v2957 = vpop.permute.xlu0 %2956
      %2958 = vrot.lane.b32.xlu0 %v2894, 64
      %v2959 = vpop.permute.xlu0 %2958
      %2960 = vrot.lane.b32.xlu0 %v2895, 64
      %v2961 = vpop.permute.xlu0 %2960
      %2962 = vrot.lane.b32.xlu0 %v2904, 64
      %v2963 = vpop.permute.xlu0 %2962
      %2964 = vrot.lane.b32.xlu0 %v2905, 64
      %v2965 = vpop.permute.xlu0 %2964
      %2966 = vrot.lane.b32.xlu0 %v2914, 64
      %v2967 = vpop.permute.xlu0 %2966
      %2968 = vrot.lane.b32.xlu0 %v2915, 64
      %v2969 = vpop.permute.xlu0 %2968
      %2970 = vrot.lane.b32.xlu0 %v2921, 64
      %v2971 = vpop.permute.xlu0 %2970
      %2972 = vrot.lane.b32.xlu0 %v2922, 64
      %v2973 = vpop.permute.xlu0 %2972
      %2974 = vrot.lane.b32.xlu0 %v2931, 64
      %v2975 = vpop.permute.xlu0 %2974
      %2976 = vrot.lane.b32.xlu0 %v2932, 64
      %v2977 = vpop.permute.xlu0 %2976
      %2978 = vrot.lane.b32.xlu0 %v2941, 64
      %v2979 = vpop.permute.xlu0 %2978
      %2980 = vrot.lane.b32.xlu0 %v2942, 64
      %v2981 = vpop.permute.xlu0 %2980
      %2982 = vrot.lane.b32.xlu0 %v2948, 64
      %v2983 = vpop.permute.xlu0 %2982
      %2984 = vrot.lane.b32.xlu0 %v2949, 64
      %v2985 = vpop.permute.xlu0 %2984
      %v3004 = vadd.f32 %v2844, %v2951
      %v3005 = vadd.f32 %v2845, %v2953
      %v3006 = vadd.f32 %v2846, %v2955
      %v3007 = vadd.f32 %v2847, %v2957
      %v3008 = vadd.f32 %v2848, %v2959
      %v3009 = vadd.f32 %v2849, %v2961
      %v3010 = vadd.f32 %v2850, %v2963
      %v3011 = vadd.f32 %v2851, %v2965
      %v3012 = vadd.f32 %v2852, %v2967
      %v3013 = vadd.f32 %v2853, %v2969
      %v3014 = vadd.f32 %v2854, %v2971
      %v3015 = vadd.f32 %v2855, %v2973
      %v3016 = vadd.f32 %v2856, %v2975
      %v3017 = vadd.f32 %v2857, %v2977
      %v3018 = vadd.f32 %v2858, %v2979
      %v3019 = vadd.f32 %v2859, %v2981
      %v3020 = vadd.f32 %v2860, %v2983
      %v3021 = vadd.f32 %v2861, %v2985
      %3022 = vst.msk [vmem:[#allocation3 + $0x3] sm:$0xff] %vm643, %v3004
      %3023 = vst.msk [vmem:[#allocation3 + $0xb] sm:$0xff] %vm643, %v3005
      %3024 = vst.msk [vmem:[#allocation3 + $0x13] sm:$0xff] %vm643, %v3006
      %3025 = vst.msk [vmem:[#allocation3 + $0x1b] sm:$0xff] %vm643, %v3007
      %3026 = vst.msk [vmem:[#allocation3 + $0x23] sm:$0xff] %vm643, %v3008
      %3027 = vst.msk [vmem:[#allocation3 + $0x2b] sm:$0x3] %vm649, %v3009
      %3028 = vst.msk [vmem:[#allocation3 + $0x3b] sm:$0xff] %vm643, %v3010
      %3029 = vst.msk [vmem:[#allocation3 + $0x43] sm:$0xff] %vm643, %v3011
      %3030 = vst.msk [vmem:[#allocation3 + $0x4b] sm:$0xff] %vm643, %v3012
      %3031 = vst.msk [vmem:[#allocation3 + $0x53] sm:$0xff] %vm643, %v3013
      %3032 = vst.msk [vmem:[#allocation3 + $0x5b] sm:$0xff] %vm643, %v3014
      %3033 = vst.msk [vmem:[#allocation3 + $0x63] sm:$0x3] %vm649, %v3015
      %3034 = vst.msk [vmem:[#allocation3 + $0x73] sm:$0xff] %vm643, %v3016
      %3035 = vst.msk [vmem:[#allocation3 + $0x7b] sm:$0xff] %vm643, %v3017
      %3036 = vst.msk [vmem:[#allocation3 + $0x83] sm:$0xff] %vm643, %v3018
      %3037 = vst.msk [vmem:[#allocation3 + $0x8b] sm:$0xff] %vm643, %v3019
      %3038 = vst.msk [vmem:[#allocation3 + $0x93] sm:$0xff] %vm643, %v3020
      %3039 = vst.msk [vmem:[#allocation3 + $0x9b] sm:$0x3] %vm649, %v3021
      %v3040 = vld [vmem:[#allocation3 + $0x4] sm:$0xff]
      %v3041 = vld [vmem:[#allocation3 + $0xc] sm:$0xff]
      %v3042 = vld [vmem:[#allocation3 + $0x14] sm:$0xff]
      %v3043 = vld [vmem:[#allocation3 + $0x1c] sm:$0xff]
      %v3044 = vld [vmem:[#allocation3 + $0x24] sm:$0xff]
      %v3045 = vld [vmem:[#allocation3 + $0x2c] sm:$0x3]
      %v3046 = vld [vmem:[#allocation3 + $0x3c] sm:$0xff]
      %v3047 = vld [vmem:[#allocation3 + $0x44] sm:$0xff]
      %v3048 = vld [vmem:[#allocation3 + $0x4c] sm:$0xff]
      %v3049 = vld [vmem:[#allocation3 + $0x54] sm:$0xff]
      %v3050 = vld [vmem:[#allocation3 + $0x5c] sm:$0xff]
      %v3051 = vld [vmem:[#allocation3 + $0x64] sm:$0x3]
      %v3052 = vld [vmem:[#allocation3 + $0x74] sm:$0xff]
      %v3053 = vld [vmem:[#allocation3 + $0x7c] sm:$0xff]
      %v3054 = vld [vmem:[#allocation3 + $0x84] sm:$0xff]
      %v3055 = vld [vmem:[#allocation3 + $0x8c] sm:$0xff]
      %v3056 = vld [vmem:[#allocation3 + $0x94] sm:$0xff]
      %v3057 = vld [vmem:[#allocation3 + $0x9c] sm:$0x3]
      %3058 = vst [vmem:[#allocation1] ss:$4 sm:$0xff] %v2023
      %s3059 = scalar_lea.vmem [#allocation1], 1
      %3060 = vst [vmem:[%s3059] ss:$4 sm:$0xff] %v2030
      %s3061 = scalar_lea.vmem [#allocation1], 2
      %3062 = vst [vmem:[%s3061] ss:$4 sm:$0xff] %v2035
      %s3063 = scalar_lea.vmem [#allocation1], 3
      %3064 = vst [vmem:[%s3063] ss:$4 sm:$0xff] %v2040
      %s3065 = scalar_lea.vmem [#allocation1], 32
      %3066 = vst [vmem:[%s3065] ss:$4 sm:$0xff] %v2044
      %s3067 = scalar_lea.vmem [#allocation1], 33
      %3068 = vst [vmem:[%s3067] ss:$4 sm:$0xff] %v2048
      %s3069 = scalar_lea.vmem [#allocation1], 34
      %3070 = vst [vmem:[%s3069] ss:$4 sm:$0xff] %v2053
      %s3071 = scalar_lea.vmem [#allocation1], 35
      %3072 = vst [vmem:[%s3071] ss:$4 sm:$0xff] %v2058
      %v3073 = vld.sshfl [vmem:[#allocation1 + $0x10] sm:$0xff pattern:$0x73625140]
      %v3074 = vld.sshfl [vmem:[#allocation1 + $0x30] sm:$0xff pattern:$0x73625140]
      %3075 = vst [vmem:[#allocation1] ss:$4 sm:$0xff] %v2062
      %3076 = vst [vmem:[%s3059] ss:$4 sm:$0xff] %v2066
      %3077 = vst [vmem:[%s3061] ss:$4 sm:$0xff] %v2071
      %3078 = vst [vmem:[%s3063] ss:$4 sm:$0xff] %v2076
      %3079 = vst [vmem:[%s3065] ss:$4 sm:$0xff] %v2080
      %3080 = vst [vmem:[%s3067] ss:$4 sm:$0xff] %v2084
      %3081 = vst [vmem:[%s3069] ss:$4 sm:$0xff] %v2089
      %3082 = vst [vmem:[%s3071] ss:$4 sm:$0xff] %v2094
      %v3083 = vld.sshfl [vmem:[#allocation1 + $0x10] sm:$0xff pattern:$0x73625140]
      %v3084 = vld.sshfl [vmem:[#allocation1 + $0x30] sm:$0xff pattern:$0x73625140]
      %3085 = vst [vmem:[#allocation1] ss:$4 sm:$0xff] %v2098
      %3086 = vst [vmem:[%s3059] ss:$4 sm:$0xff] %v2102
      %3087 = vst [vmem:[%s3061] ss:$4 sm:$0xff] %v2107
      %3088 = vst [vmem:[%s3063] ss:$4 sm:$0xff] %v2112
      %3089 = vst [vmem:[%s3065] ss:$4 sm:$0xff] %v2116
      %v3090 = vld.sshfl [vmem:[#allocation1 + $0x10] sm:$0xff pattern:$0x73625140]
      %v3091 = vld.sshfl [vmem:[#allocation1 + $0x30] sm:$0xff pattern:$0x73625140]
      %3092 = vst [vmem:[#allocation1] ss:$4 sm:$0xff] %v2120
      %3093 = vst [vmem:[%s3059] ss:$4 sm:$0xff] %v2125
      %3094 = vst [vmem:[%s3061] ss:$4 sm:$0xff] %v2130
      %3095 = vst [vmem:[%s3063] ss:$4 sm:$0xff] %v2134
      %3096 = vst [vmem:[%s3065] ss:$4 sm:$0xff] %v2138
      %3097 = vst [vmem:[%s3067] ss:$4 sm:$0xff] %v2143
      %3098 = vst [vmem:[%s3069] ss:$4 sm:$0xff] %v2148
      %3099 = vst [vmem:[%s3071] ss:$4 sm:$0xff] %v2152
      %v3100 = vld.sshfl [vmem:[#allocation1 + $0x10] sm:$0xff pattern:$0x73625140]
      %v3101 = vld.sshfl [vmem:[#allocation1 + $0x30] sm:$0xff pattern:$0x73625140]
      %3102 = vst [vmem:[#allocation1] ss:$4 sm:$0xff] %v2156
      %3103 = vst [vmem:[%s3059] ss:$4 sm:$0xff] %v2161
      %3104 = vst [vmem:[%s3061] ss:$4 sm:$0xff] %v2166
      %3105 = vst [vmem:[%s3063] ss:$4 sm:$0xff] %v2170
      %3106 = vst [vmem:[%s3065] ss:$4 sm:$0xff] %v2174
      %3107 = vst [vmem:[%s3067] ss:$4 sm:$0xff] %v2179
      %3108 = vst [vmem:[%s3069] ss:$4 sm:$0xff] %v2184
      %3109 = vst [vmem:[%s3071] ss:$4 sm:$0xff] %v2188
      %v3110 = vld.sshfl [vmem:[#allocation1 + $0x10] sm:$0xff pattern:$0x73625140]
      %v3111 = vld.sshfl [vmem:[#allocation1 + $0x30] sm:$0xff pattern:$0x73625140]
      %3112 = vst [vmem:[#allocation1] ss:$4 sm:$0xff] %v2192
      %3113 = vst [vmem:[%s3059] ss:$4 sm:$0xff] %v2197
      %3114 = vst [vmem:[%s3061] ss:$4 sm:$0xff] %v2202
      %3115 = vst [vmem:[%s3063] ss:$4 sm:$0xff] %v2206
      %3116 = vst [vmem:[%s3065] ss:$4 sm:$0xff] %v2210
      %v3117 = vld.sshfl [vmem:[#allocation1 + $0x10] sm:$0xff pattern:$0x73625140]
      %v3118 = vld.sshfl [vmem:[#allocation1 + $0x30] sm:$0xff pattern:$0x73625140]
      %3119 = vst [vmem:[#allocation1] ss:$4 sm:$0xff] %v2215
      %3120 = vst [vmem:[%s3059] ss:$4 sm:$0xff] %v2220
      %3121 = vst [vmem:[%s3061] ss:$4 sm:$0xff] %v2224
      %3122 = vst [vmem:[%s3063] ss:$4 sm:$0xff] %v2228
      %3123 = vst [vmem:[%s3065] ss:$4 sm:$0xff] %v2233
      %3124 = vst [vmem:[%s3067] ss:$4 sm:$0xff] %v2238
      %3125 = vst [vmem:[%s3069] ss:$4 sm:$0xff] %v2242
      %3126 = vst [vmem:[%s3071] ss:$4 sm:$0xff] %v2246
      %v3127 = vld.sshfl [vmem:[#allocation1 + $0x10] sm:$0xff pattern:$0x73625140]
      %v3128 = vld.sshfl [vmem:[#allocation1 + $0x30] sm:$0xff pattern:$0x73625140]
      %3129 = vst [vmem:[#allocation1] ss:$4 sm:$0xff] %v2251
      %3130 = vst [vmem:[%s3059] ss:$4 sm:$0xff] %v2256
      %3131 = vst [vmem:[%s3061] ss:$4 sm:$0xff] %v2260
      %3132 = vst [vmem:[%s3063] ss:$4 sm:$0xff] %v2264
      %3133 = vst [vmem:[%s3065] ss:$4 sm:$0xff] %v2269
      %3134 = vst [vmem:[%s3067] ss:$4 sm:$0xff] %v2274
      %3135 = vst [vmem:[%s3069] ss:$4 sm:$0xff] %v2278
      %3136 = vst [vmem:[%s3071] ss:$4 sm:$0xff] %v2282
      %v3137 = vld.sshfl [vmem:[#allocation1 + $0x10] sm:$0xff pattern:$0x73625140]
      %v3138 = vld.sshfl [vmem:[#allocation1 + $0x30] sm:$0xff pattern:$0x73625140]
      %3139 = vst [vmem:[#allocation1] ss:$4 sm:$0xff] %v2287
      %3140 = vst [vmem:[%s3059] ss:$4 sm:$0xff] %v2292
      %3141 = vst [vmem:[%s3061] ss:$4 sm:$0xff] %v2296
      %3142 = vst [vmem:[%s3063] ss:$4 sm:$0xff] %v2300
      %3143 = vst [vmem:[%s3065] ss:$4 sm:$0xff] %v2305
      %v3144 = vld.sshfl [vmem:[#allocation1 + $0x10] sm:$0xff pattern:$0x73625140]
      %v3145 = vld.sshfl [vmem:[#allocation1 + $0x30] sm:$0xff pattern:$0x73625140]
      %v3164 = vadd.f32 %v3040, %v3073
      %v3165 = vadd.f32 %v3041, %v3074
      %v3166 = vadd.f32 %v3042, %v3083
      %v3167 = vadd.f32 %v3043, %v3084
      %v3168 = vadd.f32 %v3044, %v3090
      %v3169 = vadd.f32 %v3045, %v3091
      %v3170 = vadd.f32 %v3046, %v3100
      %v3171 = vadd.f32 %v3047, %v3101
      %v3172 = vadd.f32 %v3048, %v3110
      %v3173 = vadd.f32 %v3049, %v3111
      %v3174 = vadd.f32 %v3050, %v3117
      %v3175 = vadd.f32 %v3051, %v3118
      %v3176 = vadd.f32 %v3052, %v3127
      %v3177 = vadd.f32 %v3053, %v3128
      %v3178 = vadd.f32 %v3054, %v3137
      %v3179 = vadd.f32 %v3055, %v3138
      %v3180 = vadd.f32 %v3056, %v3144
      %v3181 = vadd.f32 %v3057, %v3145
      %3182 = vst.msk [vmem:[#allocation3 + $0x4] sm:$0xff] %vm643, %v3164
      %3183 = vst.msk [vmem:[#allocation3 + $0xc] sm:$0xff] %vm643, %v3165
      %3184 = vst.msk [vmem:[#allocation3 + $0x14] sm:$0xff] %vm643, %v3166
      %3185 = vst.msk [vmem:[#allocation3 + $0x1c] sm:$0xff] %vm643, %v3167
      %3186 = vst.msk [vmem:[#allocation3 + $0x24] sm:$0xff] %vm643, %v3168
      %3187 = vst.msk [vmem:[#allocation3 + $0x2c] sm:$0x3] %vm649, %v3169
      %3188 = vst.msk [vmem:[#allocation3 + $0x3c] sm:$0xff] %vm643, %v3170
      %3189 = vst.msk [vmem:[#allocation3 + $0x44] sm:$0xff] %vm643, %v3171
      %3190 = vst.msk [vmem:[#allocation3 + $0x4c] sm:$0xff] %vm643, %v3172
      %3191 = vst.msk [vmem:[#allocation3 + $0x54] sm:$0xff] %vm643, %v3173
      %3192 = vst.msk [vmem:[#allocation3 + $0x5c] sm:$0xff] %vm643, %v3174
      %3193 = vst.msk [vmem:[#allocation3 + $0x64] sm:$0x3] %vm649, %v3175
      %3194 = vst.msk [vmem:[#allocation3 + $0x74] sm:$0xff] %vm643, %v3176
      %3195 = vst.msk [vmem:[#allocation3 + $0x7c] sm:$0xff] %vm643, %v3177
      %3196 = vst.msk [vmem:[#allocation3 + $0x84] sm:$0xff] %vm643, %v3178
      %3197 = vst.msk [vmem:[#allocation3 + $0x8c] sm:$0xff] %vm643, %v3179
      %3198 = vst.msk [vmem:[#allocation3 + $0x94] sm:$0xff] %vm643, %v3180
      %3199 = vst.msk [vmem:[#allocation3 + $0x9c] sm:$0x3] %vm649, %v3181
      %v3200 = vld [vmem:[#allocation3 + $0x5] sm:$0xff]
      %v3201 = vld [vmem:[#allocation3 + $0xd] sm:$0xff]
      %v3202 = vld [vmem:[#allocation3 + $0x15] sm:$0xff]
      %v3203 = vld [vmem:[#allocation3 + $0x1d] sm:$0xff]
      %v3204 = vld [vmem:[#allocation3 + $0x25] sm:$0xff]
      %v3205 = vld [vmem:[#allocation3 + $0x2d] sm:$0x3]
      %v3206 = vld [vmem:[#allocation3 + $0x3d] sm:$0xff]
      %v3207 = vld [vmem:[#allocation3 + $0x45] sm:$0xff]
      %v3208 = vld [vmem:[#allocation3 + $0x4d] sm:$0xff]
      %v3209 = vld [vmem:[#allocation3 + $0x55] sm:$0xff]
      %v3210 = vld [vmem:[#allocation3 + $0x5d] sm:$0xff]
      %v3211 = vld [vmem:[#allocation3 + $0x65] sm:$0x3]
      %v3212 = vld [vmem:[#allocation3 + $0x75] sm:$0xff]
      %v3213 = vld [vmem:[#allocation3 + $0x7d] sm:$0xff]
      %v3214 = vld [vmem:[#allocation3 + $0x85] sm:$0xff]
      %v3215 = vld [vmem:[#allocation3 + $0x8d] sm:$0xff]
      %v3216 = vld [vmem:[#allocation3 + $0x95] sm:$0xff]
      %v3217 = vld [vmem:[#allocation3 + $0x9d] sm:$0x3]
      %3218 = vst [vmem:[#allocation1] ss:$4 sm:$0xff] %v2023
      %s3219 = scalar_lea.vmem [#allocation1], 1
      %3220 = vst [vmem:[%s3219] ss:$4 sm:$0xff] %v2030
      %s3221 = scalar_lea.vmem [#allocation1], 2
      %3222 = vst [vmem:[%s3221] ss:$4 sm:$0xff] %v2035
      %s3223 = scalar_lea.vmem [#allocation1], 3
      %3224 = vst [vmem:[%s3223] ss:$4 sm:$0xff] %v2040
      %s3225 = scalar_lea.vmem [#allocation1], 32
      %3226 = vst [vmem:[%s3225] ss:$4 sm:$0xff] %v2044
      %s3227 = scalar_lea.vmem [#allocation1], 33
      %3228 = vst [vmem:[%s3227] ss:$4 sm:$0xff] %v2048
      %s3229 = scalar_lea.vmem [#allocation1], 34
      %3230 = vst [vmem:[%s3229] ss:$4 sm:$0xff] %v2053
      %s3231 = scalar_lea.vmem [#allocation1], 35
      %3232 = vst [vmem:[%s3231] ss:$4 sm:$0xff] %v2058
      %v3233 = vld.sshfl [vmem:[#allocation1 + $0x10] sm:$0xff pattern:$0x73625140]
      %v3234 = vld.sshfl [vmem:[#allocation1 + $0x30] sm:$0xff pattern:$0x73625140]
      %3235 = vst [vmem:[#allocation1] ss:$4 sm:$0xff] %v2062
      %3236 = vst [vmem:[%s3219] ss:$4 sm:$0xff] %v2066
      %3237 = vst [vmem:[%s3221] ss:$4 sm:$0xff] %v2071
      %3238 = vst [vmem:[%s3223] ss:$4 sm:$0xff] %v2076
      %3239 = vst [vmem:[%s3225] ss:$4 sm:$0xff] %v2080
      %3240 = vst [vmem:[%s3227] ss:$4 sm:$0xff] %v2084
      %3241 = vst [vmem:[%s3229] ss:$4 sm:$0xff] %v2089
      %3242 = vst [vmem:[%s3231] ss:$4 sm:$0xff] %v2094
      %v3243 = vld.sshfl [vmem:[#allocation1 + $0x10] sm:$0xff pattern:$0x73625140]
      %v3244 = vld.sshfl [vmem:[#allocation1 + $0x30] sm:$0xff pattern:$0x73625140]
      %3245 = vst [vmem:[#allocation1] ss:$4 sm:$0xff] %v2098
      %3246 = vst [vmem:[%s3219] ss:$4 sm:$0xff] %v2102
      %3247 = vst [vmem:[%s3221] ss:$4 sm:$0xff] %v2107
      %3248 = vst [vmem:[%s3223] ss:$4 sm:$0xff] %v2112
      %3249 = vst [vmem:[%s3225] ss:$4 sm:$0xff] %v2116
      %v3250 = vld.sshfl [vmem:[#allocation1 + $0x10] sm:$0xff pattern:$0x73625140]
      %v3251 = vld.sshfl [vmem:[#allocation1 + $0x30] sm:$0xff pattern:$0x73625140]
      %3252 = vst [vmem:[#allocation1] ss:$4 sm:$0xff] %v2120
      %3253 = vst [vmem:[%s3219] ss:$4 sm:$0xff] %v2125
      %3254 = vst [vmem:[%s3221] ss:$4 sm:$0xff] %v2130
      %3255 = vst [vmem:[%s3223] ss:$4 sm:$0xff] %v2134
      %3256 = vst [vmem:[%s3225] ss:$4 sm:$0xff] %v2138
      %3257 = vst [vmem:[%s3227] ss:$4 sm:$0xff] %v2143
      %3258 = vst [vmem:[%s3229] ss:$4 sm:$0xff] %v2148
      %3259 = vst [vmem:[%s3231] ss:$4 sm:$0xff] %v2152
      %v3260 = vld.sshfl [vmem:[#allocation1 + $0x10] sm:$0xff pattern:$0x73625140]
      %v3261 = vld.sshfl [vmem:[#allocation1 + $0x30] sm:$0xff pattern:$0x73625140]
      %3262 = vst [vmem:[#allocation1] ss:$4 sm:$0xff] %v2156
      %3263 = vst [vmem:[%s3219] ss:$4 sm:$0xff] %v2161
      %3264 = vst [vmem:[%s3221] ss:$4 sm:$0xff] %v2166
      %3265 = vst [vmem:[%s3223] ss:$4 sm:$0xff] %v2170
      %3266 = vst [vmem:[%s3225] ss:$4 sm:$0xff] %v2174
      %3267 = vst [vmem:[%s3227] ss:$4 sm:$0xff] %v2179
      %3268 = vst [vmem:[%s3229] ss:$4 sm:$0xff] %v2184
      %3269 = vst [vmem:[%s3231] ss:$4 sm:$0xff] %v2188
      %v3270 = vld.sshfl [vmem:[#allocation1 + $0x10] sm:$0xff pattern:$0x73625140]
      %v3271 = vld.sshfl [vmem:[#allocation1 + $0x30] sm:$0xff pattern:$0x73625140]
      %3272 = vst [vmem:[#allocation1] ss:$4 sm:$0xff] %v2192
      %3273 = vst [vmem:[%s3219] ss:$4 sm:$0xff] %v2197
      %3274 = vst [vmem:[%s3221] ss:$4 sm:$0xff] %v2202
      %3275 = vst [vmem:[%s3223] ss:$4 sm:$0xff] %v2206
      %3276 = vst [vmem:[%s3225] ss:$4 sm:$0xff] %v2210
      %v3277 = vld.sshfl [vmem:[#allocation1 + $0x10] sm:$0xff pattern:$0x73625140]
      %v3278 = vld.sshfl [vmem:[#allocation1 + $0x30] sm:$0xff pattern:$0x73625140]
      %3279 = vst [vmem:[#allocation1] ss:$4 sm:$0xff] %v2215
      %3280 = vst [vmem:[%s3219] ss:$4 sm:$0xff] %v2220
      %3281 = vst [vmem:[%s3221] ss:$4 sm:$0xff] %v2224
      %3282 = vst [vmem:[%s3223] ss:$4 sm:$0xff] %v2228
      %3283 = vst [vmem:[%s3225] ss:$4 sm:$0xff] %v2233
      %3284 = vst [vmem:[%s3227] ss:$4 sm:$0xff] %v2238
      %3285 = vst [vmem:[%s3229] ss:$4 sm:$0xff] %v2242
      %3286 = vst [vmem:[%s3231] ss:$4 sm:$0xff] %v2246
      %v3287 = vld.sshfl [vmem:[#allocation1 + $0x10] sm:$0xff pattern:$0x73625140]
      %v3288 = vld.sshfl [vmem:[#allocation1 + $0x30] sm:$0xff pattern:$0x73625140]
      %3289 = vst [vmem:[#allocation1] ss:$4 sm:$0xff] %v2251
      %3290 = vst [vmem:[%s3219] ss:$4 sm:$0xff] %v2256
      %3291 = vst [vmem:[%s3221] ss:$4 sm:$0xff] %v2260
      %3292 = vst [vmem:[%s3223] ss:$4 sm:$0xff] %v2264
      %3293 = vst [vmem:[%s3225] ss:$4 sm:$0xff] %v2269
      %3294 = vst [vmem:[%s3227] ss:$4 sm:$0xff] %v2274
      %3295 = vst [vmem:[%s3229] ss:$4 sm:$0xff] %v2278
      %3296 = vst [vmem:[%s3231] ss:$4 sm:$0xff] %v2282
      %v3297 = vld.sshfl [vmem:[#allocation1 + $0x10] sm:$0xff pattern:$0x73625140]
      %v3298 = vld.sshfl [vmem:[#allocation1 + $0x30] sm:$0xff pattern:$0x73625140]
      %3299 = vst [vmem:[#allocation1] ss:$4 sm:$0xff] %v2287
      %3300 = vst [vmem:[%s3219] ss:$4 sm:$0xff] %v2292
      %3301 = vst [vmem:[%s3221] ss:$4 sm:$0xff] %v2296
      %3302 = vst [vmem:[%s3223] ss:$4 sm:$0xff] %v2300
      %3303 = vst [vmem:[%s3225] ss:$4 sm:$0xff] %v2305
      %v3304 = vld.sshfl [vmem:[#allocation1 + $0x10] sm:$0xff pattern:$0x73625140]
      %v3305 = vld.sshfl [vmem:[#allocation1 + $0x30] sm:$0xff pattern:$0x73625140]
      %3306 = vrot.lane.b32.xlu0 %v3233, 64
      %v3307 = vpop.permute.xlu0 %3306
      %3308 = vrot.lane.b32.xlu0 %v3234, 64
      %v3309 = vpop.permute.xlu0 %3308
      %3310 = vrot.lane.b32.xlu0 %v3243, 64
      %v3311 = vpop.permute.xlu0 %3310
      %3312 = vrot.lane.b32.xlu0 %v3244, 64
      %v3313 = vpop.permute.xlu0 %3312
      %3314 = vrot.lane.b32.xlu0 %v3250, 64
      %v3315 = vpop.permute.xlu0 %3314
      %3316 = vrot.lane.b32.xlu0 %v3251, 64
      %v3317 = vpop.permute.xlu0 %3316
      %3318 = vrot.lane.b32.xlu0 %v3260, 64
      %v3319 = vpop.permute.xlu0 %3318
      %3320 = vrot.lane.b32.xlu0 %v3261, 64
      %v3321 = vpop.permute.xlu0 %3320
      %3322 = vrot.lane.b32.xlu0 %v3270, 64
      %v3323 = vpop.permute.xlu0 %3322
      %3324 = vrot.lane.b32.xlu0 %v3271, 64
      %v3325 = vpop.permute.xlu0 %3324
      %3326 = vrot.lane.b32.xlu0 %v3277, 64
      %v3327 = vpop.permute.xlu0 %3326
      %3328 = vrot.lane.b32.xlu0 %v3278, 64
      %v3329 = vpop.permute.xlu0 %3328
      %3330 = vrot.lane.b32.xlu0 %v3287, 64
      %v3331 = vpop.permute.xlu0 %3330
      %3332 = vrot.lane.b32.xlu0 %v3288, 64
      %v3333 = vpop.permute.xlu0 %3332
      %3334 = vrot.lane.b32.xlu0 %v3297, 64
      %v3335 = vpop.permute.xlu0 %3334
      %3336 = vrot.lane.b32.xlu0 %v3298, 64
      %v3337 = vpop.permute.xlu0 %3336
      %3338 = vrot.lane.b32.xlu0 %v3304, 64
      %v3339 = vpop.permute.xlu0 %3338
      %3340 = vrot.lane.b32.xlu0 %v3305, 64
      %v3341 = vpop.permute.xlu0 %3340
      %v3360 = vadd.f32 %v3200, %v3307
      %v3361 = vadd.f32 %v3201, %v3309
      %v3362 = vadd.f32 %v3202, %v3311
      %v3363 = vadd.f32 %v3203, %v3313
      %v3364 = vadd.f32 %v3204, %v3315
      %v3365 = vadd.f32 %v3205, %v3317
      %v3366 = vadd.f32 %v3206, %v3319
      %v3367 = vadd.f32 %v3207, %v3321
      %v3368 = vadd.f32 %v3208, %v3323
      %v3369 = vadd.f32 %v3209, %v3325
      %v3370 = vadd.f32 %v3210, %v3327
      %v3371 = vadd.f32 %v3211, %v3329
      %v3372 = vadd.f32 %v3212, %v3331
      %v3373 = vadd.f32 %v3213, %v3333
      %v3374 = vadd.f32 %v3214, %v3335
      %v3375 = vadd.f32 %v3215, %v3337
      %v3376 = vadd.f32 %v3216, %v3339
      %v3377 = vadd.f32 %v3217, %v3341
      %3378 = vst.msk [vmem:[#allocation3 + $0x5] sm:$0xff] %vm643, %v3360
      %3379 = vst.msk [vmem:[#allocation3 + $0xd] sm:$0xff] %vm643, %v3361
      %3380 = vst.msk [vmem:[#allocation3 + $0x15] sm:$0xff] %vm643, %v3362
      %3381 = vst.msk [vmem:[#allocation3 + $0x1d] sm:$0xff] %vm643, %v3363
      %3382 = vst.msk [vmem:[#allocation3 + $0x25] sm:$0xff] %vm643, %v3364
      %3383 = vst.msk [vmem:[#allocation3 + $0x2d] sm:$0x3] %vm649, %v3365
      %3384 = vst.msk [vmem:[#allocation3 + $0x3d] sm:$0xff] %vm643, %v3366
      %3385 = vst.msk [vmem:[#allocation3 + $0x45] sm:$0xff] %vm643, %v3367
      %3386 = vst.msk [vmem:[#allocation3 + $0x4d] sm:$0xff] %vm643, %v3368
      %3387 = vst.msk [vmem:[#allocation3 + $0x55] sm:$0xff] %vm643, %v3369
      %3388 = vst.msk [vmem:[#allocation3 + $0x5d] sm:$0xff] %vm643, %v3370
      %3389 = vst.msk [vmem:[#allocation3 + $0x65] sm:$0x3] %vm649, %v3371
      %3390 = vst.msk [vmem:[#allocation3 + $0x75] sm:$0xff] %vm643, %v3372
      %3391 = vst.msk [vmem:[#allocation3 + $0x7d] sm:$0xff] %vm643, %v3373
      %3392 = vst.msk [vmem:[#allocation3 + $0x85] sm:$0xff] %vm643, %v3374
      %3393 = vst.msk [vmem:[#allocation3 + $0x8d] sm:$0xff] %vm643, %v3375
      %3394 = vst.msk [vmem:[#allocation3 + $0x95] sm:$0xff] %vm643, %v3376
      %3395 = vst.msk [vmem:[#allocation3 + $0x9d] sm:$0x3] %vm649, %v3377
      %v3396 = vld [vmem:[#allocation3 + $0x6] sm:$0xff]
      %v3397 = vld [vmem:[#allocation3 + $0xe] sm:$0xff]
      %v3398 = vld [vmem:[#allocation3 + $0x16] sm:$0xff]
      %v3399 = vld [vmem:[#allocation3 + $0x1e] sm:$0xff]
      %v3400 = vld [vmem:[#allocation3 + $0x26] sm:$0xff]
      %v3401 = vld [vmem:[#allocation3 + $0x2e] sm:$0x3]
      %v3402 = vld [vmem:[#allocation3 + $0x3e] sm:$0xff]
      %v3403 = vld [vmem:[#allocation3 + $0x46] sm:$0xff]
      %v3404 = vld [vmem:[#allocation3 + $0x4e] sm:$0xff]
      %v3405 = vld [vmem:[#allocation3 + $0x56] sm:$0xff]
      %v3406 = vld [vmem:[#allocation3 + $0x5e] sm:$0xff]
      %v3407 = vld [vmem:[#allocation3 + $0x66] sm:$0x3]
      %v3408 = vld [vmem:[#allocation3 + $0x76] sm:$0xff]
      %v3409 = vld [vmem:[#allocation3 + $0x7e] sm:$0xff]
      %v3410 = vld [vmem:[#allocation3 + $0x86] sm:$0xff]
      %v3411 = vld [vmem:[#allocation3 + $0x8e] sm:$0xff]
      %v3412 = vld [vmem:[#allocation3 + $0x96] sm:$0xff]
      %v3413 = vld [vmem:[#allocation3 + $0x9e] sm:$0x3]
      %3414 = vst [vmem:[#allocation1] ss:$4 sm:$0xff] %v2023
      %s3415 = scalar_lea.vmem [#allocation1], 1
      %3416 = vst [vmem:[%s3415] ss:$4 sm:$0xff] %v2030
      %s3417 = scalar_lea.vmem [#allocation1], 2
      %3418 = vst [vmem:[%s3417] ss:$4 sm:$0xff] %v2035
      %s3419 = scalar_lea.vmem [#allocation1], 3
      %3420 = vst [vmem:[%s3419] ss:$4 sm:$0xff] %v2040
      %s3421 = scalar_lea.vmem [#allocation1], 32
      %3422 = vst [vmem:[%s3421] ss:$4 sm:$0xff] %v2044
      %s3423 = scalar_lea.vmem [#allocation1], 33
      %3424 = vst [vmem:[%s3423] ss:$4 sm:$0xff] %v2048
      %s3425 = scalar_lea.vmem [#allocation1], 34
      %3426 = vst [vmem:[%s3425] ss:$4 sm:$0xff] %v2053
      %s3427 = scalar_lea.vmem [#allocation1], 35
      %3428 = vst [vmem:[%s3427] ss:$4 sm:$0xff] %v2058
      %v3429 = vld.sshfl [vmem:[#allocation1 + $0x18] sm:$0xff pattern:$0x73625140]
      %v3430 = vld.sshfl [vmem:[#allocation1 + $0x38] sm:$0xff pattern:$0x73625140]
      %3431 = vst [vmem:[#allocation1] ss:$4 sm:$0xff] %v2062
      %3432 = vst [vmem:[%s3415] ss:$4 sm:$0xff] %v2066
      %3433 = vst [vmem:[%s3417] ss:$4 sm:$0xff] %v2071
      %3434 = vst [vmem:[%s3419] ss:$4 sm:$0xff] %v2076
      %3435 = vst [vmem:[%s3421] ss:$4 sm:$0xff] %v2080
      %3436 = vst [vmem:[%s3423] ss:$4 sm:$0xff] %v2084
      %3437 = vst [vmem:[%s3425] ss:$4 sm:$0xff] %v2089
      %3438 = vst [vmem:[%s3427] ss:$4 sm:$0xff] %v2094
      %v3439 = vld.sshfl [vmem:[#allocation1 + $0x18] sm:$0xff pattern:$0x73625140]
      %v3440 = vld.sshfl [vmem:[#allocation1 + $0x38] sm:$0xff pattern:$0x73625140]
      %3441 = vst [vmem:[#allocation1] ss:$4 sm:$0xff] %v2098
      %3442 = vst [vmem:[%s3415] ss:$4 sm:$0xff] %v2102
      %3443 = vst [vmem:[%s3417] ss:$4 sm:$0xff] %v2107
      %3444 = vst [vmem:[%s3419] ss:$4 sm:$0xff] %v2112
      %3445 = vst [vmem:[%s3421] ss:$4 sm:$0xff] %v2116
      %v3446 = vld.sshfl [vmem:[#allocation1 + $0x18] sm:$0xff pattern:$0x73625140]
      %v3447 = vld.sshfl [vmem:[#allocation1 + $0x38] sm:$0xff pattern:$0x73625140]
      %3448 = vst [vmem:[#allocation1] ss:$4 sm:$0xff] %v2120
      %3449 = vst [vmem:[%s3415] ss:$4 sm:$0xff] %v2125
      %3450 = vst [vmem:[%s3417] ss:$4 sm:$0xff] %v2130
      %3451 = vst [vmem:[%s3419] ss:$4 sm:$0xff] %v2134
      %3452 = vst [vmem:[%s3421] ss:$4 sm:$0xff] %v2138
      %3453 = vst [vmem:[%s3423] ss:$4 sm:$0xff] %v2143
      %3454 = vst [vmem:[%s3425] ss:$4 sm:$0xff] %v2148
      %3455 = vst [vmem:[%s3427] ss:$4 sm:$0xff] %v2152
      %v3456 = vld.sshfl [vmem:[#allocation1 + $0x18] sm:$0xff pattern:$0x73625140]
      %v3457 = vld.sshfl [vmem:[#allocation1 + $0x38] sm:$0xff pattern:$0x73625140]
      %3458 = vst [vmem:[#allocation1] ss:$4 sm:$0xff] %v2156
      %3459 = vst [vmem:[%s3415] ss:$4 sm:$0xff] %v2161
      %3460 = vst [vmem:[%s3417] ss:$4 sm:$0xff] %v2166
      %3461 = vst [vmem:[%s3419] ss:$4 sm:$0xff] %v2170
      %3462 = vst [vmem:[%s3421] ss:$4 sm:$0xff] %v2174
      %3463 = vst [vmem:[%s3423] ss:$4 sm:$0xff] %v2179
      %3464 = vst [vmem:[%s3425] ss:$4 sm:$0xff] %v2184
      %3465 = vst [vmem:[%s3427] ss:$4 sm:$0xff] %v2188
      %v3466 = vld.sshfl [vmem:[#allocation1 + $0x18] sm:$0xff pattern:$0x73625140]
      %v3467 = vld.sshfl [vmem:[#allocation1 + $0x38] sm:$0xff pattern:$0x73625140]
      %3468 = vst [vmem:[#allocation1] ss:$4 sm:$0xff] %v2192
      %3469 = vst [vmem:[%s3415] ss:$4 sm:$0xff] %v2197
      %3470 = vst [vmem:[%s3417] ss:$4 sm:$0xff] %v2202
      %3471 = vst [vmem:[%s3419] ss:$4 sm:$0xff] %v2206
      %3472 = vst [vmem:[%s3421] ss:$4 sm:$0xff] %v2210
      %v3473 = vld.sshfl [vmem:[#allocation1 + $0x18] sm:$0xff pattern:$0x73625140]
      %v3474 = vld.sshfl [vmem:[#allocation1 + $0x38] sm:$0xff pattern:$0x73625140]
      %3475 = vst [vmem:[#allocation1] ss:$4 sm:$0xff] %v2215
      %3476 = vst [vmem:[%s3415] ss:$4 sm:$0xff] %v2220
      %3477 = vst [vmem:[%s3417] ss:$4 sm:$0xff] %v2224
      %3478 = vst [vmem:[%s3419] ss:$4 sm:$0xff] %v2228
      %3479 = vst [vmem:[%s3421] ss:$4 sm:$0xff] %v2233
      %3480 = vst [vmem:[%s3423] ss:$4 sm:$0xff] %v2238
      %3481 = vst [vmem:[%s3425] ss:$4 sm:$0xff] %v2242
      %3482 = vst [vmem:[%s3427] ss:$4 sm:$0xff] %v2246
      %v3483 = vld.sshfl [vmem:[#allocation1 + $0x18] sm:$0xff pattern:$0x73625140]
      %v3484 = vld.sshfl [vmem:[#allocation1 + $0x38] sm:$0xff pattern:$0x73625140]
      %3485 = vst [vmem:[#allocation1] ss:$4 sm:$0xff] %v2251
      %3486 = vst [vmem:[%s3415] ss:$4 sm:$0xff] %v2256
      %3487 = vst [vmem:[%s3417] ss:$4 sm:$0xff] %v2260
      %3488 = vst [vmem:[%s3419] ss:$4 sm:$0xff] %v2264
      %3489 = vst [vmem:[%s3421] ss:$4 sm:$0xff] %v2269
      %3490 = vst [vmem:[%s3423] ss:$4 sm:$0xff] %v2274
      %3491 = vst [vmem:[%s3425] ss:$4 sm:$0xff] %v2278
      %3492 = vst [vmem:[%s3427] ss:$4 sm:$0xff] %v2282
      %v3493 = vld.sshfl [vmem:[#allocation1 + $0x18] sm:$0xff pattern:$0x73625140]
      %v3494 = vld.sshfl [vmem:[#allocation1 + $0x38] sm:$0xff pattern:$0x73625140]
      %3495 = vst [vmem:[#allocation1] ss:$4 sm:$0xff] %v2287
      %3496 = vst [vmem:[%s3415] ss:$4 sm:$0xff] %v2292
      %3497 = vst [vmem:[%s3417] ss:$4 sm:$0xff] %v2296
      %3498 = vst [vmem:[%s3419] ss:$4 sm:$0xff] %v2300
      %3499 = vst [vmem:[%s3421] ss:$4 sm:$0xff] %v2305
      %v3500 = vld.sshfl [vmem:[#allocation1 + $0x18] sm:$0xff pattern:$0x73625140]
      %v3501 = vld.sshfl [vmem:[#allocation1 + $0x38] sm:$0xff pattern:$0x73625140]
      %v3520 = vadd.f32 %v3396, %v3429
      %v3521 = vadd.f32 %v3397, %v3430
      %v3522 = vadd.f32 %v3398, %v3439
      %v3523 = vadd.f32 %v3399, %v3440
      %v3524 = vadd.f32 %v3400, %v3446
      %v3525 = vadd.f32 %v3401, %v3447
      %v3526 = vadd.f32 %v3402, %v3456
      %v3527 = vadd.f32 %v3403, %v3457
      %v3528 = vadd.f32 %v3404, %v3466
      %v3529 = vadd.f32 %v3405, %v3467
      %v3530 = vadd.f32 %v3406, %v3473
      %v3531 = vadd.f32 %v3407, %v3474
      %v3532 = vadd.f32 %v3408, %v3483
      %v3533 = vadd.f32 %v3409, %v3484
      %v3534 = vadd.f32 %v3410, %v3493
      %v3535 = vadd.f32 %v3411, %v3494
      %v3536 = vadd.f32 %v3412, %v3500
      %v3537 = vadd.f32 %v3413, %v3501
      %3538 = vst.msk [vmem:[#allocation3 + $0x6] sm:$0xff] %vm643, %v3520
      %3539 = vst.msk [vmem:[#allocation3 + $0xe] sm:$0xff] %vm643, %v3521
      %3540 = vst.msk [vmem:[#allocation3 + $0x16] sm:$0xff] %vm643, %v3522
      %3541 = vst.msk [vmem:[#allocation3 + $0x1e] sm:$0xff] %vm643, %v3523
      %3542 = vst.msk [vmem:[#allocation3 + $0x26] sm:$0xff] %vm643, %v3524
      %3543 = vst.msk [vmem:[#allocation3 + $0x2e] sm:$0x3] %vm649, %v3525
      %3544 = vst.msk [vmem:[#allocation3 + $0x3e] sm:$0xff] %vm643, %v3526
      %3545 = vst.msk [vmem:[#allocation3 + $0x46] sm:$0xff] %vm643, %v3527
      %3546 = vst.msk [vmem:[#allocation3 + $0x4e] sm:$0xff] %vm643, %v3528
      %3547 = vst.msk [vmem:[#allocation3 + $0x56] sm:$0xff] %vm643, %v3529
      %3548 = vst.msk [vmem:[#allocation3 + $0x5e] sm:$0xff] %vm643, %v3530
      %3549 = vst.msk [vmem:[#allocation3 + $0x66] sm:$0x3] %vm649, %v3531
      %3550 = vst.msk [vmem:[#allocation3 + $0x76] sm:$0xff] %vm643, %v3532
      %3551 = vst.msk [vmem:[#allocation3 + $0x7e] sm:$0xff] %vm643, %v3533
      %3552 = vst.msk [vmem:[#allocation3 + $0x86] sm:$0xff] %vm643, %v3534
      %3553 = vst.msk [vmem:[#allocation3 + $0x8e] sm:$0xff] %vm643, %v3535
      %3554 = vst.msk [vmem:[#allocation3 + $0x96] sm:$0xff] %vm643, %v3536
      %3555 = vst.msk [vmem:[#allocation3 + $0x9e] sm:$0x3] %vm649, %v3537
      %v3556 = vld [vmem:[#allocation3 + $0x7] sm:$0xff]
      %v3557 = vld [vmem:[#allocation3 + $0xf] sm:$0xff]
      %v3558 = vld [vmem:[#allocation3 + $0x17] sm:$0xff]
      %v3559 = vld [vmem:[#allocation3 + $0x1f] sm:$0xff]
      %v3560 = vld [vmem:[#allocation3 + $0x27] sm:$0xff]
      %v3561 = vld [vmem:[#allocation3 + $0x2f] sm:$0x3]
      %v3562 = vld [vmem:[#allocation3 + $0x3f] sm:$0xff]
      %v3563 = vld [vmem:[#allocation3 + $0x47] sm:$0xff]
      %v3564 = vld [vmem:[#allocation3 + $0x4f] sm:$0xff]
      %v3565 = vld [vmem:[#allocation3 + $0x57] sm:$0xff]
      %v3566 = vld [vmem:[#allocation3 + $0x5f] sm:$0xff]
      %v3567 = vld [vmem:[#allocation3 + $0x67] sm:$0x3]
      %v3568 = vld [vmem:[#allocation3 + $0x77] sm:$0xff]
      %v3569 = vld [vmem:[#allocation3 + $0x7f] sm:$0xff]
      %v3570 = vld [vmem:[#allocation3 + $0x87] sm:$0xff]
      %v3571 = vld [vmem:[#allocation3 + $0x8f] sm:$0xff]
      %v3572 = vld [vmem:[#allocation3 + $0x97] sm:$0xff]
      %v3573 = vld [vmem:[#allocation3 + $0x9f] sm:$0x3]
      %3574 = vst [vmem:[#allocation1] ss:$4 sm:$0xff] %v2023
      %s3575 = scalar_lea.vmem [#allocation1], 1
      %3576 = vst [vmem:[%s3575] ss:$4 sm:$0xff] %v2030
      %s3577 = scalar_lea.vmem [#allocation1], 2
      %3578 = vst [vmem:[%s3577] ss:$4 sm:$0xff] %v2035
      %s3579 = scalar_lea.vmem [#allocation1], 3
      %3580 = vst [vmem:[%s3579] ss:$4 sm:$0xff] %v2040
      %s3581 = scalar_lea.vmem [#allocation1], 32
      %3582 = vst [vmem:[%s3581] ss:$4 sm:$0xff] %v2044
      %s3583 = scalar_lea.vmem [#allocation1], 33
      %3584 = vst [vmem:[%s3583] ss:$4 sm:$0xff] %v2048
      %s3585 = scalar_lea.vmem [#allocation1], 34
      %3586 = vst [vmem:[%s3585] ss:$4 sm:$0xff] %v2053
      %s3587 = scalar_lea.vmem [#allocation1], 35
      %3588 = vst [vmem:[%s3587] ss:$4 sm:$0xff] %v2058
      %v3589 = vld.sshfl [vmem:[#allocation1 + $0x18] sm:$0xff pattern:$0x73625140]
      %v3590 = vld.sshfl [vmem:[#allocation1 + $0x38] sm:$0xff pattern:$0x73625140]
      %3591 = vst [vmem:[#allocation1] ss:$4 sm:$0xff] %v2062
      %3592 = vst [vmem:[%s3575] ss:$4 sm:$0xff] %v2066
      %3593 = vst [vmem:[%s3577] ss:$4 sm:$0xff] %v2071
      %3594 = vst [vmem:[%s3579] ss:$4 sm:$0xff] %v2076
      %3595 = vst [vmem:[%s3581] ss:$4 sm:$0xff] %v2080
      %3596 = vst [vmem:[%s3583] ss:$4 sm:$0xff] %v2084
      %3597 = vst [vmem:[%s3585] ss:$4 sm:$0xff] %v2089
      %3598 = vst [vmem:[%s3587] ss:$4 sm:$0xff] %v2094
      %v3599 = vld.sshfl [vmem:[#allocation1 + $0x18] sm:$0xff pattern:$0x73625140]
      %v3600 = vld.sshfl [vmem:[#allocation1 + $0x38] sm:$0xff pattern:$0x73625140]
      %3601 = vst [vmem:[#allocation1] ss:$4 sm:$0xff] %v2098
      %3602 = vst [vmem:[%s3575] ss:$4 sm:$0xff] %v2102
      %3603 = vst [vmem:[%s3577] ss:$4 sm:$0xff] %v2107
      %3604 = vst [vmem:[%s3579] ss:$4 sm:$0xff] %v2112
      %3605 = vst [vmem:[%s3581] ss:$4 sm:$0xff] %v2116
      %v3606 = vld.sshfl [vmem:[#allocation1 + $0x18] sm:$0xff pattern:$0x73625140]
      %v3607 = vld.sshfl [vmem:[#allocation1 + $0x38] sm:$0xff pattern:$0x73625140]
      %3608 = vst [vmem:[#allocation1] ss:$4 sm:$0xff] %v2120
      %3609 = vst [vmem:[%s3575] ss:$4 sm:$0xff] %v2125
      %3610 = vst [vmem:[%s3577] ss:$4 sm:$0xff] %v2130
      %3611 = vst [vmem:[%s3579] ss:$4 sm:$0xff] %v2134
      %3612 = vst [vmem:[%s3581] ss:$4 sm:$0xff] %v2138
      %3613 = vst [vmem:[%s3583] ss:$4 sm:$0xff] %v2143
      %3614 = vst [vmem:[%s3585] ss:$4 sm:$0xff] %v2148
      %3615 = vst [vmem:[%s3587] ss:$4 sm:$0xff] %v2152
      %v3616 = vld.sshfl [vmem:[#allocation1 + $0x18] sm:$0xff pattern:$0x73625140]
      %v3617 = vld.sshfl [vmem:[#allocation1 + $0x38] sm:$0xff pattern:$0x73625140]
      %3618 = vst [vmem:[#allocation1] ss:$4 sm:$0xff] %v2156
      %3619 = vst [vmem:[%s3575] ss:$4 sm:$0xff] %v2161
      %3620 = vst [vmem:[%s3577] ss:$4 sm:$0xff] %v2166
      %3621 = vst [vmem:[%s3579] ss:$4 sm:$0xff] %v2170
      %3622 = vst [vmem:[%s3581] ss:$4 sm:$0xff] %v2174
      %3623 = vst [vmem:[%s3583] ss:$4 sm:$0xff] %v2179
      %3624 = vst [vmem:[%s3585] ss:$4 sm:$0xff] %v2184
      %3625 = vst [vmem:[%s3587] ss:$4 sm:$0xff] %v2188
      %v3626 = vld.sshfl [vmem:[#allocation1 + $0x18] sm:$0xff pattern:$0x73625140]
      %v3627 = vld.sshfl [vmem:[#allocation1 + $0x38] sm:$0xff pattern:$0x73625140]
      %3628 = vst [vmem:[#allocation1] ss:$4 sm:$0xff] %v2192
      %3629 = vst [vmem:[%s3575] ss:$4 sm:$0xff] %v2197
      %3630 = vst [vmem:[%s3577] ss:$4 sm:$0xff] %v2202
      %3631 = vst [vmem:[%s3579] ss:$4 sm:$0xff] %v2206
      %3632 = vst [vmem:[%s3581] ss:$4 sm:$0xff] %v2210
      %v3633 = vld.sshfl [vmem:[#allocation1 + $0x18] sm:$0xff pattern:$0x73625140]
      %v3634 = vld.sshfl [vmem:[#allocation1 + $0x38] sm:$0xff pattern:$0x73625140]
      %3635 = vst [vmem:[#allocation1] ss:$4 sm:$0xff] %v2215
      %3636 = vst [vmem:[%s3575] ss:$4 sm:$0xff] %v2220
      %3637 = vst [vmem:[%s3577] ss:$4 sm:$0xff] %v2224
      %3638 = vst [vmem:[%s3579] ss:$4 sm:$0xff] %v2228
      %3639 = vst [vmem:[%s3581] ss:$4 sm:$0xff] %v2233
      %3640 = vst [vmem:[%s3583] ss:$4 sm:$0xff] %v2238
      %3641 = vst [vmem:[%s3585] ss:$4 sm:$0xff] %v2242
      %3642 = vst [vmem:[%s3587] ss:$4 sm:$0xff] %v2246
      %v3643 = vld.sshfl [vmem:[#allocation1 + $0x18] sm:$0xff pattern:$0x73625140]
      %v3644 = vld.sshfl [vmem:[#allocation1 + $0x38] sm:$0xff pattern:$0x73625140]
      %3645 = vst [vmem:[#allocation1] ss:$4 sm:$0xff] %v2251
      %3646 = vst [vmem:[%s3575] ss:$4 sm:$0xff] %v2256
      %3647 = vst [vmem:[%s3577] ss:$4 sm:$0xff] %v2260
      %3648 = vst [vmem:[%s3579] ss:$4 sm:$0xff] %v2264
      %3649 = vst [vmem:[%s3581] ss:$4 sm:$0xff] %v2269
      %3650 = vst [vmem:[%s3583] ss:$4 sm:$0xff] %v2274
      %3651 = vst [vmem:[%s3585] ss:$4 sm:$0xff] %v2278
      %3652 = vst [vmem:[%s3587] ss:$4 sm:$0xff] %v2282
      %v3653 = vld.sshfl [vmem:[#allocation1 + $0x18] sm:$0xff pattern:$0x73625140]
      %v3654 = vld.sshfl [vmem:[#allocation1 + $0x38] sm:$0xff pattern:$0x73625140]
      %3655 = vst [vmem:[#allocation1] ss:$4 sm:$0xff] %v2287
      %3656 = vst [vmem:[%s3575] ss:$4 sm:$0xff] %v2292
      %3657 = vst [vmem:[%s3577] ss:$4 sm:$0xff] %v2296
      %3658 = vst [vmem:[%s3579] ss:$4 sm:$0xff] %v2300
      %3659 = vst [vmem:[%s3581] ss:$4 sm:$0xff] %v2305
      %v3660 = vld.sshfl [vmem:[#allocation1 + $0x18] sm:$0xff pattern:$0x73625140]
      %v3661 = vld.sshfl [vmem:[#allocation1 + $0x38] sm:$0xff pattern:$0x73625140]
      %3662 = vrot.lane.b32.xlu0 %v3589, 64
      %v3663 = vpop.permute.xlu0 %3662
      %3664 = vrot.lane.b32.xlu0 %v3590, 64
      %v3665 = vpop.permute.xlu0 %3664
      %3666 = vrot.lane.b32.xlu0 %v3599, 64
      %v3667 = vpop.permute.xlu0 %3666
      %3668 = vrot.lane.b32.xlu0 %v3600, 64
      %v3669 = vpop.permute.xlu0 %3668
      %3670 = vrot.lane.b32.xlu0 %v3606, 64
      %v3671 = vpop.permute.xlu0 %3670
      %3672 = vrot.lane.b32.xlu0 %v3607, 64
      %v3673 = vpop.permute.xlu0 %3672
      %3674 = vrot.lane.b32.xlu0 %v3616, 64
      %v3675 = vpop.permute.xlu0 %3674
      %3676 = vrot.lane.b32.xlu0 %v3617, 64
      %v3677 = vpop.permute.xlu0 %3676
      %3678 = vrot.lane.b32.xlu0 %v3626, 64
      %v3679 = vpop.permute.xlu0 %3678
      %3680 = vrot.lane.b32.xlu0 %v3627, 64
      %v3681 = vpop.permute.xlu0 %3680
      %3682 = vrot.lane.b32.xlu0 %v3633, 64
      %v3683 = vpop.permute.xlu0 %3682
      %3684 = vrot.lane.b32.xlu0 %v3634, 64
      %v3685 = vpop.permute.xlu0 %3684
      %3686 = vrot.lane.b32.xlu0 %v3643, 64
      %v3687 = vpop.permute.xlu0 %3686
      %3688 = vrot.lane.b32.xlu0 %v3644, 64
      %v3689 = vpop.permute.xlu0 %3688
      %3690 = vrot.lane.b32.xlu0 %v3653, 64
      %v3691 = vpop.permute.xlu0 %3690
      %3692 = vrot.lane.b32.xlu0 %v3654, 64
      %v3693 = vpop.permute.xlu0 %3692
      %3694 = vrot.lane.b32.xlu0 %v3660, 64
      %v3695 = vpop.permute.xlu0 %3694
      %3696 = vrot.lane.b32.xlu0 %v3661, 64
      %v3697 = vpop.permute.xlu0 %3696
      %v3716 = vadd.f32 %v3556, %v3663
      %v3717 = vadd.f32 %v3557, %v3665
      %v3718 = vadd.f32 %v3558, %v3667
      %v3719 = vadd.f32 %v3559, %v3669
      %v3720 = vadd.f32 %v3560, %v3671
      %v3721 = vadd.f32 %v3561, %v3673
      %v3722 = vadd.f32 %v3562, %v3675
      %v3723 = vadd.f32 %v3563, %v3677
      %v3724 = vadd.f32 %v3564, %v3679
      %v3725 = vadd.f32 %v3565, %v3681
      %v3726 = vadd.f32 %v3566, %v3683
      %v3727 = vadd.f32 %v3567, %v3685
      %v3728 = vadd.f32 %v3568, %v3687
      %v3729 = vadd.f32 %v3569, %v3689
      %v3730 = vadd.f32 %v3570, %v3691
      %v3731 = vadd.f32 %v3571, %v3693
      %v3732 = vadd.f32 %v3572, %v3695
      %v3733 = vadd.f32 %v3573, %v3697
      %3734 = vst.msk [vmem:[#allocation3 + $0x7] sm:$0xff] %vm643, %v3716
      %3735 = vst.msk [vmem:[#allocation3 + $0xf] sm:$0xff] %vm643, %v3717
      %3736 = vst.msk [vmem:[#allocation3 + $0x17] sm:$0xff] %vm643, %v3718
      %3737 = vst.msk [vmem:[#allocation3 + $0x1f] sm:$0xff] %vm643, %v3719
      %3738 = vst.msk [vmem:[#allocation3 + $0x27] sm:$0xff] %vm643, %v3720
      %3739 = vst.msk [vmem:[#allocation3 + $0x2f] sm:$0x3] %vm649, %v3721
      %3740 = vst.msk [vmem:[#allocation3 + $0x3f] sm:$0xff] %vm643, %v3722
      %3741 = vst.msk [vmem:[#allocation3 + $0x47] sm:$0xff] %vm643, %v3723
      %3742 = vst.msk [vmem:[#allocation3 + $0x4f] sm:$0xff] %vm643, %v3724
      %3743 = vst.msk [vmem:[#allocation3 + $0x57] sm:$0xff] %vm643, %v3725
      %3744 = vst.msk [vmem:[#allocation3 + $0x5f] sm:$0xff] %vm643, %v3726
      %3745 = vst.msk [vmem:[#allocation3 + $0x67] sm:$0x3] %vm649, %v3727
      %3746 = vst.msk [vmem:[#allocation3 + $0x77] sm:$0xff] %vm643, %v3728
      %3747 = vst.msk [vmem:[#allocation3 + $0x7f] sm:$0xff] %vm643, %v3729
      %3748 = vst.msk [vmem:[#allocation3 + $0x87] sm:$0xff] %vm643, %v3730
      %3749 = vst.msk [vmem:[#allocation3 + $0x8f] sm:$0xff] %vm643, %v3731
      %3750 = vst.msk [vmem:[#allocation3 + $0x97] sm:$0xff] %vm643, %v3732
      %3751 = vst.msk [vmem:[#allocation3 + $0x9f] sm:$0x3] %vm649, %v3733
      %v3752 = vld [vmem:[#allocation3 + $0x8] sm:$0xff]
      %v3753 = vld [vmem:[#allocation3 + $0x10] sm:$0xff]
      %v3754 = vld [vmem:[#allocation3 + $0x18] sm:$0xff]
      %v3755 = vld [vmem:[#allocation3 + $0x20] sm:$0xff]
      %v3756 = vld [vmem:[#allocation3 + $0x28] sm:$0xff]
      %v3757 = vld [vmem:[#allocation3 + $0x30] sm:$0x3]
      %v3758 = vld [vmem:[#allocation3 + $0x40] sm:$0xff]
      %v3759 = vld [vmem:[#allocation3 + $0x48] sm:$0xff]
      %v3760 = vld [vmem:[#allocation3 + $0x50] sm:$0xff]
      %v3761 = vld [vmem:[#allocation3 + $0x58] sm:$0xff]
      %v3762 = vld [vmem:[#allocation3 + $0x60] sm:$0xff]
      %v3763 = vld [vmem:[#allocation3 + $0x68] sm:$0x3]
      %v3764 = vld [vmem:[#allocation3 + $0x78] sm:$0xff]
      %v3765 = vld [vmem:[#allocation3 + $0x80] sm:$0xff]
      %v3766 = vld [vmem:[#allocation3 + $0x88] sm:$0xff]
      %v3767 = vld [vmem:[#allocation3 + $0x90] sm:$0xff]
      %v3768 = vld [vmem:[#allocation3 + $0x98] sm:$0xff]
      %v3769 = vld [vmem:[#allocation3 + $0xa0] sm:$0x3]
      %3770 = vst [vmem:[#allocation1] ss:$4 sm:$0xff] %v1843
      %s3771 = scalar_lea.vmem [#allocation1], 1
      %3772 = vst [vmem:[%s3771] ss:$4 sm:$0xff] %v2031
      %s3773 = scalar_lea.vmem [#allocation1], 2
      %3774 = vst [vmem:[%s3773] ss:$4 sm:$0xff] %v2036
      %s3775 = scalar_lea.vmem [#allocation1], 3
      %3776 = vst [vmem:[%s3775] ss:$4 sm:$0xff] %v2041
      %s3777 = scalar_lea.vmem [#allocation1], 32
      %3778 = vst [vmem:[%s3777] ss:$4 sm:$0xff] %v1846
      %s3779 = scalar_lea.vmem [#allocation1], 33
      %3780 = vst [vmem:[%s3779] ss:$4 sm:$0xff] %v2049
      %s3781 = scalar_lea.vmem [#allocation1], 34
      %3782 = vst [vmem:[%s3781] ss:$4 sm:$0xff] %v2054
      %s3783 = scalar_lea.vmem [#allocation1], 35
      %3784 = vst [vmem:[%s3783] ss:$4 sm:$0xff] %v2059
      %v3785 = vld.sshfl [vmem:[#allocation1] sm:$0xff pattern:$0x73625140]
      %v3786 = vld.sshfl [vmem:[#allocation1 + $0x20] sm:$0xff pattern:$0x73625140]
      %3787 = vst [vmem:[#allocation1] ss:$4 sm:$0xff] %v1849
      %3788 = vst [vmem:[%s3771] ss:$4 sm:$0xff] %v2067
      %3789 = vst [vmem:[%s3773] ss:$4 sm:$0xff] %v2072
      %3790 = vst [vmem:[%s3775] ss:$4 sm:$0xff] %v2077
      %3791 = vst [vmem:[%s3777] ss:$4 sm:$0xff] %v1852
      %3792 = vst [vmem:[%s3779] ss:$4 sm:$0xff] %v2085
      %3793 = vst [vmem:[%s3781] ss:$4 sm:$0xff] %v2090
      %3794 = vst [vmem:[%s3783] ss:$4 sm:$0xff] %v2095
      %v3795 = vld.sshfl [vmem:[#allocation1] sm:$0xff pattern:$0x73625140]
      %v3796 = vld.sshfl [vmem:[#allocation1 + $0x20] sm:$0xff pattern:$0x73625140]
      %3797 = vst [vmem:[#allocation1] ss:$4 sm:$0xff] %v1855
      %3798 = vst [vmem:[%s3771] ss:$4 sm:$0xff] %v2103
      %3799 = vst [vmem:[%s3773] ss:$4 sm:$0xff] %v2108
      %3800 = vst [vmem:[%s3775] ss:$4 sm:$0xff] %v2113
      %3801 = vst [vmem:[%s3777] ss:$4 sm:$0xff] %v1858
      %v3802 = vld.sshfl [vmem:[#allocation1] sm:$0xff pattern:$0x73625140]
      %v3803 = vld.sshfl [vmem:[#allocation1 + $0x20] sm:$0xff pattern:$0x73625140]
      %3804 = vst [vmem:[#allocation1] ss:$4 sm:$0xff] %v2121
      %3805 = vst [vmem:[%s3771] ss:$4 sm:$0xff] %v2126
      %3806 = vst [vmem:[%s3773] ss:$4 sm:$0xff] %v2131
      %3807 = vst [vmem:[%s3775] ss:$4 sm:$0xff] %v1861
      %3808 = vst [vmem:[%s3777] ss:$4 sm:$0xff] %v2139
      %3809 = vst [vmem:[%s3779] ss:$4 sm:$0xff] %v2144
      %3810 = vst [vmem:[%s3781] ss:$4 sm:$0xff] %v2149
      %3811 = vst [vmem:[%s3783] ss:$4 sm:$0xff] %v1864
      %v3812 = vld.sshfl [vmem:[#allocation1] sm:$0xff pattern:$0x73625140]
      %v3813 = vld.sshfl [vmem:[#allocation1 + $0x20] sm:$0xff pattern:$0x73625140]
      %3814 = vst [vmem:[#allocation1] ss:$4 sm:$0xff] %v2157
      %3815 = vst [vmem:[%s3771] ss:$4 sm:$0xff] %v2162
      %3816 = vst [vmem:[%s3773] ss:$4 sm:$0xff] %v2167
      %3817 = vst [vmem:[%s3775] ss:$4 sm:$0xff] %v1867
      %3818 = vst [vmem:[%s3777] ss:$4 sm:$0xff] %v2175
      %3819 = vst [vmem:[%s3779] ss:$4 sm:$0xff] %v2180
      %3820 = vst [vmem:[%s3781] ss:$4 sm:$0xff] %v2185
      %3821 = vst [vmem:[%s3783] ss:$4 sm:$0xff] %v1870
      %v3822 = vld.sshfl [vmem:[#allocation1] sm:$0xff pattern:$0x73625140]
      %v3823 = vld.sshfl [vmem:[#allocation1 + $0x20] sm:$0xff pattern:$0x73625140]
      %3824 = vst [vmem:[#allocation1] ss:$4 sm:$0xff] %v2193
      %3825 = vst [vmem:[%s3771] ss:$4 sm:$0xff] %v2198
      %3826 = vst [vmem:[%s3773] ss:$4 sm:$0xff] %v2203
      %3827 = vst [vmem:[%s3775] ss:$4 sm:$0xff] %v1873
      %3828 = vst [vmem:[%s3777] ss:$4 sm:$0xff] %v2211
      %v3829 = vld.sshfl [vmem:[#allocation1] sm:$0xff pattern:$0x73625140]
      %v3830 = vld.sshfl [vmem:[#allocation1 + $0x20] sm:$0xff pattern:$0x73625140]
      %3831 = vst [vmem:[#allocation1] ss:$4 sm:$0xff] %v2216
      %3832 = vst [vmem:[%s3771] ss:$4 sm:$0xff] %v2221
      %3833 = vst [vmem:[%s3773] ss:$4 sm:$0xff] %v1876
      %3834 = vst [vmem:[%s3775] ss:$4 sm:$0xff] %v2229
      %3835 = vst [vmem:[%s3777] ss:$4 sm:$0xff] %v2234
      %3836 = vst [vmem:[%s3779] ss:$4 sm:$0xff] %v2239
      %3837 = vst [vmem:[%s3781] ss:$4 sm:$0xff] %v1879
      %3838 = vst [vmem:[%s3783] ss:$4 sm:$0xff] %v2247
      %v3839 = vld.sshfl [vmem:[#allocation1] sm:$0xff pattern:$0x73625140]
      %v3840 = vld.sshfl [vmem:[#allocation1 + $0x20] sm:$0xff pattern:$0x73625140]
      %3841 = vst [vmem:[#allocation1] ss:$4 sm:$0xff] %v2252
      %3842 = vst [vmem:[%s3771] ss:$4 sm:$0xff] %v2257
      %3843 = vst [vmem:[%s3773] ss:$4 sm:$0xff] %v1882
      %3844 = vst [vmem:[%s3775] ss:$4 sm:$0xff] %v2265
      %3845 = vst [vmem:[%s3777] ss:$4 sm:$0xff] %v2270
      %3846 = vst [vmem:[%s3779] ss:$4 sm:$0xff] %v2275
      %3847 = vst [vmem:[%s3781] ss:$4 sm:$0xff] %v1885
      %3848 = vst [vmem:[%s3783] ss:$4 sm:$0xff] %v2283
      %v3849 = vld.sshfl [vmem:[#allocation1] sm:$0xff pattern:$0x73625140]
      %v3850 = vld.sshfl [vmem:[#allocation1 + $0x20] sm:$0xff pattern:$0x73625140]
      %3851 = vst [vmem:[#allocation1] ss:$4 sm:$0xff] %v2288
      %3852 = vst [vmem:[%s3771] ss:$4 sm:$0xff] %v2293
      %3853 = vst [vmem:[%s3773] ss:$4 sm:$0xff] %v1888
      %3854 = vst [vmem:[%s3775] ss:$4 sm:$0xff] %v2301
      %3855 = vst [vmem:[%s3777] ss:$4 sm:$0xff] %v2306
      %v3856 = vld.sshfl [vmem:[#allocation1] sm:$0xff pattern:$0x73625140]
      %v3857 = vld.sshfl [vmem:[#allocation1 + $0x20] sm:$0xff pattern:$0x73625140]
      %v3876 = vadd.f32 %v3752, %v3785
      %v3877 = vadd.f32 %v3753, %v3786
      %v3878 = vadd.f32 %v3754, %v3795
      %v3879 = vadd.f32 %v3755, %v3796
      %v3880 = vadd.f32 %v3756, %v3802
      %v3881 = vadd.f32 %v3757, %v3803
      %v3882 = vadd.f32 %v3758, %v3812
      %v3883 = vadd.f32 %v3759, %v3813
      %v3884 = vadd.f32 %v3760, %v3822
      %v3885 = vadd.f32 %v3761, %v3823
      %v3886 = vadd.f32 %v3762, %v3829
      %v3887 = vadd.f32 %v3763, %v3830
      %v3888 = vadd.f32 %v3764, %v3839
      %v3889 = vadd.f32 %v3765, %v3840
      %v3890 = vadd.f32 %v3766, %v3849
      %v3891 = vadd.f32 %v3767, %v3850
      %v3892 = vadd.f32 %v3768, %v3856
      %v3893 = vadd.f32 %v3769, %v3857
      %3894 = vst.msk [vmem:[#allocation3 + $0x8] sm:$0xff] %vm643, %v3876
      %3895 = vst.msk [vmem:[#allocation3 + $0x10] sm:$0xff] %vm643, %v3877
      %3896 = vst.msk [vmem:[#allocation3 + $0x18] sm:$0xff] %vm643, %v3878
      %3897 = vst.msk [vmem:[#allocation3 + $0x20] sm:$0xff] %vm643, %v3879
      %3898 = vst.msk [vmem:[#allocation3 + $0x28] sm:$0xff] %vm643, %v3880
      %3899 = vst.msk [vmem:[#allocation3 + $0x30] sm:$0x3] %vm649, %v3881
      %3900 = vst.msk [vmem:[#allocation3 + $0x40] sm:$0xff] %vm643, %v3882
      %3901 = vst.msk [vmem:[#allocation3 + $0x48] sm:$0xff] %vm643, %v3883
      %3902 = vst.msk [vmem:[#allocation3 + $0x50] sm:$0xff] %vm643, %v3884
      %3903 = vst.msk [vmem:[#allocation3 + $0x58] sm:$0xff] %vm643, %v3885
      %3904 = vst.msk [vmem:[#allocation3 + $0x60] sm:$0xff] %vm643, %v3886
      %3905 = vst.msk [vmem:[#allocation3 + $0x68] sm:$0x3] %vm649, %v3887
      %3906 = vst.msk [vmem:[#allocation3 + $0x78] sm:$0xff] %vm643, %v3888
      %3907 = vst.msk [vmem:[#allocation3 + $0x80] sm:$0xff] %vm643, %v3889
      %3908 = vst.msk [vmem:[#allocation3 + $0x88] sm:$0xff] %vm643, %v3890
      %3909 = vst.msk [vmem:[#allocation3 + $0x90] sm:$0xff] %vm643, %v3891
      %3910 = vst.msk [vmem:[#allocation3 + $0x98] sm:$0xff] %vm643, %v3892
      %3911 = vst.msk [vmem:[#allocation3 + $0xa0] sm:$0x3] %vm649, %v3893
      %v3912 = vld [vmem:[#allocation3] sm:$0xff]
      %v3913 = vld [vmem:[#allocation3 + $0x8] sm:$0xff]
      %v3914 = vld [vmem:[#allocation3 + $0x10] sm:$0xff]
      %v3915 = vld [vmem:[#allocation3 + $0x18] sm:$0xff]
      %v3916 = vld [vmem:[#allocation3 + $0x20] sm:$0xff]
      %v3917 = vld [vmem:[#allocation3 + $0x28] sm:$0xff]
      %v3918 = vld [vmem:[#allocation3 + $0x30] sm:$0x3]
      %v3919 = vld [vmem:[#allocation3 + $0x38] sm:$0xff]
      %v3920 = vld [vmem:[#allocation3 + $0x40] sm:$0xff]
      %v3921 = vld [vmem:[#allocation3 + $0x48] sm:$0xff]
      %v3922 = vld [vmem:[#allocation3 + $0x50] sm:$0xff]
      %v3923 = vld [vmem:[#allocation3 + $0x58] sm:$0xff]
      %v3924 = vld [vmem:[#allocation3 + $0x60] sm:$0xff]
      %v3925 = vld [vmem:[#allocation3 + $0x68] sm:$0x3]
      %v3926 = vld [vmem:[#allocation3 + $0x70] sm:$0xff]
      %v3927 = vld [vmem:[#allocation3 + $0x78] sm:$0xff]
      %v3928 = vld [vmem:[#allocation3 + $0x80] sm:$0xff]
      %v3929 = vld [vmem:[#allocation3 + $0x88] sm:$0xff]
      %v3930 = vld [vmem:[#allocation3 + $0x90] sm:$0xff]
      %v3931 = vld [vmem:[#allocation3 + $0x98] sm:$0xff]
      %v3932 = vld [vmem:[#allocation3 + $0xa0] sm:$0x3]
      %v3934 = vperm.slane %v226, 0
      %v3936 = vadd.f32 %v3912, %v3934
      %v3937 = vadd.f32 %v3913, %v3934
      %v3938 = vadd.f32 %v3914, %v3934
      %v3939 = vadd.f32 %v3915, %v3934
      %v3940 = vadd.f32 %v3916, %v3934
      %v3941 = vadd.f32 %v3917, %v3934
      %v3942 = vadd.f32 %v3918, %v3934
      %v3943 = vadd.f32 %v3919, %v3934
      %v3944 = vadd.f32 %v3920, %v3934
      %v3945 = vadd.f32 %v3921, %v3934
      %v3946 = vadd.f32 %v3922, %v3934
      %v3947 = vadd.f32 %v3923, %v3934
      %v3948 = vadd.f32 %v3924, %v3934
      %v3949 = vadd.f32 %v3925, %v3934
      %v3950 = vadd.f32 %v3926, %v3934
      %v3951 = vadd.f32 %v3927, %v3934
      %v3952 = vadd.f32 %v3928, %v3934
      %v3953 = vadd.f32 %v3929, %v3934
      %v3954 = vadd.f32 %v3930, %v3934
      %v3955 = vadd.f32 %v3931, %v3934
      %v3956 = vadd.f32 %v3932, %v3934
      %v3957 = vxor.u32 %v3936, 2147483648
      %v3958 = vxor.u32 %v3937, 2147483648
      %v3959 = vxor.u32 %v3938, 2147483648
      %v3960 = vxor.u32 %v3939, 2147483648
      %v3961 = vxor.u32 %v3940, 2147483648
      %v3962 = vxor.u32 %v3941, 2147483648
      %v3963 = vxor.u32 %v3942, 2147483648
      %v3964 = vxor.u32 %v3943, 2147483648
      %v3965 = vxor.u32 %v3944, 2147483648
      %v3966 = vxor.u32 %v3945, 2147483648
      %v3967 = vxor.u32 %v3946, 2147483648
      %v3968 = vxor.u32 %v3947, 2147483648
      %v3969 = vxor.u32 %v3948, 2147483648
      %v3970 = vxor.u32 %v3949, 2147483648
      %v3971 = vxor.u32 %v3950, 2147483648
      %v3972 = vxor.u32 %v3951, 2147483648
      %v3973 = vxor.u32 %v3952, 2147483648
      %v3974 = vxor.u32 %v3953, 2147483648
      %v3975 = vxor.u32 %v3954, 2147483648
      %v3976 = vxor.u32 %v3955, 2147483648
      %v3977 = vxor.u32 %v3956, 2147483648
      %v3978 = vmul.f32 %v3957, 1.442695
      %v3979 = vpow.pop %v3978
      %v3980 = vmul.f32 %v3958, 1.442695
      %v3981 = vpow.pop %v3980
      %v3982 = vmul.f32 %v3959, 1.442695
      %v3983 = vpow.pop %v3982
      %v3984 = vmul.f32 %v3960, 1.442695
      %v3985 = vpow.pop %v3984
      %v3986 = vmul.f32 %v3961, 1.442695
      %v3987 = vpow.pop %v3986
      %v3988 = vmul.f32 %v3962, 1.442695
      %v3989 = vpow.pop %v3988
      %v3990 = vmul.f32 %v3963, 1.442695
      %v3991 = vpow.pop %v3990
      %v3992 = vmul.f32 %v3964, 1.442695
      %v3993 = vpow.pop %v3992
      %v3994 = vmul.f32 %v3965, 1.442695
      %v3995 = vpow.pop %v3994
      %v3996 = vmul.f32 %v3966, 1.442695
      %v3997 = vpow.pop %v3996
      %v3998 = vmul.f32 %v3967, 1.442695
      %v3999 = vpow.pop %v3998
      %v4000 = vmul.f32 %v3968, 1.442695
      %v4001 = vpow.pop %v4000
      %v4002 = vmul.f32 %v3969, 1.442695
      %v4003 = vpow.pop %v4002
      %v4004 = vmul.f32 %v3970, 1.442695
      %v4005 = vpow.pop %v4004
      %v4006 = vmul.f32 %v3971, 1.442695
      %v4007 = vpow.pop %v4006
      %v4008 = vmul.f32 %v3972, 1.442695
      %v4009 = vpow.pop %v4008
      %v4010 = vmul.f32 %v3973, 1.442695
      %v4011 = vpow.pop %v4010
      %v4012 = vmul.f32 %v3974, 1.442695
      %v4013 = vpow.pop %v4012
      %v4014 = vmul.f32 %v3975, 1.442695
      %v4015 = vpow.pop %v4014
      %v4016 = vmul.f32 %v3976, 1.442695
      %v4017 = vpow.pop %v4016
      %v4018 = vmul.f32 %v3977, 1.442695
      %v4019 = vpow.pop %v4018
      %v4020 = vadd.f32 %v3979, 1.0
      %v4021 = vadd.f32 %v3981, 1.0
      %v4022 = vadd.f32 %v3983, 1.0
      %v4023 = vadd.f32 %v3985, 1.0
      %v4024 = vadd.f32 %v3987, 1.0
      %v4025 = vadd.f32 %v3989, 1.0
      %v4026 = vadd.f32 %v3991, 1.0
      %v4027 = vadd.f32 %v3993, 1.0
      %v4028 = vadd.f32 %v3995, 1.0
      %v4029 = vadd.f32 %v3997, 1.0
      %v4030 = vadd.f32 %v3999, 1.0
      %v4031 = vadd.f32 %v4001, 1.0
      %v4032 = vadd.f32 %v4003, 1.0
      %v4033 = vadd.f32 %v4005, 1.0
      %v4034 = vadd.f32 %v4007, 1.0
      %v4035 = vadd.f32 %v4009, 1.0
      %v4036 = vadd.f32 %v4011, 1.0
      %v4037 = vadd.f32 %v4013, 1.0
      %v4038 = vadd.f32 %v4015, 1.0
      %v4039 = vadd.f32 %v4017, 1.0
      %v4040 = vadd.f32 %v4019, 1.0
      %v4041 = vrcp.pop %v4020
      %v4042 = vmul.f32 %v4020, %v4041
      %v4043 = vsub.f32 1.0, %v4042
      %v4044 = vmul.f32 %v4041, %v4043
      %v4045 = vadd.f32 %v4041, %v4044
      %vm4046 = vweird.f32 %v4020
      %vm4047 = vweird.f32 %v4041
      %vm4048 = vmor %vm4046, %vm4047
      %v4049 = vsel %vm4048, %v4041, %v4045
      %v4050 = vand.u32 2147483647, %v4020
      %vm4051 = vcmp.eq.f32.partialorder %v4050, 8.507059e+37
      %v4052 = vand.u32 %v4020, 2147483648
      %v4053 = vor.u32 1.1754944e-38, %v4052
      %v4054 = vsel %vm4051, %v4053, %v4049
      %v4055 = vmul.f32 1.0, %v4054
      %v4056 = vrcp.pop %v4021
      %v4057 = vmul.f32 %v4021, %v4056
      %v4058 = vsub.f32 1.0, %v4057
      %v4059 = vmul.f32 %v4056, %v4058
      %v4060 = vadd.f32 %v4056, %v4059
      %vm4061 = vweird.f32 %v4021
      %vm4062 = vweird.f32 %v4056
      %vm4063 = vmor %vm4061, %vm4062
      %v4064 = vsel %vm4063, %v4056, %v4060
      %v4065 = vand.u32 2147483647, %v4021
      %vm4066 = vcmp.eq.f32.partialorder %v4065, 8.507059e+37
      %v4067 = vand.u32 %v4021, 2147483648
      %v4068 = vor.u32 1.1754944e-38, %v4067
      %v4069 = vsel %vm4066, %v4068, %v4064
      %v4070 = vmul.f32 1.0, %v4069
      %v4071 = vrcp.pop %v4022
      %v4072 = vmul.f32 %v4022, %v4071
      %v4073 = vsub.f32 1.0, %v4072
      %v4074 = vmul.f32 %v4071, %v4073
      %v4075 = vadd.f32 %v4071, %v4074
      %vm4076 = vweird.f32 %v4022
      %vm4077 = vweird.f32 %v4071
      %vm4078 = vmor %vm4076, %vm4077
      %v4079 = vsel %vm4078, %v4071, %v4075
      %v4080 = vand.u32 2147483647, %v4022
      %vm4081 = vcmp.eq.f32.partialorder %v4080, 8.507059e+37
      %v4082 = vand.u32 %v4022, 2147483648
      %v4083 = vor.u32 1.1754944e-38, %v4082
      %v4084 = vsel %vm4081, %v4083, %v4079
      %v4085 = vmul.f32 1.0, %v4084
      %v4086 = vrcp.pop %v4023
      %v4087 = vmul.f32 %v4023, %v4086
      %v4088 = vsub.f32 1.0, %v4087
      %v4089 = vmul.f32 %v4086, %v4088
      %v4090 = vadd.f32 %v4086, %v4089
      %vm4091 = vweird.f32 %v4023
      %vm4092 = vweird.f32 %v4086
      %vm4093 = vmor %vm4091, %vm4092
      %v4094 = vsel %vm4093, %v4086, %v4090
      %v4095 = vand.u32 2147483647, %v4023
      %vm4096 = vcmp.eq.f32.partialorder %v4095, 8.507059e+37
      %v4097 = vand.u32 %v4023, 2147483648
      %v4098 = vor.u32 1.1754944e-38, %v4097
      %v4099 = vsel %vm4096, %v4098, %v4094
      %v4100 = vmul.f32 1.0, %v4099
      %v4101 = vrcp.pop %v4024
      %v4102 = vmul.f32 %v4024, %v4101
      %v4103 = vsub.f32 1.0, %v4102
      %v4104 = vmul.f32 %v4101, %v4103
      %v4105 = vadd.f32 %v4101, %v4104
      %vm4106 = vweird.f32 %v4024
      %vm4107 = vweird.f32 %v4101
      %vm4108 = vmor %vm4106, %vm4107
      %v4109 = vsel %vm4108, %v4101, %v4105
      %v4110 = vand.u32 2147483647, %v4024
      %vm4111 = vcmp.eq.f32.partialorder %v4110, 8.507059e+37
      %v4112 = vand.u32 %v4024, 2147483648
      %v4113 = vor.u32 1.1754944e-38, %v4112
      %v4114 = vsel %vm4111, %v4113, %v4109
      %v4115 = vmul.f32 1.0, %v4114
      %v4116 = vrcp.pop %v4025
      %v4117 = vmul.f32 %v4025, %v4116
      %v4118 = vsub.f32 1.0, %v4117
      %v4119 = vmul.f32 %v4116, %v4118
      %v4120 = vadd.f32 %v4116, %v4119
      %vm4121 = vweird.f32 %v4025
      %vm4122 = vweird.f32 %v4116
      %vm4123 = vmor %vm4121, %vm4122
      %v4124 = vsel %vm4123, %v4116, %v4120
      %v4125 = vand.u32 2147483647, %v4025
      %vm4126 = vcmp.eq.f32.partialorder %v4125, 8.507059e+37
      %v4127 = vand.u32 %v4025, 2147483648
      %v4128 = vor.u32 1.1754944e-38, %v4127
      %v4129 = vsel %vm4126, %v4128, %v4124
      %v4130 = vmul.f32 1.0, %v4129
      %v4131 = vrcp.pop %v4026
      %v4132 = vmul.f32 %v4026, %v4131
      %v4133 = vsub.f32 1.0, %v4132
      %v4134 = vmul.f32 %v4131, %v4133
      %v4135 = vadd.f32 %v4131, %v4134
      %vm4136 = vweird.f32 %v4026
      %vm4137 = vweird.f32 %v4131
      %vm4138 = vmor %vm4136, %vm4137
      %v4139 = vsel %vm4138, %v4131, %v4135
      %v4140 = vand.u32 2147483647, %v4026
      %vm4141 = vcmp.eq.f32.partialorder %v4140, 8.507059e+37
      %v4142 = vand.u32 %v4026, 2147483648
      %v4143 = vor.u32 1.1754944e-38, %v4142
      %v4144 = vsel %vm4141, %v4143, %v4139
      %v4145 = vmul.f32 1.0, %v4144
      %v4146 = vrcp.pop %v4027
      %v4147 = vmul.f32 %v4027, %v4146
      %v4148 = vsub.f32 1.0, %v4147
      %v4149 = vmul.f32 %v4146, %v4148
      %v4150 = vadd.f32 %v4146, %v4149
      %vm4151 = vweird.f32 %v4027
      %vm4152 = vweird.f32 %v4146
      %vm4153 = vmor %vm4151, %vm4152
      %v4154 = vsel %vm4153, %v4146, %v4150
      %v4155 = vand.u32 2147483647, %v4027
      %vm4156 = vcmp.eq.f32.partialorder %v4155, 8.507059e+37
      %v4157 = vand.u32 %v4027, 2147483648
      %v4158 = vor.u32 1.1754944e-38, %v4157
      %v4159 = vsel %vm4156, %v4158, %v4154
      %v4160 = vmul.f32 1.0, %v4159
      %v4161 = vrcp.pop %v4028
      %v4162 = vmul.f32 %v4028, %v4161
      %v4163 = vsub.f32 1.0, %v4162
      %v4164 = vmul.f32 %v4161, %v4163
      %v4165 = vadd.f32 %v4161, %v4164
      %vm4166 = vweird.f32 %v4028
      %vm4167 = vweird.f32 %v4161
      %vm4168 = vmor %vm4166, %vm4167
      %v4169 = vsel %vm4168, %v4161, %v4165
      %v4170 = vand.u32 2147483647, %v4028
      %vm4171 = vcmp.eq.f32.partialorder %v4170, 8.507059e+37
      %v4172 = vand.u32 %v4028, 2147483648
      %v4173 = vor.u32 1.1754944e-38, %v4172
      %v4174 = vsel %vm4171, %v4173, %v4169
      %v4175 = vmul.f32 1.0, %v4174
      %v4176 = vrcp.pop %v4029
      %v4177 = vmul.f32 %v4029, %v4176
      %v4178 = vsub.f32 1.0, %v4177
      %v4179 = vmul.f32 %v4176, %v4178
      %v4180 = vadd.f32 %v4176, %v4179
      %vm4181 = vweird.f32 %v4029
      %vm4182 = vweird.f32 %v4176
      %vm4183 = vmor %vm4181, %vm4182
      %v4184 = vsel %vm4183, %v4176, %v4180
      %v4185 = vand.u32 2147483647, %v4029
      %vm4186 = vcmp.eq.f32.partialorder %v4185, 8.507059e+37
      %v4187 = vand.u32 %v4029, 2147483648
      %v4188 = vor.u32 1.1754944e-38, %v4187
      %v4189 = vsel %vm4186, %v4188, %v4184
      %v4190 = vmul.f32 1.0, %v4189
      %v4191 = vrcp.pop %v4030
      %v4192 = vmul.f32 %v4030, %v4191
      %v4193 = vsub.f32 1.0, %v4192
      %v4194 = vmul.f32 %v4191, %v4193
      %v4195 = vadd.f32 %v4191, %v4194
      %vm4196 = vweird.f32 %v4030
      %vm4197 = vweird.f32 %v4191
      %vm4198 = vmor %vm4196, %vm4197
      %v4199 = vsel %vm4198, %v4191, %v4195
      %v4200 = vand.u32 2147483647, %v4030
      %vm4201 = vcmp.eq.f32.partialorder %v4200, 8.507059e+37
      %v4202 = vand.u32 %v4030, 2147483648
      %v4203 = vor.u32 1.1754944e-38, %v4202
      %v4204 = vsel %vm4201, %v4203, %v4199
      %v4205 = vmul.f32 1.0, %v4204
      %v4206 = vrcp.pop %v4031
      %v4207 = vmul.f32 %v4031, %v4206
      %v4208 = vsub.f32 1.0, %v4207
      %v4209 = vmul.f32 %v4206, %v4208
      %v4210 = vadd.f32 %v4206, %v4209
      %vm4211 = vweird.f32 %v4031
      %vm4212 = vweird.f32 %v4206
      %vm4213 = vmor %vm4211, %vm4212
      %v4214 = vsel %vm4213, %v4206, %v4210
      %v4215 = vand.u32 2147483647, %v4031
      %vm4216 = vcmp.eq.f32.partialorder %v4215, 8.507059e+37
      %v4217 = vand.u32 %v4031, 2147483648
      %v4218 = vor.u32 1.1754944e-38, %v4217
      %v4219 = vsel %vm4216, %v4218, %v4214
      %v4220 = vmul.f32 1.0, %v4219
      %v4221 = vrcp.pop %v4032
      %v4222 = vmul.f32 %v4032, %v4221
      %v4223 = vsub.f32 1.0, %v4222
      %v4224 = vmul.f32 %v4221, %v4223
      %v4225 = vadd.f32 %v4221, %v4224
      %vm4226 = vweird.f32 %v4032
      %vm4227 = vweird.f32 %v4221
      %vm4228 = vmor %vm4226, %vm4227
      %v4229 = vsel %vm4228, %v4221, %v4225
      %v4230 = vand.u32 2147483647, %v4032
      %vm4231 = vcmp.eq.f32.partialorder %v4230, 8.507059e+37
      %v4232 = vand.u32 %v4032, 2147483648
      %v4233 = vor.u32 1.1754944e-38, %v4232
      %v4234 = vsel %vm4231, %v4233, %v4229
      %v4235 = vmul.f32 1.0, %v4234
      %v4236 = vrcp.pop %v4033
      %v4237 = vmul.f32 %v4033, %v4236
      %v4238 = vsub.f32 1.0, %v4237
      %v4239 = vmul.f32 %v4236, %v4238
      %v4240 = vadd.f32 %v4236, %v4239
      %vm4241 = vweird.f32 %v4033
      %vm4242 = vweird.f32 %v4236
      %vm4243 = vmor %vm4241, %vm4242
      %v4244 = vsel %vm4243, %v4236, %v4240
      %v4245 = vand.u32 2147483647, %v4033
      %vm4246 = vcmp.eq.f32.partialorder %v4245, 8.507059e+37
      %v4247 = vand.u32 %v4033, 2147483648
      %v4248 = vor.u32 1.1754944e-38, %v4247
      %v4249 = vsel %vm4246, %v4248, %v4244
      %v4250 = vmul.f32 1.0, %v4249
      %v4251 = vrcp.pop %v4034
      %v4252 = vmul.f32 %v4034, %v4251
      %v4253 = vsub.f32 1.0, %v4252
      %v4254 = vmul.f32 %v4251, %v4253
      %v4255 = vadd.f32 %v4251, %v4254
      %vm4256 = vweird.f32 %v4034
      %vm4257 = vweird.f32 %v4251
      %vm4258 = vmor %vm4256, %vm4257
      %v4259 = vsel %vm4258, %v4251, %v4255
      %v4260 = vand.u32 2147483647, %v4034
      %vm4261 = vcmp.eq.f32.partialorder %v4260, 8.507059e+37
      %v4262 = vand.u32 %v4034, 2147483648
      %v4263 = vor.u32 1.1754944e-38, %v4262
      %v4264 = vsel %vm4261, %v4263, %v4259
      %v4265 = vmul.f32 1.0, %v4264
      %v4266 = vrcp.pop %v4035
      %v4267 = vmul.f32 %v4035, %v4266
      %v4268 = vsub.f32 1.0, %v4267
      %v4269 = vmul.f32 %v4266, %v4268
      %v4270 = vadd.f32 %v4266, %v4269
      %vm4271 = vweird.f32 %v4035
      %vm4272 = vweird.f32 %v4266
      %vm4273 = vmor %vm4271, %vm4272
      %v4274 = vsel %vm4273, %v4266, %v4270
      %v4275 = vand.u32 2147483647, %v4035
      %vm4276 = vcmp.eq.f32.partialorder %v4275, 8.507059e+37
      %v4277 = vand.u32 %v4035, 2147483648
      %v4278 = vor.u32 1.1754944e-38, %v4277
      %v4279 = vsel %vm4276, %v4278, %v4274
      %v4280 = vmul.f32 1.0, %v4279
      %v4281 = vrcp.pop %v4036
      %v4282 = vmul.f32 %v4036, %v4281
      %v4283 = vsub.f32 1.0, %v4282
      %v4284 = vmul.f32 %v4281, %v4283
      %v4285 = vadd.f32 %v4281, %v4284
      %vm4286 = vweird.f32 %v4036
      %vm4287 = vweird.f32 %v4281
      %vm4288 = vmor %vm4286, %vm4287
      %v4289 = vsel %vm4288, %v4281, %v4285
      %v4290 = vand.u32 2147483647, %v4036
      %vm4291 = vcmp.eq.f32.partialorder %v4290, 8.507059e+37
      %v4292 = vand.u32 %v4036, 2147483648
      %v4293 = vor.u32 1.1754944e-38, %v4292
      %v4294 = vsel %vm4291, %v4293, %v4289
      %v4295 = vmul.f32 1.0, %v4294
      %v4296 = vrcp.pop %v4037
      %v4297 = vmul.f32 %v4037, %v4296
      %v4298 = vsub.f32 1.0, %v4297
      %v4299 = vmul.f32 %v4296, %v4298
      %v4300 = vadd.f32 %v4296, %v4299
      %vm4301 = vweird.f32 %v4037
      %vm4302 = vweird.f32 %v4296
      %vm4303 = vmor %vm4301, %vm4302
      %v4304 = vsel %vm4303, %v4296, %v4300
      %v4305 = vand.u32 2147483647, %v4037
      %vm4306 = vcmp.eq.f32.partialorder %v4305, 8.507059e+37
      %v4307 = vand.u32 %v4037, 2147483648
      %v4308 = vor.u32 1.1754944e-38, %v4307
      %v4309 = vsel %vm4306, %v4308, %v4304
      %v4310 = vmul.f32 1.0, %v4309
      %v4311 = vrcp.pop %v4038
      %v4312 = vmul.f32 %v4038, %v4311
      %v4313 = vsub.f32 1.0, %v4312
      %v4314 = vmul.f32 %v4311, %v4313
      %v4315 = vadd.f32 %v4311, %v4314
      %vm4316 = vweird.f32 %v4038
      %vm4317 = vweird.f32 %v4311
      %vm4318 = vmor %vm4316, %vm4317
      %v4319 = vsel %vm4318, %v4311, %v4315
      %v4320 = vand.u32 2147483647, %v4038
      %vm4321 = vcmp.eq.f32.partialorder %v4320, 8.507059e+37
      %v4322 = vand.u32 %v4038, 2147483648
      %v4323 = vor.u32 1.1754944e-38, %v4322
      %v4324 = vsel %vm4321, %v4323, %v4319
      %v4325 = vmul.f32 1.0, %v4324
      %v4326 = vrcp.pop %v4039
      %v4327 = vmul.f32 %v4039, %v4326
      %v4328 = vsub.f32 1.0, %v4327
      %v4329 = vmul.f32 %v4326, %v4328
      %v4330 = vadd.f32 %v4326, %v4329
      %vm4331 = vweird.f32 %v4039
      %vm4332 = vweird.f32 %v4326
      %vm4333 = vmor %vm4331, %vm4332
      %v4334 = vsel %vm4333, %v4326, %v4330
      %v4335 = vand.u32 2147483647, %v4039
      %vm4336 = vcmp.eq.f32.partialorder %v4335, 8.507059e+37
      %v4337 = vand.u32 %v4039, 2147483648
      %v4338 = vor.u32 1.1754944e-38, %v4337
      %v4339 = vsel %vm4336, %v4338, %v4334
      %v4340 = vmul.f32 1.0, %v4339
      %v4341 = vrcp.pop %v4040
      %v4342 = vmul.f32 %v4040, %v4341
      %v4343 = vsub.f32 1.0, %v4342
      %v4344 = vmul.f32 %v4341, %v4343
      %v4345 = vadd.f32 %v4341, %v4344
      %vm4346 = vweird.f32 %v4040
      %vm4347 = vweird.f32 %v4341
      %vm4348 = vmor %vm4346, %vm4347
      %v4349 = vsel %vm4348, %v4341, %v4345
      %v4350 = vand.u32 2147483647, %v4040
      %vm4351 = vcmp.eq.f32.partialorder %v4350, 8.507059e+37
      %v4352 = vand.u32 %v4040, 2147483648
      %v4353 = vor.u32 1.1754944e-38, %v4352
      %v4354 = vsel %vm4351, %v4353, %v4349
      %v4355 = vmul.f32 1.0, %v4354
      %v4356 = vxor.u32 %v226, 2147483648
      %v4357 = vmul.f32 %v4356, 1.442695
      %v4358 = vpow.pop %v4357
      %v4359 = vadd.f32 %v4358, 1.0
      %v4360 = vrcp.pop %v4359
      %v4361 = vmul.f32 %v4359, %v4360
      %v4362 = vsub.f32 1.0, %v4361
      %v4363 = vmul.f32 %v4360, %v4362
      %v4364 = vadd.f32 %v4360, %v4363
      %vm4365 = vweird.f32 %v4359
      %vm4366 = vweird.f32 %v4360
      %vm4367 = vmor %vm4365, %vm4366
      %v4368 = vsel %vm4367, %v4360, %v4364
      %v4369 = vand.u32 2147483647, %v4359
      %vm4370 = vcmp.eq.f32.partialorder %v4369, 8.507059e+37
      %v4371 = vand.u32 %v4359, 2147483648
      %v4372 = vor.u32 1.1754944e-38, %v4371
      %v4373 = vsel %vm4370, %v4372, %v4368
      %v4374 = vmul.f32 1.0, %v4373
      %v4376 = vperm.slane %v4374, 0
      %4378 = vst.msk [vmem:[%s224] sm:$0xff] %vm643, %v4376
      %4379 = vst.msk [vmem:[%s224 + $0x8] sm:$0xff] %vm643, %v4376
      %4380 = vst.msk [vmem:[%s224 + $0x10] sm:$0xff] %vm643, %v4376
      %4381 = vst.msk [vmem:[%s224 + $0x18] sm:$0xff] %vm643, %v4376
      %4382 = vst.msk [vmem:[%s224 + $0x20] sm:$0xff] %vm643, %v4376
      %4383 = vst.msk [vmem:[%s224 + $0x28] sm:$0xff] %vm643, %v4376
      %4384 = vst.msk [vmem:[%s224 + $0x30] sm:$0x3] %vm649, %v4376
      %4385 = vst.msk [vmem:[%s224 + $0x38] sm:$0xff] %vm643, %v4376
      %4386 = vst.msk [vmem:[%s224 + $0x40] sm:$0xff] %vm643, %v4376
      %4387 = vst.msk [vmem:[%s224 + $0x48] sm:$0xff] %vm643, %v4376
      %4388 = vst.msk [vmem:[%s224 + $0x50] sm:$0xff] %vm643, %v4376
      %4389 = vst.msk [vmem:[%s224 + $0x58] sm:$0xff] %vm643, %v4376
      %4390 = vst.msk [vmem:[%s224 + $0x60] sm:$0xff] %vm643, %v4376
      %4391 = vst.msk [vmem:[%s224 + $0x68] sm:$0x3] %vm649, %v4376
      %4392 = vst.msk [vmem:[%s224 + $0x70] sm:$0xff] %vm643, %v4376
      %4393 = vst.msk [vmem:[%s224 + $0x78] sm:$0xff] %vm643, %v4376
      %4394 = vst.msk [vmem:[%s224 + $0x80] sm:$0xff] %vm643, %v4376
      %4395 = vst.msk [vmem:[%s224 + $0x88] sm:$0xff] %vm643, %v4376
      %4396 = vst.msk [vmem:[%s224 + $0x90] sm:$0xff] %vm643, %v4376
      %4397 = vst.msk [vmem:[%s224 + $0x98] sm:$0xff] %vm643, %v4376
      %4398 = vst.msk [vmem:[%s224 + $0xa0] sm:$0x3] %vm649, %v4376
      %4399 = vst.msk [vmem:[%s224 + $0xa8] sm:$0xff] %vm643, %v4376
      %4400 = vst.msk [vmem:[%s224 + $0xb0] sm:$0xff] %vm643, %v4376
      %4401 = vst.msk [vmem:[%s224 + $0xb8] sm:$0xff] %vm643, %v4376
      %4402 = vst.msk [vmem:[%s224 + $0xc0] sm:$0xff] %vm643, %v4376
      %4403 = vst.msk [vmem:[%s224 + $0xc8] sm:$0xff] %vm643, %v4376
      %4404 = vst.msk [vmem:[%s224 + $0xd0] sm:$0xff] %vm643, %v4376
      %4405 = vst.msk [vmem:[%s224 + $0xd8] sm:$0x3] %vm649, %v4376
      %4406 = vst.msk [vmem:[%s224 + $0xe0] sm:$0xff] %vm643, %v4376
      %4407 = vst.msk [vmem:[%s224 + $0xe8] sm:$0xff] %vm643, %v4376
      %4408 = vst.msk [vmem:[%s224 + $0xf0] sm:$0xff] %vm643, %v4376
      %4409 = vst.msk [vmem:[%s224 + $0xf8] sm:$0xff] %vm643, %v4376
      %4410 = vst.msk [vmem:[%s224 + $0x100] sm:$0xff] %vm643, %v4376
      %4411 = vst.msk [vmem:[%s224 + $0x108] sm:$0xff] %vm643, %v4376
      %4412 = vst.msk [vmem:[%s224 + $0x110] sm:$0x3] %vm649, %v4376
      %4413 = vst.msk [vmem:[%s224 + $0x118] sm:$0xff] %vm643, %v4376
      %4414 = vst.msk [vmem:[%s224 + $0x120] sm:$0xff] %vm643, %v4376
      %4415 = vst.msk [vmem:[%s224 + $0x128] sm:$0xff] %vm643, %v4376
      %4416 = vst.msk [vmem:[%s224 + $0x130] sm:$0xff] %vm643, %v4376
      %4417 = vst.msk [vmem:[%s224 + $0x138] sm:$0xff] %vm643, %v4376
      %4418 = vst.msk [vmem:[%s224 + $0x140] sm:$0xff] %vm643, %v4376
      %4419 = vst.msk [vmem:[%s224 + $0x148] sm:$0x3] %vm649, %v4376
      %4420 = vst.msk [vmem:[%s224 + $0x150] sm:$0xff] %vm643, %v4376
      %4421 = vst.msk [vmem:[%s224 + $0x158] sm:$0xff] %vm643, %v4376
      %4422 = vst.msk [vmem:[%s224 + $0x160] sm:$0xff] %vm643, %v4376
      %4423 = vst.msk [vmem:[%s224 + $0x168] sm:$0xff] %vm643, %v4376
      %4424 = vst.msk [vmem:[%s224 + $0x170] sm:$0xff] %vm643, %v4376
      %4425 = vst.msk [vmem:[%s224 + $0x178] sm:$0xff] %vm643, %v4376
      %4426 = vst.msk [vmem:[%s224 + $0x180] sm:$0x3] %vm649, %v4376
      %4427 = vst.msk [vmem:[%s224 + $0x188] sm:$0xff] %vm643, %v4376
      %4428 = vst.msk [vmem:[%s224 + $0x190] sm:$0xff] %vm643, %v4376
      %4429 = vst.msk [vmem:[%s224 + $0x198] sm:$0xff] %vm643, %v4376
      %4430 = vst.msk [vmem:[%s224 + $0x1a0] sm:$0xff] %vm643, %v4376
      %4431 = vst.msk [vmem:[%s224 + $0x1a8] sm:$0xff] %vm643, %v4376
      %4432 = vst.msk [vmem:[%s224 + $0x1b0] sm:$0xff] %vm643, %v4376
      %4433 = vst.msk [vmem:[%s224 + $0x1b8] sm:$0x3] %vm649, %v4376
      %4434 = vst.msk [vmem:[%s224 + $0x1c0] sm:$0xff] %vm643, %v4376
      %4435 = vst.msk [vmem:[%s224 + $0x1c8] sm:$0xff] %vm643, %v4376
      %4436 = vst.msk [vmem:[%s224 + $0x1d0] sm:$0xff] %vm643, %v4376
      %4437 = vst.msk [vmem:[%s224 + $0x1d8] sm:$0xff] %vm643, %v4376
      %4438 = vst.msk [vmem:[%s224 + $0x1e0] sm:$0xff] %vm643, %v4376
      %4439 = vst.msk [vmem:[%s224 + $0x1e8] sm:$0xff] %vm643, %v4376
      %4440 = vst.msk [vmem:[%s224 + $0x1f0] sm:$0x3] %vm649, %v4376
      %4441 = vst.msk [vmem:[%s224 + $0x1f8] sm:$0xff] %vm643, %v4376
      %4442 = vst.msk [vmem:[%s224 + $0x200] sm:$0xff] %vm643, %v4376
      %4443 = vst.msk [vmem:[%s224 + $0x208] sm:$0xff] %vm643, %v4376
      %4444 = vst.msk [vmem:[%s224 + $0x210] sm:$0xff] %vm643, %v4376
      %4445 = vst.msk [vmem:[%s224 + $0x218] sm:$0xff] %vm643, %v4376
      %4446 = vst.msk [vmem:[%s224 + $0x220] sm:$0xff] %vm643, %v4376
      %4447 = vst.msk [vmem:[%s224 + $0x228] sm:$0x3] %vm649, %v4376
      %4448 = vst.msk [vmem:[%s224 + $0x230] sm:$0xff] %vm643, %v4376
      %4449 = vst.msk [vmem:[%s224 + $0x238] sm:$0xff] %vm643, %v4376
      %4450 = vst.msk [vmem:[%s224 + $0x240] sm:$0xff] %vm643, %v4376
      %4451 = vst.msk [vmem:[%s224 + $0x248] sm:$0xff] %vm643, %v4376
      %4452 = vst.msk [vmem:[%s224 + $0x250] sm:$0xff] %vm643, %v4376
      %4453 = vst.msk [vmem:[%s224 + $0x258] sm:$0xff] %vm643, %v4376
      %4454 = vst.msk [vmem:[%s224 + $0x260] sm:$0x3] %vm649, %v4376
      %4455 = vst.msk [vmem:[%s224 + $0x268] sm:$0xff] %vm643, %v4376
      %4456 = vst.msk [vmem:[%s224 + $0x270] sm:$0xff] %vm643, %v4376
      %4457 = vst.msk [vmem:[%s224 + $0x278] sm:$0xff] %vm643, %v4376
      %4458 = vst.msk [vmem:[%s224 + $0x280] sm:$0xff] %vm643, %v4376
      %4459 = vst.msk [vmem:[%s224 + $0x288] sm:$0xff] %vm643, %v4376
      %4460 = vst.msk [vmem:[%s224 + $0x290] sm:$0xff] %vm643, %v4376
      %4461 = vst.msk [vmem:[%s224 + $0x298] sm:$0x3] %vm649, %v4376
      %4462 = vst.msk [vmem:[%s224 + $0x2a0] sm:$0xff] %vm643, %v4376
      %4463 = vst.msk [vmem:[%s224 + $0x2a8] sm:$0xff] %vm643, %v4376
      %4464 = vst.msk [vmem:[%s224 + $0x2b0] sm:$0xff] %vm643, %v4376
      %4465 = vst.msk [vmem:[%s224 + $0x2b8] sm:$0xff] %vm643, %v4376
      %4466 = vst.msk [vmem:[%s224 + $0x2c0] sm:$0xff] %vm643, %v4376
      %4467 = vst.msk [vmem:[%s224 + $0x2c8] sm:$0xff] %vm643, %v4376
      %4468 = vst.msk [vmem:[%s224 + $0x2d0] sm:$0x3] %vm649, %v4376
      %4469 = vst.msk [vmem:[%s224 + $0x2d8] sm:$0xff] %vm643, %v4376
      %4470 = vst.msk [vmem:[%s224 + $0x2e0] sm:$0xff] %vm643, %v4376
      %4471 = vst.msk [vmem:[%s224 + $0x2e8] sm:$0xff] %vm643, %v4376
      %4472 = vst.msk [vmem:[%s224 + $0x2f0] sm:$0xff] %vm643, %v4376
      %4473 = vst.msk [vmem:[%s224 + $0x2f8] sm:$0xff] %vm643, %v4376
      %4474 = vst.msk [vmem:[%s224 + $0x300] sm:$0xff] %vm643, %v4376
      %4475 = vst.msk [vmem:[%s224 + $0x308] sm:$0x3] %vm649, %v4376
      %4476 = vst.msk [vmem:[%s224 + $0x310] sm:$0xff] %vm643, %v4376
      %4477 = vst.msk [vmem:[%s224 + $0x318] sm:$0xff] %vm643, %v4376
      %4478 = vst.msk [vmem:[%s224 + $0x320] sm:$0xff] %vm643, %v4376
      %4479 = vst.msk [vmem:[%s224 + $0x328] sm:$0xff] %vm643, %v4376
      %4480 = vst.msk [vmem:[%s224 + $0x330] sm:$0xff] %vm643, %v4376
      %4481 = vst.msk [vmem:[%s224 + $0x338] sm:$0xff] %vm643, %v4376
      %4482 = vst.msk [vmem:[%s224 + $0x340] sm:$0x3] %vm649, %v4376
      %4483 = vst.msk [vmem:[%s224 + $0x348] sm:$0xff] %vm643, %v4376
      %4484 = vst.msk [vmem:[%s224 + $0x350] sm:$0xff] %vm643, %v4376
      %4485 = vst.msk [vmem:[%s224 + $0x358] sm:$0xff] %vm643, %v4376
      %4486 = vst.msk [vmem:[%s224 + $0x360] sm:$0xff] %vm643, %v4376
      %4487 = vst.msk [vmem:[%s224 + $0x368] sm:$0xff] %vm643, %v4376
      %4488 = vst.msk [vmem:[%s224 + $0x370] sm:$0xff] %vm643, %v4376
      %4489 = vst.msk [vmem:[%s224 + $0x378] sm:$0x3] %vm649, %v4376
      %4490 = vst.msk [vmem:[%s224 + $0x380] sm:$0xff] %vm643, %v4376
      %4491 = vst.msk [vmem:[%s224 + $0x388] sm:$0xff] %vm643, %v4376
      %4492 = vst.msk [vmem:[%s224 + $0x390] sm:$0xff] %vm643, %v4376
      %4493 = vst.msk [vmem:[%s224 + $0x398] sm:$0xff] %vm643, %v4376
      %4494 = vst.msk [vmem:[%s224 + $0x3a0] sm:$0xff] %vm643, %v4376
      %4495 = vst.msk [vmem:[%s224 + $0x3a8] sm:$0xff] %vm643, %v4376
      %4496 = vst.msk [vmem:[%s224 + $0x3b0] sm:$0x3] %vm649, %v4376
      %4497 = vst.msk [vmem:[%s224 + $0x3b8] sm:$0xff] %vm643, %v4376
      %4498 = vst.msk [vmem:[%s224 + $0x3c0] sm:$0xff] %vm643, %v4376
      %4499 = vst.msk [vmem:[%s224 + $0x3c8] sm:$0xff] %vm643, %v4376
      %4500 = vst.msk [vmem:[%s224 + $0x3d0] sm:$0xff] %vm643, %v4376
      %4501 = vst.msk [vmem:[%s224 + $0x3d8] sm:$0xff] %vm643, %v4376
      %4502 = vst.msk [vmem:[%s224 + $0x3e0] sm:$0xff] %vm643, %v4376
      %4503 = vst.msk [vmem:[%s224 + $0x3e8] sm:$0x3] %vm649, %v4376
      %4504 = vst.msk [vmem:[%s224 + $0x3f0] sm:$0xff] %vm643, %v4376
      %4505 = vst.msk [vmem:[%s224 + $0x3f8] sm:$0xff] %vm643, %v4376
      %4506 = vst.msk [vmem:[%s224 + $0x400] sm:$0xff] %vm643, %v4376
      %4507 = vst.msk [vmem:[%s224 + $0x408] sm:$0xff] %vm643, %v4376
      %4508 = vst.msk [vmem:[%s224 + $0x410] sm:$0xff] %vm643, %v4376
      %4509 = vst.msk [vmem:[%s224 + $0x418] sm:$0xff] %vm643, %v4376
      %4510 = vst.msk [vmem:[%s224 + $0x420] sm:$0x3] %vm649, %v4376
      %4511 = vst.msk [vmem:[%s224 + $0x428] sm:$0xff] %vm643, %v4376
      %4512 = vst.msk [vmem:[%s224 + $0x430] sm:$0xff] %vm643, %v4376
      %4513 = vst.msk [vmem:[%s224 + $0x438] sm:$0xff] %vm643, %v4376
      %4514 = vst.msk [vmem:[%s224 + $0x440] sm:$0xff] %vm643, %v4376
      %4515 = vst.msk [vmem:[%s224 + $0x448] sm:$0xff] %vm643, %v4376
      %4516 = vst.msk [vmem:[%s224 + $0x450] sm:$0xff] %vm643, %v4376
      %4517 = vst.msk [vmem:[%s224 + $0x458] sm:$0x3] %vm649, %v4376
      %4518 = vst.msk [vmem:[%s224 + $0x460] sm:$0xff] %vm643, %v4376
      %4519 = vst.msk [vmem:[%s224 + $0x468] sm:$0xff] %vm643, %v4376
      %4520 = vst.msk [vmem:[%s224 + $0x470] sm:$0xff] %vm643, %v4376
      %4521 = vst.msk [vmem:[%s224 + $0x478] sm:$0xff] %vm643, %v4376
      %4522 = vst.msk [vmem:[%s224 + $0x480] sm:$0xff] %vm643, %v4376
      %4523 = vst.msk [vmem:[%s224 + $0x488] sm:$0xff] %vm643, %v4376
      %4524 = vst.msk [vmem:[%s224 + $0x490] sm:$0x3] %vm649, %v4376
      %4525 = vst.msk [vmem:[%s224 + $0x498] sm:$0xff] %vm643, %v4376
      %4526 = vst.msk [vmem:[%s224 + $0x4a0] sm:$0xff] %vm643, %v4376
      %4527 = vst.msk [vmem:[%s224 + $0x4a8] sm:$0xff] %vm643, %v4376
      %4528 = vst.msk [vmem:[%s224 + $0x4b0] sm:$0xff] %vm643, %v4376
      %4529 = vst.msk [vmem:[%s224 + $0x4b8] sm:$0xff] %vm643, %v4376
      %4530 = vst.msk [vmem:[%s224 + $0x4c0] sm:$0xff] %vm643, %v4376
      %4531 = vst.msk [vmem:[%s224 + $0x4c8] sm:$0x3] %vm649, %v4376
      %4532 = vst.msk [vmem:[%s224 + $0x4d0] sm:$0xff] %vm643, %v4376
      %4533 = vst.msk [vmem:[%s224 + $0x4d8] sm:$0xff] %vm643, %v4376
      %4534 = vst.msk [vmem:[%s224 + $0x4e0] sm:$0xff] %vm643, %v4376
      %4535 = vst.msk [vmem:[%s224 + $0x4e8] sm:$0xff] %vm643, %v4376
      %4536 = vst.msk [vmem:[%s224 + $0x4f0] sm:$0xff] %vm643, %v4376
      %4537 = vst.msk [vmem:[%s224 + $0x4f8] sm:$0xff] %vm643, %v4376
      %4538 = vst.msk [vmem:[%s224 + $0x500] sm:$0x3] %vm649, %v4376
      %4539 = vst.msk [vmem:[%s224 + $0x508] sm:$0xff] %vm643, %v4376
      %4540 = vst.msk [vmem:[%s224 + $0x510] sm:$0xff] %vm643, %v4376
      %4541 = vst.msk [vmem:[%s224 + $0x518] sm:$0xff] %vm643, %v4376
      %4542 = vst.msk [vmem:[%s224 + $0x520] sm:$0xff] %vm643, %v4376
      %4543 = vst.msk [vmem:[%s224 + $0x528] sm:$0xff] %vm643, %v4376
      %4544 = vst.msk [vmem:[%s224 + $0x530] sm:$0xff] %vm643, %v4376
      %4545 = vst.msk [vmem:[%s224 + $0x538] sm:$0x3] %vm649, %v4376
      %4546 = vst.msk [vmem:[%s224 + $0x540] sm:$0xff] %vm643, %v4376
      %4547 = vst.msk [vmem:[%s224 + $0x548] sm:$0xff] %vm643, %v4376
      %4548 = vst.msk [vmem:[%s224 + $0x550] sm:$0xff] %vm643, %v4376
      %4549 = vst.msk [vmem:[%s224 + $0x558] sm:$0xff] %vm643, %v4376
      %4550 = vst.msk [vmem:[%s224 + $0x560] sm:$0xff] %vm643, %v4376
      %4551 = vst.msk [vmem:[%s224 + $0x568] sm:$0xff] %vm643, %v4376
      %4552 = vst.msk [vmem:[%s224 + $0x570] sm:$0x3] %vm649, %v4376
      %4553 = vst.msk [vmem:[%s224] sm:$0xff] %vm643, %v4055
      %4554 = vst.msk [vmem:[%s224 + $0x8] sm:$0xff] %vm643, %v4070
      %4555 = vst.msk [vmem:[%s224 + $0x10] sm:$0xff] %vm643, %v4085
      %4556 = vst.msk [vmem:[%s224 + $0x18] sm:$0xff] %vm643, %v4100
      %4557 = vst.msk [vmem:[%s224 + $0x20] sm:$0xff] %vm643, %v4115
      %4558 = vst.msk [vmem:[%s224 + $0x28] sm:$0xff] %vm643, %v4130
      %4559 = vst.msk [vmem:[%s224 + $0x30] sm:$0x3] %vm649, %v4145
      %s4560 = scalar_lea.vmem %s224, 896
      %4561 = vst.msk [vmem:[%s4560] sm:$0xff] %vm643, %v4055
      %4562 = vst.msk [vmem:[%s4560 + $0x8] sm:$0xff] %vm643, %v4070
      %4563 = vst.msk [vmem:[%s4560 + $0x10] sm:$0xff] %vm643, %v4085
      %4564 = vst.msk [vmem:[%s4560 + $0x18] sm:$0xff] %vm643, %v4100
      %4565 = vst.msk [vmem:[%s4560 + $0x20] sm:$0xff] %vm643, %v4115
      %4566 = vst.msk [vmem:[%s4560 + $0x28] sm:$0xff] %vm643, %v4130
      %4567 = vst.msk [vmem:[%s4560 + $0x30] sm:$0x3] %vm649, %v4145
      %s4568 = scalar_lea.vmem %s224, 448
      %4569 = vst.msk [vmem:[%s4568] sm:$0xff] %vm643, %v4160
      %4570 = vst.msk [vmem:[%s4568 + $0x8] sm:$0xff] %vm643, %v4175
      %4571 = vst.msk [vmem:[%s4568 + $0x10] sm:$0xff] %vm643, %v4190
      %4572 = vst.msk [vmem:[%s4568 + $0x18] sm:$0xff] %vm643, %v4205
      %4573 = vst.msk [vmem:[%s4568 + $0x20] sm:$0xff] %vm643, %v4220
      %4574 = vst.msk [vmem:[%s4568 + $0x28] sm:$0xff] %vm643, %v4235
      %4575 = vst.msk [vmem:[%s4568 + $0x30] sm:$0x3] %vm649, %v4250
      %s4576 = scalar_lea.vmem %s224, 1344
      %4577 = vst.msk [vmem:[%s4576] sm:$0xff] %vm643, %v4265
      %4578 = vst.msk [vmem:[%s4576 + $0x8] sm:$0xff] %vm643, %v4280
      %4579 = vst.msk [vmem:[%s4576 + $0x10] sm:$0xff] %vm643, %v4295
      %4580 = vst.msk [vmem:[%s4576 + $0x18] sm:$0xff] %vm643, %v4310
      %4581 = vst.msk [vmem:[%s4576 + $0x20] sm:$0xff] %vm643, %v4325
      %4582 = vst.msk [vmem:[%s4576 + $0x28] sm:$0xff] %vm643, %v4340
      %4583 = vst.msk [vmem:[%s4576 + $0x30] sm:$0x3] %vm649, %v4355
      %p4584 = scmp.lt.s32.totalorder %s16, 1
      %s4585 = scalar_select %p4584, %s16, 1
      %s4586 = smul.addr %s4585, 175
      %s4587 = smul.addr %s4586, 8
      %s4588 = scalar_lea.vmem %s5, %s4587
      // Predicated region
      $region41: #{model_forward.1} parent=39 // pred_check
        %p4589 = pneg %p144
      $region42: #{model_forward.1} parent=39 // pred_check_branch
        %4591 = sbr.rel (%p4589) target = $region44
      $region43: #{model_forward.1} parent=39 // pred_region
        _
      $region44: #{model_forward.1} parent=39 // pred_fallthru
        _
    $region40: #{model_forward.1} parent=5 // pred_fallthru
      _
    %p4592 = scmp.le.s32.totalorder 2, %s11
    // Predicated region
    $region45: #{model_forward.1} parent=5 // pred_check
      %p4593 = pneg %p4592
    $region46: #{model_forward.1} parent=5 // pred_check_branch
      %4595 = sbr.rel (%p4593) target = $region48
    $region47: #{model_forward.1} parent=5 // pred_region
      %s4596 = ssub.s32 %s11, 2
      // Predicated region
      $region49: #{model_forward.1} parent=47 // pred_check
        %p4597 = pneg %p150
      $region50: #{model_forward.1} parent=47 // pred_check_branch
        %4599 = sbr.rel (%p4597) target = $region52
      $region51: #{model_forward.1} parent=47 // pred_region
        %p4600 = scmp.lt.s32.totalorder %s17, 1
        %s4601 = scalar_select %p4600, %s17, 1
        %s4602 = smul.addr %s4601, 175
        %s4603 = smul.addr %s4602, 8
        %s4604 = scalar_lea.vmem %s5, %s4603
      $region52: #{model_forward.1} parent=47 // pred_fallthru
        _
    $region48: #{model_forward.1} parent=5 // pred_fallthru
      _
  $region6: #{model_forward.1} parent=0 // loop_footer
    %s15 = sadd.s32 1, %s11
  $region7: #{model_forward.1} parent=0 // loop_footer_branch
    %10 = sbr.rel target = $region3
  $region8: #{model_forward.1} parent=0 // loop_exit
    _

</llo_original>
